<compile_context>
chip_gen: v6e
topology: v6e:2x2x1
jax: 0.10.0
libtpu: 0.0.40
codegen_flags: <defaults>
</compile_context>

<pallas_src>
import math
import numpy as np
import jax
import jax.numpy as jnp
from jax.experimental import pallas as pl
from jax.experimental.pallas import tpu as pltpu

# ----- small synthetic config (consistent with the module's forward) -----
IMG = 16          # img_size
PATCH = 8         # config.patches['size']
IN_CH = 3         # Embeddings default in_channels
HIDDEN = 32       # config.hidden_size
NUM_HEADS = 4     # config.transformer['num_heads']
HEAD = HIDDEN // NUM_HEADS
MLP_DIM = 64      # config.transformer['mlp_dim']
NUM_LAYERS = 2    # config.transformer['num_layers']
N_PATCHES = (IMG // PATCH) * (IMG // PATCH)
SEQ = N_PATCHES + 1
PATCH_DIM = IN_CH * PATCH * PATCH
EPS = 1e-6


# ---------------- shared math helpers (used inside kernel & reference) --------
def _layernorm(x, g, b):
    mu = jnp.mean(x, axis=-1, keepdims=True)
    var = jnp.mean(jnp.square(x - mu), axis=-1, keepdims=True)
    return (x - mu) * jax.lax.rsqrt(var + EPS) * g + b


def _gelu(x):  # exact (erf-based) gelu, like torch.nn.functional.gelu default
    return 0.5 * x * (1.0 + jax.lax.erf(x * (1.0 / math.sqrt(2.0))))


# ---------------- fused Pallas kernel (one grid step = one batch element) -----
def fused_transformer_kernel(patches_ref, conv_w_ref, patch_b_ref, cls_ref,
                             ln1_g_ref, ln1_b_ref, wqkv_ref, qkvb_ref,
                             wo_ref, bo_ref, ln2_g_ref, ln2_b_ref,
                             w1_ref, b1_ref, w2_ref, b2_ref,
                             enc_g_ref, enc_b_ref,
                             o_ref, x_scr):
    # ---- patch embedding (strided conv == im2col matmul); conv bias + pos emb pre-folded
    emb = (jnp.dot(patches_ref[...], conv_w_ref[...],
                   preferred_element_type=jnp.float32) + patch_b_ref[...])   # [Np, H]
    # ---- assemble [cls ; patches] sequence in VMEM scratch (cls+pos[0] pre-folded) ----
    x_scr[pl.ds(0, 1), :] = cls_ref[...]
    x_scr[pl.ds(1, N_PATCHES), :] = emb
    x = x_scr[...]                                                           # [S, H]

    # ---- encoder blocks (static, fully-unrolled layer loop; weights stacked [L,...]) ----
    for l in range(NUM_LAYERS):
        # ----- attention sub-block (pre-norm + residual) -----
        h_res = x
        xn = _layernorm(x, ln1_g_ref[l], ln1_b_ref[l])
        # fused QKV matmul; 1/sqrt(head) folded into Wq/bq, rel_pos folded into k/v bias rows
        qkv = (jnp.dot(xn, wqkv_ref[l], preferred_element_type=jnp.float32)
               + qkvb_ref[l])                                                # [S, 3H]
        q = qkv[:, 0:HIDDEN]
        k = qkv[:, HIDDEN:2 * HIDDEN]
        v = qkv[:, 2 * HIDDEN:3 * HIDDEN]
        wo_l = wo_ref[l]                                                     # [H, H]
        attn = jnp.zeros((SEQ, HIDDEN), jnp.float32)
        for hh in range(NUM_HEADS):                                          # static head loop
            sl = slice(hh * HEAD, (hh + 1) * HEAD)
            qh, kh, vh = q[:, sl], k[:, sl], v[:, sl]
            s = jnp.dot(qh, kh.T, preferred_element_type=jnp.float32)        # scale pre-folded
            s = s - jnp.max(s, axis=-1, keepdims=True)
            e = jnp.exp(s)
            p = e * pl.reciprocal(jnp.sum(e, axis=-1, keepdims=True), approx=True)
            ctx = jnp.dot(p, vh, preferred_element_type=jnp.float32)         # [S, HEAD]
            # fold the per-head output projection in directly: avoids a concat relayout
            attn = attn + jnp.dot(ctx, wo_l[sl, :],
                                  preferred_element_type=jnp.float32)
        x = h_res + attn + bo_ref[l]

        # ----- MLP sub-block (pre-norm + residual) -----
        h_res = x
        xn = _layernorm(x, ln2_g_ref[l], ln2_b_ref[l])
        y = jnp.dot(xn, w1_ref[l], preferred_element_type=jnp.float32) + b1_ref[l]
        y = _gelu(y)
        y = jnp.dot(y, w2_ref[l], preferred_element_type=jnp.float32) + b2_ref[l]
        x = y + h_res

    # ---- final encoder LayerNorm ----
    o_ref[...] = _layernorm(x, enc_g_ref[...], enc_b_ref[...])


# ---------------- pallas_call wrapper -------------------------------------------
def _rep(shape):
    # whole-array block with a constant index_map: resident / not re-DMA'd across grid steps
    if len(shape) == 2:
        return pl.BlockSpec(shape, lambda i: (0, 0))
    return pl.BlockSpec(shape, lambda i: (0, 0, 0))


def transformer_forward(fused, x):
    B = x.shape[0]
    patches = extract_patches(x)                                  # [B, Np, PATCH_DIM]
    in_specs = [
        pl.BlockSpec((None, N_PATCHES, PATCH_DIM), lambda i: (i, 0, 0)),   # patches (per-batch)
        _rep((PATCH_DIM, HIDDEN)),                                         # conv_w
        _rep((N_PATCHES, HIDDEN)),                                         # conv_b + pos[1:]
        _rep((1, HIDDEN)),                                                 # cls + pos[0]
        _rep((NUM_LAYERS, 1, HIDDEN)), _rep((NUM_LAYERS, 1, HIDDEN)),      # ln1 g/b
        _rep((NUM_LAYERS, HIDDEN, 3 * HIDDEN)),                            # wqkv
        _rep((NUM_LAYERS, SEQ, 3 * HIDDEN)),                               # qkv per-pos bias
        _rep((NUM_LAYERS, HIDDEN, HIDDEN)), _rep((NUM_LAYERS, 1, HIDDEN)), # wo, bo
        _rep((NUM_LAYERS, 1, HIDDEN)), _rep((NUM_LAYERS, 1, HIDDEN)),      # ln2 g/b
        _rep((NUM_LAYERS, HIDDEN, MLP_DIM)), _rep((NUM_LAYERS, 1, MLP_DIM)),  # fc1
        _rep((NUM_LAYERS, MLP_DIM, HIDDEN)), _rep((NUM_LAYERS, 1, HIDDEN)),   # fc2
        _rep((1, HIDDEN)), _rep((1, HIDDEN)),                              # encoder_norm g/b
    ]
    encoded = pl.pallas_call(
        fused_transformer_kernel,
        out_shape=jax.ShapeDtypeStruct((B, SEQ, HIDDEN), jnp.float32),
        grid=(B,),
        in_specs=in_specs,
        out_specs=pl.BlockSpec((None, SEQ, HIDDEN), lambda i: (i, 0, 0)),
        scratch_shapes=[pltpu.VMEM((SEQ, HIDDEN), jnp.float32)],
        compiler_params=pltpu.CompilerParams(dimension_semantics=("parallel",)),
    )(patches, fused['conv_w'], fused['patch_bias'], fused['cls_row'],
      fused['ln1_g'], fused['ln1_b'], fused['wqkv'], fused['qkv_bias'],
      fused['wo'], fused['bo'], fused['ln2_g'], fused['ln2_b'],
      fused['w1'], fused['b1'], fused['w2'], fused['b2'],
      fused['enc_g'], fused['enc_b'])
    return encoded, []   # vis=False -> attn_weights list is empty


# ---------------- glue ------------------------------------------------------------
def extract_patches(x):
    # x: [B, C, H, W] NCHW. Strided Conv2d(kernel=stride=PATCH) == im2col + matmul.
    B, C, H, W = x.shape
    nH, nW = H // PATCH, W // PATCH
    x = x.reshape(B, C, nH, PATCH, nW, PATCH)
    x = x.transpose(0, 2, 4, 1, 3, 5)            # [B, nH, nW, C, ph, pw]
    return x.reshape(B, nH * nW, C * PATCH * PATCH)


# ---------------- one-time parameter folding (outside the forward path) -----------
def prepare_params(p):
    scale = 1.0 / math.sqrt(HEAD)
    pos = p['pos'][0]                                  # [SEQ, HIDDEN]
    fused = {
        'conv_w': p['conv_w'],
        'patch_bias': p['conv_b'] + pos[1:, :],        # conv bias + pos emb of patch rows
        'cls_row': p['cls'][0] + pos[0:1, :],          # cls token + pos emb of row 0
        'enc_g': p['enc_g'], 'enc_b': p['enc_b'],
    }

    def stack(fn):
        return jnp.stack([fn(b) for b in p['blocks']], axis=0)

    fused['ln1_g'] = stack(lambda b: b['ln1_g'])
    fused['ln1_b'] = stack(lambda b: b['ln1_b'])
    # QKV fusion: scale folded into Wq/bq; rel_pos (+bk/+bv) folded into per-position bias
    fused['wqkv'] = stack(lambda b: jnp.concatenate(
        [b['wq'] * scale, b['wk'], b['wv']], axis=-1))                       # [H, 3H]
    fused['qkv_bias'] = stack(lambda b: jnp.concatenate(
        [jnp.broadcast_to(b['bq'] * scale, (SEQ, HIDDEN)),
         b['rel_pos'] + b['bk'],
         b['rel_pos'] + b['bv']], axis=-1))                                  # [S, 3H]
    fused['wo'] = stack(lambda b: b['wo'])
    fused['bo'] = stack(lambda b: b['bo'])
    fused['ln2_g'] = stack(lambda b: b['ln2_g'])
    fused['ln2_b'] = stack(lambda b: b['ln2_b'])
    fused['w1'] = stack(lambda b: b['w1'])
    fused['b1'] = stack(lambda b: b['b1'])
    fused['w2'] = stack(lambda b: b['w2'])
    fused['b2'] = stack(lambda b: b['b2'])
    return fused


# ---------------- pure-JAX reference (for the correctness check) ------------------
def reference_forward(params, x):
    patches = extract_patches(x)
    emb = patches @ params['conv_w'] + params['conv_b']
    B = x.shape[0]
    cls = jnp.broadcast_to(params['cls'], (B, 1, HIDDEN))
    h = jnp.concatenate([cls, emb], axis=1) + params['pos']
    for p in params['blocks']:
        res = h
        xn = _layernorm(h, p['ln1_g'], p['ln1_b'])
        q = xn @ p['wq'] + p['bq']
        k = xn @ p['wk'] + p['bk'] + p['rel_pos']
        v = xn @ p['wv'] + p['bv'] + p['rel_pos']
        qh = q.reshape(B, SEQ, NUM_HEADS, HEAD).transpose(0, 2, 1, 3)
        kh = k.reshape(B, SEQ, NUM_HEADS, HEAD).transpose(0, 2, 1, 3)
        vh = v.reshape(B, SEQ, NUM_HEADS, HEAD).transpose(0, 2, 1, 3)
        s = jnp.einsum('bhqd,bhkd->bhqk', qh, kh) / math.sqrt(HEAD)
        pr = jax.nn.softmax(s, axis=-1)
        ctx = jnp.einsum('bhqk,bhkd->bhqd', pr, vh)
        ctx = ctx.transpose(0, 2, 1, 3).reshape(B, SEQ, HIDDEN)
        attn_out = ctx @ p['wo'] + p['bo']
        h = attn_out + res
        res = h
        xn = _layernorm(h, p['ln2_g'], p['ln2_b'])
        y = _gelu(xn @ p['w1'] + p['b1'])
        y = y @ p['w2'] + p['b2']
        h = y + res
    return _layernorm(h, params['enc_g'], params['enc_b'])


# ---------------- deterministic parameter init --------------------------------------
def init_params(key):
    keys = jax.random.split(key, 8 + NUM_LAYERS)

    def nrm(k, shape, scale=0.02):
        return (scale * jax.random.normal(k, shape)).astype(jnp.float32)

    params = {
        'conv_w': nrm(keys[0], (PATCH_DIM, HIDDEN)),
        'conv_b': nrm(keys[1], (1, HIDDEN)),
        'cls': nrm(keys[2], (1, 1, HIDDEN)),
        'pos': nrm(keys[3], (1, SEQ, HIDDEN)),
        'enc_g': jnp.ones((1, HIDDEN), jnp.float32),
        'enc_b': jnp.zeros((1, HIDDEN), jnp.float32),
        'blocks': [],
    }
    for l in range(NUM_LAYERS):
        ks = jax.random.split(keys[8 + l], 13)
        params['blocks'].append({
            'ln1_g': jnp.ones((1, HIDDEN), jnp.float32),
            'ln1_b': jnp.zeros((1, HIDDEN), jnp.float32),
            'wq': nrm(ks[0], (HIDDEN, HIDDEN)), 'bq': nrm(ks[1], (1, HIDDEN)),
            'wk': nrm(ks[2], (HIDDEN, HIDDEN)), 'bk': nrm(ks[3], (1, HIDDEN)),
            'wv': nrm(ks[4], (HIDDEN, HIDDEN)), 'bv': nrm(ks[5], (1, HIDDEN)),
            'rel_pos': nrm(ks[6], (SEQ, HIDDEN)),
            'wo': nrm(ks[7], (HIDDEN, HIDDEN)), 'bo': nrm(ks[8], (1, HIDDEN)),
            'ln2_g': jnp.ones((1, HIDDEN), jnp.float32),
            'ln2_b': jnp.zeros((1, HIDDEN), jnp.float32),
            'w1': nrm(ks[9], (HIDDEN, MLP_DIM)), 'b1': nrm(ks[10], (1, MLP_DIM), 1e-6),
            'w2': nrm(ks[11], (MLP_DIM, HIDDEN)), 'b2': nrm(ks[12], (1, HIDDEN), 1e-6),
        })
    return params


if __name__ == "__main__":
    key = jax.random.PRNGKey(0)
    pkey, xkey = jax.random.split(key)
    raw_params = init_params(pkey)
    fused_params = prepare_params(raw_params)          # one-time param fold
    x = jax.random.normal(xkey, (2, IN_CH, IMG, IMG), dtype=jnp.float32)

    fwd = jax.jit(transformer_forward)                 # im2col + fused kernel in one program
    encoded, attn_weights = fwd(fused_params, x)
    encoded = jax.block_until_ready(encoded)

    ref = jax.block_until_ready(reference_forward(raw_params, x))
    assert encoded.shape == (2, SEQ, HIDDEN)
    np.testing.assert_allclose(np.asarray(encoded), np.asarray(ref),
                               rtol=2e-3, atol=2e-3)
    print("KERNEL_OK")
</pallas_src>

<mosaic_0001>
module attributes {stable_mosaic.version = 11 : i64} {
  func.func @fused_transformer_kernel(%arg0: i32, %arg1: memref<1x4x192xf32, #tpu.memory_space<vmem>>, %arg2: memref<192x32xf32, #tpu.memory_space<vmem>>, %arg3: memref<4x32xf32, #tpu.memory_space<vmem>>, %arg4: memref<1x32xf32, #tpu.memory_space<vmem>>, %arg5: memref<2x1x32xf32, #tpu.memory_space<vmem>>, %arg6: memref<2x1x32xf32, #tpu.memory_space<vmem>>, %arg7: memref<2x32x96xf32, #tpu.memory_space<vmem>>, %arg8: memref<2x5x96xf32, #tpu.memory_space<vmem>>, %arg9: memref<2x32x32xf32, #tpu.memory_space<vmem>>, %arg10: memref<2x1x32xf32, #tpu.memory_space<vmem>>, %arg11: memref<2x1x32xf32, #tpu.memory_space<vmem>>, %arg12: memref<2x1x32xf32, #tpu.memory_space<vmem>>, %arg13: memref<2x32x64xf32, #tpu.memory_space<vmem>>, %arg14: memref<2x1x64xf32, #tpu.memory_space<vmem>>, %arg15: memref<2x64x32xf32, #tpu.memory_space<vmem>>, %arg16: memref<2x1x32xf32, #tpu.memory_space<vmem>>, %arg17: memref<1x32xf32, #tpu.memory_space<vmem>>, %arg18: memref<1x32xf32, #tpu.memory_space<vmem>>, %arg19: memref<1x5x32xf32, #tpu.memory_space<vmem>>, %arg20: memref<5x32xf32, #tpu.memory_space<vmem>>) attributes {dimension_semantics = [#tpu.dimension_semantics<parallel>], iteration_bounds = array<i64: 2>, scalar_prefetch = 0 : i64, scratch_operands = 1 : i64, tpu.core_type = #tpu.core_type<tc>, window_params = [{transform_indices = @transform_0, window_bounds = array<i64: 1, 4, 192>}, {pipeline_mode = #tpu.pipeline_mode<synchronous>, transform_indices = @transform_1, window_bounds = array<i64: 192, 32>}, {pipeline_mode = #tpu.pipeline_mode<synchronous>, transform_indices = @transform_2, window_bounds = array<i64: 4, 32>}, {pipeline_mode = #tpu.pipeline_mode<synchronous>, transform_indices = @transform_3, window_bounds = array<i64: 1, 32>}, {pipeline_mode = #tpu.pipeline_mode<synchronous>, transform_indices = @transform_4, window_bounds = array<i64: 2, 1, 32>}, {pipeline_mode = #tpu.pipeline_mode<synchronous>, transform_indices = @transform_5, window_bounds = array<i64: 2, 1, 32>}, {pipeline_mode = #tpu.pipeline_mode<synchronous>, transform_indices = @transform_6, window_bounds = array<i64: 2, 32, 96>}, {pipeline_mode = #tpu.pipeline_mode<synchronous>, transform_indices = @transform_7, window_bounds = array<i64: 2, 5, 96>}, {pipeline_mode = #tpu.pipeline_mode<synchronous>, transform_indices = @transform_8, window_bounds = array<i64: 2, 32, 32>}, {pipeline_mode = #tpu.pipeline_mode<synchronous>, transform_indices = @transform_9, window_bounds = array<i64: 2, 1, 32>}, {pipeline_mode = #tpu.pipeline_mode<synchronous>, transform_indices = @transform_10, window_bounds = array<i64: 2, 1, 32>}, {pipeline_mode = #tpu.pipeline_mode<synchronous>, transform_indices = @transform_11, window_bounds = array<i64: 2, 1, 32>}, {pipeline_mode = #tpu.pipeline_mode<synchronous>, transform_indices = @transform_12, window_bounds = array<i64: 2, 32, 64>}, {pipeline_mode = #tpu.pipeline_mode<synchronous>, transform_indices = @transform_13, window_bounds = array<i64: 2, 1, 64>}, {pipeline_mode = #tpu.pipeline_mode<synchronous>, transform_indices = @transform_14, window_bounds = array<i64: 2, 64, 32>}, {pipeline_mode = #tpu.pipeline_mode<synchronous>, transform_indices = @transform_15, window_bounds = array<i64: 2, 1, 32>}, {pipeline_mode = #tpu.pipeline_mode<synchronous>, transform_indices = @transform_16, window_bounds = array<i64: 1, 32>}, {pipeline_mode = #tpu.pipeline_mode<synchronous>, transform_indices = @transform_17, window_bounds = array<i64: 1, 32>}, {transform_indices = @transform_18, window_bounds = array<i64: 1, 5, 32>}]} {
    %c0 = arith.constant 0 : index
    %c0_0 = arith.constant 0 : index
    %c0_1 = arith.constant 0 : index
    %0 = vector.load %arg1[%c0, %c0_0, %c0_1] : memref<1x4x192xf32, #tpu.memory_space<vmem>>, vector<1x4x192xf32>
    %1 = vector.shape_cast %0 : vector<1x4x192xf32> to vector<4x192xf32>
    %c0_2 = arith.constant 0 : index
    %c0_3 = arith.constant 0 : index
    %2 = vector.load %arg2[%c0_2, %c0_3] : memref<192x32xf32, #tpu.memory_space<vmem>>, vector<192x32xf32>
    %cst = arith.constant dense<0.000000e+00> : vector<4x32xf32>
    %3 = tpu.matmul %1, %2, %cst {dimension_numbers = #tpu.dot_dimension_numbers<[1], [0], [0], [1], [0, 0, 1, 1], [], []>} : vector<4x192xf32>, vector<192x32xf32>, vector<4x32xf32> -> vector<4x32xf32>
    %c0_4 = arith.constant 0 : index
    %c0_5 = arith.constant 0 : index
    %4 = vector.load %arg3[%c0_4, %c0_5] : memref<4x32xf32, #tpu.memory_space<vmem>>, vector<4x32xf32>
    %5 = arith.addf %3, %4 : vector<4x32xf32>
    %c0_6 = arith.constant 0 : index
    %c0_7 = arith.constant 0 : index
    %6 = vector.load %arg4[%c0_6, %c0_7] : memref<1x32xf32, #tpu.memory_space<vmem>>, vector<1x32xf32>
    %c0_8 = arith.constant 0 : index
    %c0_9 = arith.constant 0 : index
    %7 = vector.load %arg20[%c0_8, %c0_9] : memref<5x32xf32, #tpu.memory_space<vmem>>, vector<1x32xf32>
    tpu.vector_store %arg20[%c0_8, %c0_9], %6 {strides = array<i32>} : memref<5x32xf32, #tpu.memory_space<vmem>>, vector<1x32xf32>,
    %c1 = arith.constant 1 : index
    %c0_10 = arith.constant 0 : index
    %8 = vector.load %arg20[%c1, %c0_10] : memref<5x32xf32, #tpu.memory_space<vmem>>, vector<4x32xf32>
    tpu.vector_store %arg20[%c1, %c0_10], %5 {strides = array<i32>} : memref<5x32xf32, #tpu.memory_space<vmem>>, vector<4x32xf32>,
    %c0_11 = arith.constant 0 : index
    %c0_12 = arith.constant 0 : index
    %9 = vector.load %arg20[%c0_11, %c0_12] : memref<5x32xf32, #tpu.memory_space<vmem>>, vector<5x32xf32>
    %c0_13 = arith.constant 0 : index
    %c0_14 = arith.constant 0 : index
    %c0_15 = arith.constant 0 : index
    %10 = vector.load %arg5[%c0_13, %c0_14, %c0_15] : memref<2x1x32xf32, #tpu.memory_space<vmem>>, vector<1x1x32xf32>
    %11 = vector.shape_cast %10 : vector<1x1x32xf32> to vector<1x32xf32>
    %c0_16 = arith.constant 0 : index
    %c0_17 = arith.constant 0 : index
    %c0_18 = arith.constant 0 : index
    %12 = vector.load %arg6[%c0_16, %c0_17, %c0_18] : memref<2x1x32xf32, #tpu.memory_space<vmem>>, vector<1x1x32xf32>
    %13 = vector.shape_cast %12 : vector<1x1x32xf32> to vector<1x32xf32>
    %cst_19 = arith.constant dense<0.000000e+00> : vector<5xf32>
    %14 = vector.multi_reduction <add>, %9, %cst_19 [1] : vector<5x32xf32> to vector<5xf32>
    %15 = vector.shape_cast %14 : vector<5xf32> to vector<5x1xf32>
    %cst_20 = arith.constant 3.200000e+01 : f32
    %16 = vector.broadcast %cst_20 : f32 to vector<5x1xf32>
    %17 = arith.divf %15, %16 : vector<5x1xf32>
    %18 = vector.broadcast %17 : vector<5x1xf32> to vector<5x32xf32>
    %19 = arith.subf %9, %18 : vector<5x32xf32>
    %20 = arith.mulf %19, %19 : vector<5x32xf32>
    %cst_21 = arith.constant dense<0.000000e+00> : vector<5xf32>
    %21 = vector.multi_reduction <add>, %20, %cst_21 [1] : vector<5x32xf32> to vector<5xf32>
    %22 = vector.shape_cast %21 : vector<5xf32> to vector<5x1xf32>
    %cst_22 = arith.constant 3.200000e+01 : f32
    %23 = vector.broadcast %cst_22 : f32 to vector<5x1xf32>
    %24 = arith.divf %22, %23 : vector<5x1xf32>
    %25 = vector.broadcast %17 : vector<5x1xf32> to vector<5x32xf32>
    %26 = arith.subf %9, %25 : vector<5x32xf32>
    %cst_23 = arith.constant 9.99999997E-7 : f32
    %27 = vector.broadcast %cst_23 : f32 to vector<5x1xf32>
    %28 = arith.addf %24, %27 : vector<5x1xf32>
    %29 = math.rsqrt %28 : vector<5x1xf32>
    %30 = vector.broadcast %29 : vector<5x1xf32> to vector<5x32xf32>
    %31 = arith.mulf %26, %30 : vector<5x32xf32>
    %32 = vector.broadcast %11 : vector<1x32xf32> to vector<5x32xf32>
    %33 = arith.mulf %31, %32 : vector<5x32xf32>
    %34 = vector.broadcast %13 : vector<1x32xf32> to vector<5x32xf32>
    %35 = arith.addf %33, %34 : vector<5x32xf32>
    %c0_24 = arith.constant 0 : index
    %c0_25 = arith.constant 0 : index
    %c0_26 = arith.constant 0 : index
    %36 = vector.load %arg7[%c0_24, %c0_25, %c0_26] : memref<2x32x96xf32, #tpu.memory_space<vmem>>, vector<1x32x96xf32>
    %37 = vector.shape_cast %36 : vector<1x32x96xf32> to vector<32x96xf32>
    %cst_27 = arith.constant dense<0.000000e+00> : vector<5x96xf32>
    %38 = tpu.matmul %35, %37, %cst_27 {dimension_numbers = #tpu.dot_dimension_numbers<[1], [0], [0], [1], [0, 0, 1, 1], [], []>} : vector<5x32xf32>, vector<32x96xf32>, vector<5x96xf32> -> vector<5x96xf32>
    %c0_28 = arith.constant 0 : index
    %c0_29 = arith.constant 0 : index
    %c0_30 = arith.constant 0 : index
    %39 = vector.load %arg8[%c0_28, %c0_29, %c0_30] : memref<2x5x96xf32, #tpu.memory_space<vmem>>, vector<1x5x96xf32>
    %40 = vector.shape_cast %39 : vector<1x5x96xf32> to vector<5x96xf32>
    %41 = arith.addf %38, %40 : vector<5x96xf32>
    %42 = vector.extract_strided_slice %41 {offsets = [0, 0], sizes = [5, 32], strides = [1, 1]} : vector<5x96xf32> to vector<5x32xf32>
    %43 = vector.extract_strided_slice %41 {offsets = [0, 32], sizes = [5, 32], strides = [1, 1]} : vector<5x96xf32> to vector<5x32xf32>
    %44 = vector.extract_strided_slice %41 {offsets = [0, 64], sizes = [5, 32], strides = [1, 1]} : vector<5x96xf32> to vector<5x32xf32>
    %c0_31 = arith.constant 0 : index
    %c0_32 = arith.constant 0 : index
    %c0_33 = arith.constant 0 : index
    %45 = vector.load %arg9[%c0_31, %c0_32, %c0_33] : memref<2x32x32xf32, #tpu.memory_space<vmem>>, vector<1x32x32xf32>
    %46 = vector.shape_cast %45 : vector<1x32x32xf32> to vector<32x32xf32>
    %cst_34 = arith.constant 0.000000e+00 : f32
    %47 = vector.broadcast %cst_34 : f32 to vector<5x32xf32>
    %48 = vector.extract_strided_slice %42 {offsets = [0, 0], sizes = [5, 8], strides = [1, 1]} : vector<5x32xf32> to vector<5x8xf32>
    %49 = vector.extract_strided_slice %43 {offsets = [0, 0], sizes = [5, 8], strides = [1, 1]} : vector<5x32xf32> to vector<5x8xf32>
    %50 = vector.extract_strided_slice %44 {offsets = [0, 0], sizes = [5, 8], strides = [1, 1]} : vector<5x32xf32> to vector<5x8xf32>
    %51 = tpu.transpose %49, [1, 0] : vector<5x8xf32> -> vector<8x5xf32>
    %cst_35 = arith.constant dense<0.000000e+00> : vector<5x5xf32>
    %52 = tpu.matmul %48, %51, %cst_35 {dimension_numbers = #tpu.dot_dimension_numbers<[1], [0], [0], [1], [0, 0, 1, 1], [], []>} : vector<5x8xf32>, vector<8x5xf32>, vector<5x5xf32> -> vector<5x5xf32>
    %cst_36 = arith.constant dense<0xFF800000> : vector<5xf32>
    %53 = vector.multi_reduction <maximumf>, %52, %cst_36 [1] : vector<5x5xf32> to vector<5xf32>
    %54 = vector.shape_cast %53 : vector<5xf32> to vector<5x1xf32>
    %55 = vector.broadcast %54 : vector<5x1xf32> to vector<5x5xf32>
    %56 = arith.subf %52, %55 : vector<5x5xf32>
    %57 = math.exp %56 : vector<5x5xf32>
    %cst_37 = arith.constant dense<0.000000e+00> : vector<5xf32>
    %58 = vector.multi_reduction <add>, %57, %cst_37 [1] : vector<5x5xf32> to vector<5xf32>
    %59 = vector.shape_cast %58 : vector<5xf32> to vector<5x1xf32>
    %60 = tpu.reciprocal %59 {approx = true} : vector<5x1xf32> -> vector<5x1xf32>
    %61 = vector.broadcast %60 : vector<5x1xf32> to vector<5x5xf32>
    %62 = arith.mulf %57, %61 : vector<5x5xf32>
    %cst_38 = arith.constant dense<0.000000e+00> : vector<5x8xf32>
    %63 = tpu.matmul %62, %50, %cst_38 {dimension_numbers = #tpu.dot_dimension_numbers<[1], [0], [0], [1], [0, 0, 1, 1], [], []>} : vector<5x5xf32>, vector<5x8xf32>, vector<5x8xf32> -> vector<5x8xf32>
    %64 = vector.extract_strided_slice %46 {offsets = [0, 0], sizes = [8, 32], strides = [1, 1]} : vector<32x32xf32> to vector<8x32xf32>
    %cst_39 = arith.constant dense<0.000000e+00> : vector<5x32xf32>
    %65 = tpu.matmul %63, %64, %cst_39 {dimension_numbers = #tpu.dot_dimension_numbers<[1], [0], [0], [1], [0, 0, 1, 1], [], []>} : vector<5x8xf32>, vector<8x32xf32>, vector<5x32xf32> -> vector<5x32xf32>
    %66 = arith.addf %47, %65 : vector<5x32xf32>
    %67 = vector.extract_strided_slice %42 {offsets = [0, 8], sizes = [5, 8], strides = [1, 1]} : vector<5x32xf32> to vector<5x8xf32>
    %68 = vector.extract_strided_slice %43 {offsets = [0, 8], sizes = [5, 8], strides = [1, 1]} : vector<5x32xf32> to vector<5x8xf32>
    %69 = vector.extract_strided_slice %44 {offsets = [0, 8], sizes = [5, 8], strides = [1, 1]} : vector<5x32xf32> to vector<5x8xf32>
    %70 = tpu.transpose %68, [1, 0] : vector<5x8xf32> -> vector<8x5xf32>
    %cst_40 = arith.constant dense<0.000000e+00> : vector<5x5xf32>
    %71 = tpu.matmul %67, %70, %cst_40 {dimension_numbers = #tpu.dot_dimension_numbers<[1], [0], [0], [1], [0, 0, 1, 1], [], []>} : vector<5x8xf32>, vector<8x5xf32>, vector<5x5xf32> -> vector<5x5xf32>
    %cst_41 = arith.constant dense<0xFF800000> : vector<5xf32>
    %72 = vector.multi_reduction <maximumf>, %71, %cst_41 [1] : vector<5x5xf32> to vector<5xf32>
    %73 = vector.shape_cast %72 : vector<5xf32> to vector<5x1xf32>
    %74 = vector.broadcast %73 : vector<5x1xf32> to vector<5x5xf32>
    %75 = arith.subf %71, %74 : vector<5x5xf32>
    %76 = math.exp %75 : vector<5x5xf32>
    %cst_42 = arith.constant dense<0.000000e+00> : vector<5xf32>
    %77 = vector.multi_reduction <add>, %76, %cst_42 [1] : vector<5x5xf32> to vector<5xf32>
    %78 = vector.shape_cast %77 : vector<5xf32> to vector<5x1xf32>
    %79 = tpu.reciprocal %78 {approx = true} : vector<5x1xf32> -> vector<5x1xf32>
    %80 = vector.broadcast %79 : vector<5x1xf32> to vector<5x5xf32>
    %81 = arith.mulf %76, %80 : vector<5x5xf32>
    %cst_43 = arith.constant dense<0.000000e+00> : vector<5x8xf32>
    %82 = tpu.matmul %81, %69, %cst_43 {dimension_numbers = #tpu.dot_dimension_numbers<[1], [0], [0], [1], [0, 0, 1, 1], [], []>} : vector<5x5xf32>, vector<5x8xf32>, vector<5x8xf32> -> vector<5x8xf32>
    %83 = vector.extract_strided_slice %46 {offsets = [8, 0], sizes = [8, 32], strides = [1, 1]} : vector<32x32xf32> to vector<8x32xf32>
    %cst_44 = arith.constant dense<0.000000e+00> : vector<5x32xf32>
    %84 = tpu.matmul %82, %83, %cst_44 {dimension_numbers = #tpu.dot_dimension_numbers<[1], [0], [0], [1], [0, 0, 1, 1], [], []>} : vector<5x8xf32>, vector<8x32xf32>, vector<5x32xf32> -> vector<5x32xf32>
    %85 = arith.addf %66, %84 : vector<5x32xf32>
    %86 = vector.extract_strided_slice %42 {offsets = [0, 16], sizes = [5, 8], strides = [1, 1]} : vector<5x32xf32> to vector<5x8xf32>
    %87 = vector.extract_strided_slice %43 {offsets = [0, 16], sizes = [5, 8], strides = [1, 1]} : vector<5x32xf32> to vector<5x8xf32>
    %88 = vector.extract_strided_slice %44 {offsets = [0, 16], sizes = [5, 8], strides = [1, 1]} : vector<5x32xf32> to vector<5x8xf32>
    %89 = tpu.transpose %87, [1, 0] : vector<5x8xf32> -> vector<8x5xf32>
    %cst_45 = arith.constant dense<0.000000e+00> : vector<5x5xf32>
    %90 = tpu.matmul %86, %89, %cst_45 {dimension_numbers = #tpu.dot_dimension_numbers<[1], [0], [0], [1], [0, 0, 1, 1], [], []>} : vector<5x8xf32>, vector<8x5xf32>, vector<5x5xf32> -> vector<5x5xf32>
    %cst_46 = arith.constant dense<0xFF800000> : vector<5xf32>
    %91 = vector.multi_reduction <maximumf>, %90, %cst_46 [1] : vector<5x5xf32> to vector<5xf32>
    %92 = vector.shape_cast %91 : vector<5xf32> to vector<5x1xf32>
    %93 = vector.broadcast %92 : vector<5x1xf32> to vector<5x5xf32>
    %94 = arith.subf %90, %93 : vector<5x5xf32>
    %95 = math.exp %94 : vector<5x5xf32>
    %cst_47 = arith.constant dense<0.000000e+00> : vector<5xf32>
    %96 = vector.multi_reduction <add>, %95, %cst_47 [1] : vector<5x5xf32> to vector<5xf32>
    %97 = vector.shape_cast %96 : vector<5xf32> to vector<5x1xf32>
    %98 = tpu.reciprocal %97 {approx = true} : vector<5x1xf32> -> vector<5x1xf32>
    %99 = vector.broadcast %98 : vector<5x1xf32> to vector<5x5xf32>
    %100 = arith.mulf %95, %99 : vector<5x5xf32>
    %cst_48 = arith.constant dense<0.000000e+00> : vector<5x8xf32>
    %101 = tpu.matmul %100, %88, %cst_48 {dimension_numbers = #tpu.dot_dimension_numbers<[1], [0], [0], [1], [0, 0, 1, 1], [], []>} : vector<5x5xf32>, vector<5x8xf32>, vector<5x8xf32> -> vector<5x8xf32>
    %102 = vector.extract_strided_slice %46 {offsets = [16, 0], sizes = [8, 32], strides = [1, 1]} : vector<32x32xf32> to vector<8x32xf32>
    %cst_49 = arith.constant dense<0.000000e+00> : vector<5x32xf32>
    %103 = tpu.matmul %101, %102, %cst_49 {dimension_numbers = #tpu.dot_dimension_numbers<[1], [0], [0], [1], [0, 0, 1, 1], [], []>} : vector<5x8xf32>, vector<8x32xf32>, vector<5x32xf32> -> vector<5x32xf32>
    %104 = arith.addf %85, %103 : vector<5x32xf32>
    %105 = vector.extract_strided_slice %42 {offsets = [0, 24], sizes = [5, 8], strides = [1, 1]} : vector<5x32xf32> to vector<5x8xf32>
    %106 = vector.extract_strided_slice %43 {offsets = [0, 24], sizes = [5, 8], strides = [1, 1]} : vector<5x32xf32> to vector<5x8xf32>
    %107 = vector.extract_strided_slice %44 {offsets = [0, 24], sizes = [5, 8], strides = [1, 1]} : vector<5x32xf32> to vector<5x8xf32>
    %108 = tpu.transpose %106, [1, 0] : vector<5x8xf32> -> vector<8x5xf32>
    %cst_50 = arith.constant dense<0.000000e+00> : vector<5x5xf32>
    %109 = tpu.matmul %105, %108, %cst_50 {dimension_numbers = #tpu.dot_dimension_numbers<[1], [0], [0], [1], [0, 0, 1, 1], [], []>} : vector<5x8xf32>, vector<8x5xf32>, vector<5x5xf32> -> vector<5x5xf32>
    %cst_51 = arith.constant dense<0xFF800000> : vector<5xf32>
    %110 = vector.multi_reduction <maximumf>, %109, %cst_51 [1] : vector<5x5xf32> to vector<5xf32>
    %111 = vector.shape_cast %110 : vector<5xf32> to vector<5x1xf32>
    %112 = vector.broadcast %111 : vector<5x1xf32> to vector<5x5xf32>
    %113 = arith.subf %109, %112 : vector<5x5xf32>
    %114 = math.exp %113 : vector<5x5xf32>
    %cst_52 = arith.constant dense<0.000000e+00> : vector<5xf32>
    %115 = vector.multi_reduction <add>, %114, %cst_52 [1] : vector<5x5xf32> to vector<5xf32>
    %116 = vector.shape_cast %115 : vector<5xf32> to vector<5x1xf32>
    %117 = tpu.reciprocal %116 {approx = true} : vector<5x1xf32> -> vector<5x1xf32>
    %118 = vector.broadcast %117 : vector<5x1xf32> to vector<5x5xf32>
    %119 = arith.mulf %114, %118 : vector<5x5xf32>
    %cst_53 = arith.constant dense<0.000000e+00> : vector<5x8xf32>
    %120 = tpu.matmul %119, %107, %cst_53 {dimension_numbers = #tpu.dot_dimension_numbers<[1], [0], [0], [1], [0, 0, 1, 1], [], []>} : vector<5x5xf32>, vector<5x8xf32>, vector<5x8xf32> -> vector<5x8xf32>
    %121 = vector.extract_strided_slice %46 {offsets = [24, 0], sizes = [8, 32], strides = [1, 1]} : vector<32x32xf32> to vector<8x32xf32>
    %cst_54 = arith.constant dense<0.000000e+00> : vector<5x32xf32>
    %122 = tpu.matmul %120, %121, %cst_54 {dimension_numbers = #tpu.dot_dimension_numbers<[1], [0], [0], [1], [0, 0, 1, 1], [], []>} : vector<5x8xf32>, vector<8x32xf32>, vector<5x32xf32> -> vector<5x32xf32>
    %123 = arith.addf %104, %122 : vector<5x32xf32>
    %124 = arith.addf %9, %123 : vector<5x32xf32>
    %c0_55 = arith.constant 0 : index
    %c0_56 = arith.constant 0 : index
    %c0_57 = arith.constant 0 : index
    %125 = vector.load %arg10[%c0_55, %c0_56, %c0_57] : memref<2x1x32xf32, #tpu.memory_space<vmem>>, vector<1x1x32xf32>
    %126 = vector.shape_cast %125 : vector<1x1x32xf32> to vector<1x32xf32>
    %127 = vector.broadcast %126 : vector<1x32xf32> to vector<5x32xf32>
    %128 = arith.addf %124, %127 : vector<5x32xf32>
    %c0_58 = arith.constant 0 : index
    %c0_59 = arith.constant 0 : index
    %c0_60 = arith.constant 0 : index
    %129 = vector.load %arg11[%c0_58, %c0_59, %c0_60] : memref<2x1x32xf32, #tpu.memory_space<vmem>>, vector<1x1x32xf32>
    %130 = vector.shape_cast %129 : vector<1x1x32xf32> to vector<1x32xf32>
    %c0_61 = arith.constant 0 : index
    %c0_62 = arith.constant 0 : index
    %c0_63 = arith.constant 0 : index
    %131 = vector.load %arg12[%c0_61, %c0_62, %c0_63] : memref<2x1x32xf32, #tpu.memory_space<vmem>>, vector<1x1x32xf32>
    %132 = vector.shape_cast %131 : vector<1x1x32xf32> to vector<1x32xf32>
    %cst_64 = arith.constant dense<0.000000e+00> : vector<5xf32>
    %133 = vector.multi_reduction <add>, %128, %cst_64 [1] : vector<5x32xf32> to vector<5xf32>
    %134 = vector.shape_cast %133 : vector<5xf32> to vector<5x1xf32>
    %cst_65 = arith.constant 3.200000e+01 : f32
    %135 = vector.broadcast %cst_65 : f32 to vector<5x1xf32>
    %136 = arith.divf %134, %135 : vector<5x1xf32>
    %137 = vector.broadcast %136 : vector<5x1xf32> to vector<5x32xf32>
    %138 = arith.subf %128, %137 : vector<5x32xf32>
    %139 = arith.mulf %138, %138 : vector<5x32xf32>
    %cst_66 = arith.constant dense<0.000000e+00> : vector<5xf32>
    %140 = vector.multi_reduction <add>, %139, %cst_66 [1] : vector<5x32xf32> to vector<5xf32>
    %141 = vector.shape_cast %140 : vector<5xf32> to vector<5x1xf32>
    %cst_67 = arith.constant 3.200000e+01 : f32
    %142 = vector.broadcast %cst_67 : f32 to vector<5x1xf32>
    %143 = arith.divf %141, %142 : vector<5x1xf32>
    %144 = vector.broadcast %136 : vector<5x1xf32> to vector<5x32xf32>
    %145 = arith.subf %128, %144 : vector<5x32xf32>
    %cst_68 = arith.constant 9.99999997E-7 : f32
    %146 = vector.broadcast %cst_68 : f32 to vector<5x1xf32>
    %147 = arith.addf %143, %146 : vector<5x1xf32>
    %148 = math.rsqrt %147 : vector<5x1xf32>
    %149 = vector.broadcast %148 : vector<5x1xf32> to vector<5x32xf32>
    %150 = arith.mulf %145, %149 : vector<5x32xf32>
    %151 = vector.broadcast %130 : vector<1x32xf32> to vector<5x32xf32>
    %152 = arith.mulf %150, %151 : vector<5x32xf32>
    %153 = vector.broadcast %132 : vector<1x32xf32> to vector<5x32xf32>
    %154 = arith.addf %152, %153 : vector<5x32xf32>
    %c0_69 = arith.constant 0 : index
    %c0_70 = arith.constant 0 : index
    %c0_71 = arith.constant 0 : index
    %155 = vector.load %arg13[%c0_69, %c0_70, %c0_71] : memref<2x32x64xf32, #tpu.memory_space<vmem>>, vector<1x32x64xf32>
    %156 = vector.shape_cast %155 : vector<1x32x64xf32> to vector<32x64xf32>
    %cst_72 = arith.constant dense<0.000000e+00> : vector<5x64xf32>
    %157 = tpu.matmul %154, %156, %cst_72 {dimension_numbers = #tpu.dot_dimension_numbers<[1], [0], [0], [1], [0, 0, 1, 1], [], []>} : vector<5x32xf32>, vector<32x64xf32>, vector<5x64xf32> -> vector<5x64xf32>
    %c0_73 = arith.constant 0 : index
    %c0_74 = arith.constant 0 : index
    %c0_75 = arith.constant 0 : index
    %158 = vector.load %arg14[%c0_73, %c0_74, %c0_75] : memref<2x1x64xf32, #tpu.memory_space<vmem>>, vector<1x1x64xf32>
    %159 = vector.shape_cast %158 : vector<1x1x64xf32> to vector<1x64xf32>
    %160 = vector.broadcast %159 : vector<1x64xf32> to vector<5x64xf32>
    %161 = arith.addf %157, %160 : vector<5x64xf32>
    %cst_76 = arith.constant 5.000000e-01 : f32
    %162 = vector.broadcast %cst_76 : f32 to vector<5x64xf32>
    %163 = arith.mulf %162, %161 : vector<5x64xf32>
    %cst_77 = arith.constant 0.707106769 : f32
    %164 = vector.broadcast %cst_77 : f32 to vector<5x64xf32>
    %165 = arith.mulf %161, %164 : vector<5x64xf32>
    %166 = math.erf %165 : vector<5x64xf32>
    %cst_78 = arith.constant 1.000000e+00 : f32
    %167 = vector.broadcast %cst_78 : f32 to vector<5x64xf32>
    %168 = arith.addf %167, %166 : vector<5x64xf32>
    %169 = arith.mulf %163, %168 : vector<5x64xf32>
    %c0_79 = arith.constant 0 : index
    %c0_80 = arith.constant 0 : index
    %c0_81 = arith.constant 0 : index
    %170 = vector.load %arg15[%c0_79, %c0_80, %c0_81] : memref<2x64x32xf32, #tpu.memory_space<vmem>>, vector<1x64x32xf32>
    %171 = vector.shape_cast %170 : vector<1x64x32xf32> to vector<64x32xf32>
    %cst_82 = arith.constant dense<0.000000e+00> : vector<5x32xf32>
    %172 = tpu.matmul %169, %171, %cst_82 {dimension_numbers = #tpu.dot_dimension_numbers<[1], [0], [0], [1], [0, 0, 1, 1], [], []>} : vector<5x64xf32>, vector<64x32xf32>, vector<5x32xf32> -> vector<5x32xf32>
    %c0_83 = arith.constant 0 : index
    %c0_84 = arith.constant 0 : index
    %c0_85 = arith.constant 0 : index
    %173 = vector.load %arg16[%c0_83, %c0_84, %c0_85] : memref<2x1x32xf32, #tpu.memory_space<vmem>>, vector<1x1x32xf32>
    %174 = vector.shape_cast %173 : vector<1x1x32xf32> to vector<1x32xf32>
    %175 = vector.broadcast %174 : vector<1x32xf32> to vector<5x32xf32>
    %176 = arith.addf %172, %175 : vector<5x32xf32>
    %177 = arith.addf %176, %128 : vector<5x32xf32>
    %c1_86 = arith.constant 1 : index
    %c0_87 = arith.constant 0 : index
    %c0_88 = arith.constant 0 : index
    %178 = vector.load %arg5[%c1_86, %c0_87, %c0_88] : memref<2x1x32xf32, #tpu.memory_space<vmem>>, vector<1x1x32xf32>
    %179 = vector.shape_cast %178 : vector<1x1x32xf32> to vector<1x32xf32>
    %c1_89 = arith.constant 1 : index
    %c0_90 = arith.constant 0 : index
    %c0_91 = arith.constant 0 : index
    %180 = vector.load %arg6[%c1_89, %c0_90, %c0_91] : memref<2x1x32xf32, #tpu.memory_space<vmem>>, vector<1x1x32xf32>
    %181 = vector.shape_cast %180 : vector<1x1x32xf32> to vector<1x32xf32>
    %cst_92 = arith.constant dense<0.000000e+00> : vector<5xf32>
    %182 = vector.multi_reduction <add>, %177, %cst_92 [1] : vector<5x32xf32> to vector<5xf32>
    %183 = vector.shape_cast %182 : vector<5xf32> to vector<5x1xf32>
    %cst_93 = arith.constant 3.200000e+01 : f32
    %184 = vector.broadcast %cst_93 : f32 to vector<5x1xf32>
    %185 = arith.divf %183, %184 : vector<5x1xf32>
    %186 = vector.broadcast %185 : vector<5x1xf32> to vector<5x32xf32>
    %187 = arith.subf %177, %186 : vector<5x32xf32>
    %188 = arith.mulf %187, %187 : vector<5x32xf32>
    %cst_94 = arith.constant dense<0.000000e+00> : vector<5xf32>
    %189 = vector.multi_reduction <add>, %188, %cst_94 [1] : vector<5x32xf32> to vector<5xf32>
    %190 = vector.shape_cast %189 : vector<5xf32> to vector<5x1xf32>
    %cst_95 = arith.constant 3.200000e+01 : f32
    %191 = vector.broadcast %cst_95 : f32 to vector<5x1xf32>
    %192 = arith.divf %190, %191 : vector<5x1xf32>
    %193 = vector.broadcast %185 : vector<5x1xf32> to vector<5x32xf32>
    %194 = arith.subf %177, %193 : vector<5x32xf32>
    %cst_96 = arith.constant 9.99999997E-7 : f32
    %195 = vector.broadcast %cst_96 : f32 to vector<5x1xf32>
    %196 = arith.addf %192, %195 : vector<5x1xf32>
    %197 = math.rsqrt %196 : vector<5x1xf32>
    %198 = vector.broadcast %197 : vector<5x1xf32> to vector<5x32xf32>
    %199 = arith.mulf %194, %198 : vector<5x32xf32>
    %200 = vector.broadcast %179 : vector<1x32xf32> to vector<5x32xf32>
    %201 = arith.mulf %199, %200 : vector<5x32xf32>
    %202 = vector.broadcast %181 : vector<1x32xf32> to vector<5x32xf32>
    %203 = arith.addf %201, %202 : vector<5x32xf32>
    %c1_97 = arith.constant 1 : index
    %c0_98 = arith.constant 0 : index
    %c0_99 = arith.constant 0 : index
    %204 = vector.load %arg7[%c1_97, %c0_98, %c0_99] : memref<2x32x96xf32, #tpu.memory_space<vmem>>, vector<1x32x96xf32>
    %205 = vector.shape_cast %204 : vector<1x32x96xf32> to vector<32x96xf32>
    %cst_100 = arith.constant dense<0.000000e+00> : vector<5x96xf32>
    %206 = tpu.matmul %203, %205, %cst_100 {dimension_numbers = #tpu.dot_dimension_numbers<[1], [0], [0], [1], [0, 0, 1, 1], [], []>} : vector<5x32xf32>, vector<32x96xf32>, vector<5x96xf32> -> vector<5x96xf32>
    %c1_101 = arith.constant 1 : index
    %c0_102 = arith.constant 0 : index
    %c0_103 = arith.constant 0 : index
    %207 = vector.load %arg8[%c1_101, %c0_102, %c0_103] : memref<2x5x96xf32, #tpu.memory_space<vmem>>, vector<1x5x96xf32>
    %208 = vector.shape_cast %207 : vector<1x5x96xf32> to vector<5x96xf32>
    %209 = arith.addf %206, %208 : vector<5x96xf32>
    %210 = vector.extract_strided_slice %209 {offsets = [0, 0], sizes = [5, 32], strides = [1, 1]} : vector<5x96xf32> to vector<5x32xf32>
    %211 = vector.extract_strided_slice %209 {offsets = [0, 32], sizes = [5, 32], strides = [1, 1]} : vector<5x96xf32> to vector<5x32xf32>
    %212 = vector.extract_strided_slice %209 {offsets = [0, 64], sizes = [5, 32], strides = [1, 1]} : vector<5x96xf32> to vector<5x32xf32>
    %c1_104 = arith.constant 1 : index
    %c0_105 = arith.constant 0 : index
    %c0_106 = arith.constant 0 : index
    %213 = vector.load %arg9[%c1_104, %c0_105, %c0_106] : memref<2x32x32xf32, #tpu.memory_space<vmem>>, vector<1x32x32xf32>
    %214 = vector.shape_cast %213 : vector<1x32x32xf32> to vector<32x32xf32>
    %cst_107 = arith.constant 0.000000e+00 : f32
    %215 = vector.broadcast %cst_107 : f32 to vector<5x32xf32>
    %216 = vector.extract_strided_slice %210 {offsets = [0, 0], sizes = [5, 8], strides = [1, 1]} : vector<5x32xf32> to vector<5x8xf32>
    %217 = vector.extract_strided_slice %211 {offsets = [0, 0], sizes = [5, 8], strides = [1, 1]} : vector<5x32xf32> to vector<5x8xf32>
    %218 = vector.extract_strided_slice %212 {offsets = [0, 0], sizes = [5, 8], strides = [1, 1]} : vector<5x32xf32> to vector<5x8xf32>
    %219 = tpu.transpose %217, [1, 0] : vector<5x8xf32> -> vector<8x5xf32>
    %cst_108 = arith.constant dense<0.000000e+00> : vector<5x5xf32>
    %220 = tpu.matmul %216, %219, %cst_108 {dimension_numbers = #tpu.dot_dimension_numbers<[1], [0], [0], [1], [0, 0, 1, 1], [], []>} : vector<5x8xf32>, vector<8x5xf32>, vector<5x5xf32> -> vector<5x5xf32>
    %cst_109 = arith.constant dense<0xFF800000> : vector<5xf32>
    %221 = vector.multi_reduction <maximumf>, %220, %cst_109 [1] : vector<5x5xf32> to vector<5xf32>
    %222 = vector.shape_cast %221 : vector<5xf32> to vector<5x1xf32>
    %223 = vector.broadcast %222 : vector<5x1xf32> to vector<5x5xf32>
    %224 = arith.subf %220, %223 : vector<5x5xf32>
    %225 = math.exp %224 : vector<5x5xf32>
    %cst_110 = arith.constant dense<0.000000e+00> : vector<5xf32>
    %226 = vector.multi_reduction <add>, %225, %cst_110 [1] : vector<5x5xf32> to vector<5xf32>
    %227 = vector.shape_cast %226 : vector<5xf32> to vector<5x1xf32>
    %228 = tpu.reciprocal %227 {approx = true} : vector<5x1xf32> -> vector<5x1xf32>
    %229 = vector.broadcast %228 : vector<5x1xf32> to vector<5x5xf32>
    %230 = arith.mulf %225, %229 : vector<5x5xf32>
    %cst_111 = arith.constant dense<0.000000e+00> : vector<5x8xf32>
    %231 = tpu.matmul %230, %218, %cst_111 {dimension_numbers = #tpu.dot_dimension_numbers<[1], [0], [0], [1], [0, 0, 1, 1], [], []>} : vector<5x5xf32>, vector<5x8xf32>, vector<5x8xf32> -> vector<5x8xf32>
    %232 = vector.extract_strided_slice %214 {offsets = [0, 0], sizes = [8, 32], strides = [1, 1]} : vector<32x32xf32> to vector<8x32xf32>
    %cst_112 = arith.constant dense<0.000000e+00> : vector<5x32xf32>
    %233 = tpu.matmul %231, %232, %cst_112 {dimension_numbers = #tpu.dot_dimension_numbers<[1], [0], [0], [1], [0, 0, 1, 1], [], []>} : vector<5x8xf32>, vector<8x32xf32>, vector<5x32xf32> -> vector<5x32xf32>
    %234 = arith.addf %215, %233 : vector<5x32xf32>
    %235 = vector.extract_strided_slice %210 {offsets = [0, 8], sizes = [5, 8], strides = [1, 1]} : vector<5x32xf32> to vector<5x8xf32>
    %236 = vector.extract_strided_slice %211 {offsets = [0, 8], sizes = [5, 8], strides = [1, 1]} : vector<5x32xf32> to vector<5x8xf32>
    %237 = vector.extract_strided_slice %212 {offsets = [0, 8], sizes = [5, 8], strides = [1, 1]} : vector<5x32xf32> to vector<5x8xf32>
    %238 = tpu.transpose %236, [1, 0] : vector<5x8xf32> -> vector<8x5xf32>
    %cst_113 = arith.constant dense<0.000000e+00> : vector<5x5xf32>
    %239 = tpu.matmul %235, %238, %cst_113 {dimension_numbers = #tpu.dot_dimension_numbers<[1], [0], [0], [1], [0, 0, 1, 1], [], []>} : vector<5x8xf32>, vector<8x5xf32>, vector<5x5xf32> -> vector<5x5xf32>
    %cst_114 = arith.constant dense<0xFF800000> : vector<5xf32>
    %240 = vector.multi_reduction <maximumf>, %239, %cst_114 [1] : vector<5x5xf32> to vector<5xf32>
    %241 = vector.shape_cast %240 : vector<5xf32> to vector<5x1xf32>
    %242 = vector.broadcast %241 : vector<5x1xf32> to vector<5x5xf32>
    %243 = arith.subf %239, %242 : vector<5x5xf32>
    %244 = math.exp %243 : vector<5x5xf32>
    %cst_115 = arith.constant dense<0.000000e+00> : vector<5xf32>
    %245 = vector.multi_reduction <add>, %244, %cst_115 [1] : vector<5x5xf32> to vector<5xf32>
    %246 = vector.shape_cast %245 : vector<5xf32> to vector<5x1xf32>
    %247 = tpu.reciprocal %246 {approx = true} : vector<5x1xf32> -> vector<5x1xf32>
    %248 = vector.broadcast %247 : vector<5x1xf32> to vector<5x5xf32>
    %249 = arith.mulf %244, %248 : vector<5x5xf32>
    %cst_116 = arith.constant dense<0.000000e+00> : vector<5x8xf32>
    %250 = tpu.matmul %249, %237, %cst_116 {dimension_numbers = #tpu.dot_dimension_numbers<[1], [0], [0], [1], [0, 0, 1, 1], [], []>} : vector<5x5xf32>, vector<5x8xf32>, vector<5x8xf32> -> vector<5x8xf32>
    %251 = vector.extract_strided_slice %214 {offsets = [8, 0], sizes = [8, 32], strides = [1, 1]} : vector<32x32xf32> to vector<8x32xf32>
    %cst_117 = arith.constant dense<0.000000e+00> : vector<5x32xf32>
    %252 = tpu.matmul %250, %251, %cst_117 {dimension_numbers = #tpu.dot_dimension_numbers<[1], [0], [0], [1], [0, 0, 1, 1], [], []>} : vector<5x8xf32>, vector<8x32xf32>, vector<5x32xf32> -> vector<5x32xf32>
    %253 = arith.addf %234, %252 : vector<5x32xf32>
    %254 = vector.extract_strided_slice %210 {offsets = [0, 16], sizes = [5, 8], strides = [1, 1]} : vector<5x32xf32> to vector<5x8xf32>
    %255 = vector.extract_strided_slice %211 {offsets = [0, 16], sizes = [5, 8], strides = [1, 1]} : vector<5x32xf32> to vector<5x8xf32>
    %256 = vector.extract_strided_slice %212 {offsets = [0, 16], sizes = [5, 8], strides = [1, 1]} : vector<5x32xf32> to vector<5x8xf32>
    %257 = tpu.transpose %255, [1, 0] : vector<5x8xf32> -> vector<8x5xf32>
    %cst_118 = arith.constant dense<0.000000e+00> : vector<5x5xf32>
    %258 = tpu.matmul %254, %257, %cst_118 {dimension_numbers = #tpu.dot_dimension_numbers<[1], [0], [0], [1], [0, 0, 1, 1], [], []>} : vector<5x8xf32>, vector<8x5xf32>, vector<5x5xf32> -> vector<5x5xf32>
    %cst_119 = arith.constant dense<0xFF800000> : vector<5xf32>
    %259 = vector.multi_reduction <maximumf>, %258, %cst_119 [1] : vector<5x5xf32> to vector<5xf32>
    %260 = vector.shape_cast %259 : vector<5xf32> to vector<5x1xf32>
    %261 = vector.broadcast %260 : vector<5x1xf32> to vector<5x5xf32>
    %262 = arith.subf %258, %261 : vector<5x5xf32>
    %263 = math.exp %262 : vector<5x5xf32>
    %cst_120 = arith.constant dense<0.000000e+00> : vector<5xf32>
    %264 = vector.multi_reduction <add>, %263, %cst_120 [1] : vector<5x5xf32> to vector<5xf32>
    %265 = vector.shape_cast %264 : vector<5xf32> to vector<5x1xf32>
    %266 = tpu.reciprocal %265 {approx = true} : vector<5x1xf32> -> vector<5x1xf32>
    %267 = vector.broadcast %266 : vector<5x1xf32> to vector<5x5xf32>
    %268 = arith.mulf %263, %267 : vector<5x5xf32>
    %cst_121 = arith.constant dense<0.000000e+00> : vector<5x8xf32>
    %269 = tpu.matmul %268, %256, %cst_121 {dimension_numbers = #tpu.dot_dimension_numbers<[1], [0], [0], [1], [0, 0, 1, 1], [], []>} : vector<5x5xf32>, vector<5x8xf32>, vector<5x8xf32> -> vector<5x8xf32>
    %270 = vector.extract_strided_slice %214 {offsets = [16, 0], sizes = [8, 32], strides = [1, 1]} : vector<32x32xf32> to vector<8x32xf32>
    %cst_122 = arith.constant dense<0.000000e+00> : vector<5x32xf32>
    %271 = tpu.matmul %269, %270, %cst_122 {dimension_numbers = #tpu.dot_dimension_numbers<[1], [0], [0], [1], [0, 0, 1, 1], [], []>} : vector<5x8xf32>, vector<8x32xf32>, vector<5x32xf32> -> vector<5x32xf32>
    %272 = arith.addf %253, %271 : vector<5x32xf32>
    %273 = vector.extract_strided_slice %210 {offsets = [0, 24], sizes = [5, 8], strides = [1, 1]} : vector<5x32xf32> to vector<5x8xf32>
    %274 = vector.extract_strided_slice %211 {offsets = [0, 24], sizes = [5, 8], strides = [1, 1]} : vector<5x32xf32> to vector<5x8xf32>
    %275 = vector.extract_strided_slice %212 {offsets = [0, 24], sizes = [5, 8], strides = [1, 1]} : vector<5x32xf32> to vector<5x8xf32>
    %276 = tpu.transpose %274, [1, 0] : vector<5x8xf32> -> vector<8x5xf32>
    %cst_123 = arith.constant dense<0.000000e+00> : vector<5x5xf32>
    %277 = tpu.matmul %273, %276, %cst_123 {dimension_numbers = #tpu.dot_dimension_numbers<[1], [0], [0], [1], [0, 0, 1, 1], [], []>} : vector<5x8xf32>, vector<8x5xf32>, vector<5x5xf32> -> vector<5x5xf32>
    %cst_124 = arith.constant dense<0xFF800000> : vector<5xf32>
    %278 = vector.multi_reduction <maximumf>, %277, %cst_124 [1] : vector<5x5xf32> to vector<5xf32>
    %279 = vector.shape_cast %278 : vector<5xf32> to vector<5x1xf32>
    %280 = vector.broadcast %279 : vector<5x1xf32> to vector<5x5xf32>
    %281 = arith.subf %277, %280 : vector<5x5xf32>
    %282 = math.exp %281 : vector<5x5xf32>
    %cst_125 = arith.constant dense<0.000000e+00> : vector<5xf32>
    %283 = vector.multi_reduction <add>, %282, %cst_125 [1] : vector<5x5xf32> to vector<5xf32>
    %284 = vector.shape_cast %283 : vector<5xf32> to vector<5x1xf32>
    %285 = tpu.reciprocal %284 {approx = true} : vector<5x1xf32> -> vector<5x1xf32>
    %286 = vector.broadcast %285 : vector<5x1xf32> to vector<5x5xf32>
    %287 = arith.mulf %282, %286 : vector<5x5xf32>
    %cst_126 = arith.constant dense<0.000000e+00> : vector<5x8xf32>
    %288 = tpu.matmul %287, %275, %cst_126 {dimension_numbers = #tpu.dot_dimension_numbers<[1], [0], [0], [1], [0, 0, 1, 1], [], []>} : vector<5x5xf32>, vector<5x8xf32>, vector<5x8xf32> -> vector<5x8xf32>
    %289 = vector.extract_strided_slice %214 {offsets = [24, 0], sizes = [8, 32], strides = [1, 1]} : vector<32x32xf32> to vector<8x32xf32>
    %cst_127 = arith.constant dense<0.000000e+00> : vector<5x32xf32>
    %290 = tpu.matmul %288, %289, %cst_127 {dimension_numbers = #tpu.dot_dimension_numbers<[1], [0], [0], [1], [0, 0, 1, 1], [], []>} : vector<5x8xf32>, vector<8x32xf32>, vector<5x32xf32> -> vector<5x32xf32>
    %291 = arith.addf %272, %290 : vector<5x32xf32>
    %292 = arith.addf %177, %291 : vector<5x32xf32>
    %c1_128 = arith.constant 1 : index
    %c0_129 = arith.constant 0 : index
    %c0_130 = arith.constant 0 : index
    %293 = vector.load %arg10[%c1_128, %c0_129, %c0_130] : memref<2x1x32xf32, #tpu.memory_space<vmem>>, vector<1x1x32xf32>
    %294 = vector.shape_cast %293 : vector<1x1x32xf32> to vector<1x32xf32>
    %295 = vector.broadcast %294 : vector<1x32xf32> to vector<5x32xf32>
    %296 = arith.addf %292, %295 : vector<5x32xf32>
    %c1_131 = arith.constant 1 : index
    %c0_132 = arith.constant 0 : index
    %c0_133 = arith.constant 0 : index
    %297 = vector.load %arg11[%c1_131, %c0_132, %c0_133] : memref<2x1x32xf32, #tpu.memory_space<vmem>>, vector<1x1x32xf32>
    %298 = vector.shape_cast %297 : vector<1x1x32xf32> to vector<1x32xf32>
    %c1_134 = arith.constant 1 : index
    %c0_135 = arith.constant 0 : index
    %c0_136 = arith.constant 0 : index
    %299 = vector.load %arg12[%c1_134, %c0_135, %c0_136] : memref<2x1x32xf32, #tpu.memory_space<vmem>>, vector<1x1x32xf32>
    %300 = vector.shape_cast %299 : vector<1x1x32xf32> to vector<1x32xf32>
    %cst_137 = arith.constant dense<0.000000e+00> : vector<5xf32>
    %301 = vector.multi_reduction <add>, %296, %cst_137 [1] : vector<5x32xf32> to vector<5xf32>
    %302 = vector.shape_cast %301 : vector<5xf32> to vector<5x1xf32>
    %cst_138 = arith.constant 3.200000e+01 : f32
    %303 = vector.broadcast %cst_138 : f32 to vector<5x1xf32>
    %304 = arith.divf %302, %303 : vector<5x1xf32>
    %305 = vector.broadcast %304 : vector<5x1xf32> to vector<5x32xf32>
    %306 = arith.subf %296, %305 : vector<5x32xf32>
    %307 = arith.mulf %306, %306 : vector<5x32xf32>
    %cst_139 = arith.constant dense<0.000000e+00> : vector<5xf32>
    %308 = vector.multi_reduction <add>, %307, %cst_139 [1] : vector<5x32xf32> to vector<5xf32>
    %309 = vector.shape_cast %308 : vector<5xf32> to vector<5x1xf32>
    %cst_140 = arith.constant 3.200000e+01 : f32
    %310 = vector.broadcast %cst_140 : f32 to vector<5x1xf32>
    %311 = arith.divf %309, %310 : vector<5x1xf32>
    %312 = vector.broadcast %304 : vector<5x1xf32> to vector<5x32xf32>
    %313 = arith.subf %296, %312 : vector<5x32xf32>
    %cst_141 = arith.constant 9.99999997E-7 : f32
    %314 = vector.broadcast %cst_141 : f32 to vector<5x1xf32>
    %315 = arith.addf %311, %314 : vector<5x1xf32>
    %316 = math.rsqrt %315 : vector<5x1xf32>
    %317 = vector.broadcast %316 : vector<5x1xf32> to vector<5x32xf32>
    %318 = arith.mulf %313, %317 : vector<5x32xf32>
    %319 = vector.broadcast %298 : vector<1x32xf32> to vector<5x32xf32>
    %320 = arith.mulf %318, %319 : vector<5x32xf32>
    %321 = vector.broadcast %300 : vector<1x32xf32> to vector<5x32xf32>
    %322 = arith.addf %320, %321 : vector<5x32xf32>
    %c1_142 = arith.constant 1 : index
    %c0_143 = arith.constant 0 : index
    %c0_144 = arith.constant 0 : index
    %323 = vector.load %arg13[%c1_142, %c0_143, %c0_144] : memref<2x32x64xf32, #tpu.memory_space<vmem>>, vector<1x32x64xf32>
    %324 = vector.shape_cast %323 : vector<1x32x64xf32> to vector<32x64xf32>
    %cst_145 = arith.constant dense<0.000000e+00> : vector<5x64xf32>
    %325 = tpu.matmul %322, %324, %cst_145 {dimension_numbers = #tpu.dot_dimension_numbers<[1], [0], [0], [1], [0, 0, 1, 1], [], []>} : vector<5x32xf32>, vector<32x64xf32>, vector<5x64xf32> -> vector<5x64xf32>
    %c1_146 = arith.constant 1 : index
    %c0_147 = arith.constant 0 : index
    %c0_148 = arith.constant 0 : index
    %326 = vector.load %arg14[%c1_146, %c0_147, %c0_148] : memref<2x1x64xf32, #tpu.memory_space<vmem>>, vector<1x1x64xf32>
    %327 = vector.shape_cast %326 : vector<1x1x64xf32> to vector<1x64xf32>
    %328 = vector.broadcast %327 : vector<1x64xf32> to vector<5x64xf32>
    %329 = arith.addf %325, %328 : vector<5x64xf32>
    %cst_149 = arith.constant 5.000000e-01 : f32
    %330 = vector.broadcast %cst_149 : f32 to vector<5x64xf32>
    %331 = arith.mulf %330, %329 : vector<5x64xf32>
    %cst_150 = arith.constant 0.707106769 : f32
    %332 = vector.broadcast %cst_150 : f32 to vector<5x64xf32>
    %333 = arith.mulf %329, %332 : vector<5x64xf32>
    %334 = math.erf %333 : vector<5x64xf32>
    %cst_151 = arith.constant 1.000000e+00 : f32
    %335 = vector.broadcast %cst_151 : f32 to vector<5x64xf32>
    %336 = arith.addf %335, %334 : vector<5x64xf32>
    %337 = arith.mulf %331, %336 : vector<5x64xf32>
    %c1_152 = arith.constant 1 : index
    %c0_153 = arith.constant 0 : index
    %c0_154 = arith.constant 0 : index
    %338 = vector.load %arg15[%c1_152, %c0_153, %c0_154] : memref<2x64x32xf32, #tpu.memory_space<vmem>>, vector<1x64x32xf32>
    %339 = vector.shape_cast %338 : vector<1x64x32xf32> to vector<64x32xf32>
    %cst_155 = arith.constant dense<0.000000e+00> : vector<5x32xf32>
    %340 = tpu.matmul %337, %339, %cst_155 {dimension_numbers = #tpu.dot_dimension_numbers<[1], [0], [0], [1], [0, 0, 1, 1], [], []>} : vector<5x64xf32>, vector<64x32xf32>, vector<5x32xf32> -> vector<5x32xf32>
    %c1_156 = arith.constant 1 : index
    %c0_157 = arith.constant 0 : index
    %c0_158 = arith.constant 0 : index
    %341 = vector.load %arg16[%c1_156, %c0_157, %c0_158] : memref<2x1x32xf32, #tpu.memory_space<vmem>>, vector<1x1x32xf32>
    %342 = vector.shape_cast %341 : vector<1x1x32xf32> to vector<1x32xf32>
    %343 = vector.broadcast %342 : vector<1x32xf32> to vector<5x32xf32>
    %344 = arith.addf %340, %343 : vector<5x32xf32>
    %345 = arith.addf %344, %296 : vector<5x32xf32>
    %c0_159 = arith.constant 0 : index
    %c0_160 = arith.constant 0 : index
    %346 = vector.load %arg17[%c0_159, %c0_160] : memref<1x32xf32, #tpu.memory_space<vmem>>, vector<1x32xf32>
    %c0_161 = arith.constant 0 : index
    %c0_162 = arith.constant 0 : index
    %347 = vector.load %arg18[%c0_161, %c0_162] : memref<1x32xf32, #tpu.memory_space<vmem>>, vector<1x32xf32>
    %cst_163 = arith.constant dense<0.000000e+00> : vector<5xf32>
    %348 = vector.multi_reduction <add>, %345, %cst_163 [1] : vector<5x32xf32> to vector<5xf32>
    %349 = vector.shape_cast %348 : vector<5xf32> to vector<5x1xf32>
    %cst_164 = arith.constant 3.200000e+01 : f32
    %350 = vector.broadcast %cst_164 : f32 to vector<5x1xf32>
    %351 = arith.divf %349, %350 : vector<5x1xf32>
    %352 = vector.broadcast %351 : vector<5x1xf32> to vector<5x32xf32>
    %353 = arith.subf %345, %352 : vector<5x32xf32>
    %354 = arith.mulf %353, %353 : vector<5x32xf32>
    %cst_165 = arith.constant dense<0.000000e+00> : vector<5xf32>
    %355 = vector.multi_reduction <add>, %354, %cst_165 [1] : vector<5x32xf32> to vector<5xf32>
    %356 = vector.shape_cast %355 : vector<5xf32> to vector<5x1xf32>
    %cst_166 = arith.constant 3.200000e+01 : f32
    %357 = vector.broadcast %cst_166 : f32 to vector<5x1xf32>
    %358 = arith.divf %356, %357 : vector<5x1xf32>
    %359 = vector.broadcast %351 : vector<5x1xf32> to vector<5x32xf32>
    %360 = arith.subf %345, %359 : vector<5x32xf32>
    %cst_167 = arith.constant 9.99999997E-7 : f32
    %361 = vector.broadcast %cst_167 : f32 to vector<5x1xf32>
    %362 = arith.addf %358, %361 : vector<5x1xf32>
    %363 = math.rsqrt %362 : vector<5x1xf32>
    %364 = vector.broadcast %363 : vector<5x1xf32> to vector<5x32xf32>
    %365 = arith.mulf %360, %364 : vector<5x32xf32>
    %366 = vector.broadcast %346 : vector<1x32xf32> to vector<5x32xf32>
    %367 = arith.mulf %365, %366 : vector<5x32xf32>
    %368 = vector.broadcast %347 : vector<1x32xf32> to vector<5x32xf32>
    %369 = arith.addf %367, %368 : vector<5x32xf32>
    %c0_168 = arith.constant 0 : index
    %c0_169 = arith.constant 0 : index
    %c0_170 = arith.constant 0 : index
    %370 = vector.load %arg19[%c0_168, %c0_169, %c0_170] : memref<1x5x32xf32, #tpu.memory_space<vmem>>, vector<1x5x32xf32>
    %371 = vector.shape_cast %370 : vector<1x5x32xf32> to vector<5x32xf32>
    %372 = vector.shape_cast %369 : vector<5x32xf32> to vector<1x5x32xf32>
    tpu.vector_store %arg19[%c0_168, %c0_169, %c0_170], %372 {strides = array<i32>} : memref<1x5x32xf32, #tpu.memory_space<vmem>>, vector<1x5x32xf32>,
    return
  }
  func.func @transform_0(%arg0: i32) -> (i32, i32, i32) {
    %c0_i32 = arith.constant 0 : i32
    %c0_i32_0 = arith.constant 0 : i32
    %c0_i32_1 = arith.constant 0 : i32
    return %arg0, %c0_i32, %c0_i32_0 : i32, i32, i32
  }
  func.func @transform_1(%arg0: i32) -> (i32, i32) {
    %c0_i32 = arith.constant 0 : i32
    %c0_i32_0 = arith.constant 0 : i32
    %c0_i32_1 = arith.constant 0 : i32
    return %c0_i32, %c0_i32_0 : i32, i32
  }
  func.func @transform_2(%arg0: i32) -> (i32, i32) {
    %c0_i32 = arith.constant 0 : i32
    %c0_i32_0 = arith.constant 0 : i32
    %c0_i32_1 = arith.constant 0 : i32
    return %c0_i32, %c0_i32_0 : i32, i32
  }
  func.func @transform_3(%arg0: i32) -> (i32, i32) {
    %c0_i32 = arith.constant 0 : i32
    %c0_i32_0 = arith.constant 0 : i32
    %c0_i32_1 = arith.constant 0 : i32
    return %c0_i32, %c0_i32_0 : i32, i32
  }
  func.func @transform_4(%arg0: i32) -> (i32, i32, i32) {
    %c0_i32 = arith.constant 0 : i32
    %c0_i32_0 = arith.constant 0 : i32
    %c0_i32_1 = arith.constant 0 : i32
    %c0_i32_2 = arith.constant 0 : i32
    return %c0_i32, %c0_i32_0, %c0_i32_1 : i32, i32, i32
  }
  func.func @transform_5(%arg0: i32) -> (i32, i32, i32) {
    %c0_i32 = arith.constant 0 : i32
    %c0_i32_0 = arith.constant 0 : i32
    %c0_i32_1 = arith.constant 0 : i32
    %c0_i32_2 = arith.constant 0 : i32
    return %c0_i32, %c0_i32_0, %c0_i32_1 : i32, i32, i32
  }
  func.func @transform_6(%arg0: i32) -> (i32, i32, i32) {
    %c0_i32 = arith.constant 0 : i32
    %c0_i32_0 = arith.constant 0 : i32
    %c0_i32_1 = arith.constant 0 : i32
    %c0_i32_2 = arith.constant 0 : i32
    return %c0_i32, %c0_i32_0, %c0_i32_1 : i32, i32, i32
  }
  func.func @transform_7(%arg0: i32) -> (i32, i32, i32) {
    %c0_i32 = arith.constant 0 : i32
    %c0_i32_0 = arith.constant 0 : i32
    %c0_i32_1 = arith.constant 0 : i32
    %c0_i32_2 = arith.constant 0 : i32
    return %c0_i32, %c0_i32_0, %c0_i32_1 : i32, i32, i32
  }
  func.func @transform_8(%arg0: i32) -> (i32, i32, i32) {
    %c0_i32 = arith.constant 0 : i32
    %c0_i32_0 = arith.constant 0 : i32
    %c0_i32_1 = arith.constant 0 : i32
    %c0_i32_2 = arith.constant 0 : i32
    return %c0_i32, %c0_i32_0, %c0_i32_1 : i32, i32, i32
  }
  func.func @transform_9(%arg0: i32) -> (i32, i32, i32) {
    %c0_i32 = arith.constant 0 : i32
    %c0_i32_0 = arith.constant 0 : i32
    %c0_i32_1 = arith.constant 0 : i32
    %c0_i32_2 = arith.constant 0 : i32
    return %c0_i32, %c0_i32_0, %c0_i32_1 : i32, i32, i32
  }
  func.func @transform_10(%arg0: i32) -> (i32, i32, i32) {
    %c0_i32 = arith.constant 0 : i32
    %c0_i32_0 = arith.constant 0 : i32
    %c0_i32_1 = arith.constant 0 : i32
    %c0_i32_2 = arith.constant 0 : i32
    return %c0_i32, %c0_i32_0, %c0_i32_1 : i32, i32, i32
  }
  func.func @transform_11(%arg0: i32) -> (i32, i32, i32) {
    %c0_i32 = arith.constant 0 : i32
    %c0_i32_0 = arith.constant 0 : i32
    %c0_i32_1 = arith.constant 0 : i32
    %c0_i32_2 = arith.constant 0 : i32
    return %c0_i32, %c0_i32_0, %c0_i32_1 : i32, i32, i32
  }
  func.func @transform_12(%arg0: i32) -> (i32, i32, i32) {
    %c0_i32 = arith.constant 0 : i32
    %c0_i32_0 = arith.constant 0 : i32
    %c0_i32_1 = arith.constant 0 : i32
    %c0_i32_2 = arith.constant 0 : i32
    return %c0_i32, %c0_i32_0, %c0_i32_1 : i32, i32, i32
  }
  func.func @transform_13(%arg0: i32) -> (i32, i32, i32) {
    %c0_i32 = arith.constant 0 : i32
    %c0_i32_0 = arith.constant 0 : i32
    %c0_i32_1 = arith.constant 0 : i32
    %c0_i32_2 = arith.constant 0 : i32
    return %c0_i32, %c0_i32_0, %c0_i32_1 : i32, i32, i32
  }
  func.func @transform_14(%arg0: i32) -> (i32, i32, i32) {
    %c0_i32 = arith.constant 0 : i32
    %c0_i32_0 = arith.constant 0 : i32
    %c0_i32_1 = arith.constant 0 : i32
    %c0_i32_2 = arith.constant 0 : i32
    return %c0_i32, %c0_i32_0, %c0_i32_1 : i32, i32, i32
  }
  func.func @transform_15(%arg0: i32) -> (i32, i32, i32) {
    %c0_i32 = arith.constant 0 : i32
    %c0_i32_0 = arith.constant 0 : i32
    %c0_i32_1 = arith.constant 0 : i32
    %c0_i32_2 = arith.constant 0 : i32
    return %c0_i32, %c0_i32_0, %c0_i32_1 : i32, i32, i32
  }
  func.func @transform_16(%arg0: i32) -> (i32, i32) {
    %c0_i32 = arith.constant 0 : i32
    %c0_i32_0 = arith.constant 0 : i32
    %c0_i32_1 = arith.constant 0 : i32
    return %c0_i32, %c0_i32_0 : i32, i32
  }
  func.func @transform_17(%arg0: i32) -> (i32, i32) {
    %c0_i32 = arith.constant 0 : i32
    %c0_i32_0 = arith.constant 0 : i32
    %c0_i32_1 = arith.constant 0 : i32
    return %c0_i32, %c0_i32_0 : i32, i32
  }
  func.func @transform_18(%arg0: i32) -> (i32, i32, i32) {
    %c0_i32 = arith.constant 0 : i32
    %c0_i32_0 = arith.constant 0 : i32
    %c0_i32_1 = arith.constant 0 : i32
    return %arg0, %c0_i32, %c0_i32_0 : i32, i32, i32
  }
}

</mosaic_0001>

<llo_original>
// kernel: transformer_forward.1
$region0: #{transformer_forward.1}
  #allocation0 [shape = 'u32[]', space=smem, size = 0x4, offset = 0x4, fixed_abs, tag = 'smem constant byte address 0x4 - core index']
  #allocation1 [shape = 'u32[144,128]{1,0:T(1,128)}', space=vmem, size = 0x12000, scoped, tag = 'internal scratch']
  #allocation2 [shape = 'f32[5,32]{1,0:T(8,128)}', space=vmem, size = 0x1000, scoped, tag = 'scratch operand']
  %s0 = inlined_call_operand.vmem [shape: f32[2,4,192], index: 0, kind: input, shape index: {}]
  %s1 = inlined_call_operand.vmem [shape: f32[192,32], index: 1, kind: input, shape index: {}]
  %s2 = inlined_call_operand.vmem [shape: f32[4,32], index: 2, kind: input, shape index: {}]
  %s3 = inlined_call_operand.vmem [shape: f32[1,32], index: 3, kind: input, shape index: {}]
  %s4 = inlined_call_operand.vmem [shape: f32[2,1,32], index: 4, kind: input, shape index: {}]
  %s5 = inlined_call_operand.vmem [shape: f32[2,1,32], index: 5, kind: input, shape index: {}]
  %s6 = inlined_call_operand.vmem [shape: f32[2,32,96], index: 6, kind: input, shape index: {}]
  %s7 = inlined_call_operand.vmem [shape: f32[2,5,96], index: 7, kind: input, shape index: {}]
  %s8 = inlined_call_operand.vmem [shape: f32[2,32,32], index: 8, kind: input, shape index: {}]
  %s9 = inlined_call_operand.vmem [shape: f32[2,1,32], index: 9, kind: input, shape index: {}]
  %s10 = inlined_call_operand.vmem [shape: f32[2,1,32], index: 10, kind: input, shape index: {}]
  %s11 = inlined_call_operand.vmem [shape: f32[2,1,32], index: 11, kind: input, shape index: {}]
  %s12 = inlined_call_operand.vmem [shape: f32[2,32,64], index: 12, kind: input, shape index: {}]
  %s13 = inlined_call_operand.vmem [shape: f32[2,1,64], index: 13, kind: input, shape index: {}]
  %s14 = inlined_call_operand.vmem [shape: f32[2,64,32], index: 14, kind: input, shape index: {}]
  %s15 = inlined_call_operand.vmem [shape: f32[2,1,32], index: 15, kind: input, shape index: {}]
  %s16 = inlined_call_operand.vmem [shape: f32[1,32], index: 16, kind: input, shape index: {}]
  %s17 = inlined_call_operand.vmem [shape: f32[1,32], index: 17, kind: input, shape index: {}]
  %s18 = inlined_call_operand.vmem [shape: f32[2,5,32], index: 18, kind: output, shape index: {}]
  %s19 = sld [smem:[#allocation0]]
  $region105: #{transformer_forward.1} parent=0
    _
  %s21 = ssub.s32 1, %s19
  %s22 = scalar_select 0, %s21, %s19
  loop: start=0, step=1, limit=4
  $region2: #{transformer_forward.1} parent=0 // loop_pre_header
    _
  $region3: #{transformer_forward.1} parent=0 // loop_header
    %s24 = sphi 0, %s28
    %p25 = scmp.ge.s32.totalorder %s24, 4
    %s34 = sphi 0, %s36
    %s37 = sphi 0, %s34
    %s38 = sphi 0, %s37
    %s54 = sphi 0, %s38
    %s58 = sphi 0, %s58
    %s60 = sphi 0, %s58
    %s61 = sphi 0, %s60
    %s75 = sphi 0, %s61
    %s79 = sphi 0, %s79
    %s81 = sphi 0, %s79
    %s82 = sphi 0, %s81
    %s96 = sphi 0, %s82
    %s100 = sphi 0, %s100
    %s102 = sphi 0, %s100
    %s103 = sphi 0, %s102
    %s117 = sphi 0, %s103
    %s121 = sphi 0, %s121
    %s123 = sphi 0, %s121
    %s124 = sphi 0, %s123
    %s138 = sphi 0, %s124
    %s142 = sphi 0, %s142
    %s144 = sphi 0, %s142
    %s145 = sphi 0, %s144
    %s159 = sphi 0, %s145
    %s163 = sphi 0, %s163
    %s165 = sphi 0, %s163
    %s166 = sphi 0, %s165
    %s180 = sphi 0, %s166
    %s184 = sphi 0, %s184
    %s186 = sphi 0, %s184
    %s187 = sphi 0, %s186
    %s201 = sphi 0, %s187
    %s205 = sphi 0, %s205
    %s207 = sphi 0, %s205
    %s208 = sphi 0, %s207
    %s222 = sphi 0, %s208
    %s226 = sphi 0, %s226
    %s228 = sphi 0, %s226
    %s229 = sphi 0, %s228
    %s243 = sphi 0, %s229
    %s247 = sphi 0, %s247
    %s249 = sphi 0, %s247
    %s250 = sphi 0, %s249
    %s264 = sphi 0, %s250
    %s268 = sphi 0, %s268
    %s270 = sphi 0, %s268
    %s271 = sphi 0, %s270
    %s285 = sphi 0, %s271
    %s289 = sphi 0, %s289
    %s291 = sphi 0, %s289
    %s292 = sphi 0, %s291
    %s306 = sphi 0, %s292
    %s310 = sphi 0, %s310
    %s312 = sphi 0, %s310
    %s313 = sphi 0, %s312
    %s327 = sphi 0, %s313
    %s331 = sphi 0, %s331
    %s333 = sphi 0, %s331
    %s334 = sphi 0, %s333
    %s348 = sphi 0, %s334
    %s352 = sphi 0, %s352
    %s354 = sphi 0, %s352
    %s355 = sphi 0, %s354
    %s369 = sphi 0, %s355
    %s373 = sphi 0, %s373
    %s375 = sphi 0, %s373
    %s376 = sphi 0, %s375
    %s390 = sphi 0, %s376
    %s394 = sphi 0, %s394
    %s396 = sphi 0, %s394
    %s397 = sphi 0, %s396
    %s411 = sphi 0, %s397
    %s417 = sphi 0, %s419
    %s420 = sphi 0, %s417
    %s421 = sphi 0, %s420
    %s437 = sphi 0, %s421
  $region4: #{transformer_forward.1} parent=0 // loop_header_branch
    %27 = sbr.rel (%p25) target = $region8
  $region5: #{transformer_forward.1} parent=0 // loop_body
    %s29 = ssub.s32 %s24, 1
    %s30 = ssub.s32 %s24, 2
    %s31 = sadd.s32 %s24, 1
    %s32 = ssub.s32 %s24, %s31
    %p33 = scmp.eq.s32.totalorder %s32, 0
    %s35 = sadd.s32 %s34, 1
    %s36 = scalar_select %p33, %s34, %s35
    %p39 = pneg %p33
    %p40 = scmp.eq.s32.totalorder %s24, 1
    %p41 = por %p39, %p40
    %p42 = scmp.ne.s32.totalorder %s34, %s37
    %p43 = scmp.eq.s32.totalorder %s24, 0
    %p44 = por %p42, %p43
    %p45 = scmp.ne.s32.totalorder %s34, %s37
    %p46 = scmp.eq.s32.totalorder %s29, 1
    %p47 = por %p45, %p46
    %p48 = scmp.ne.s32.totalorder %s37, %s38
    %p49 = scmp.eq.s32.totalorder %s29, 0
    %p50 = por %p48, %p49
    %p51 = scmp.ne.s32.totalorder %s37, %s38
    %p52 = scmp.eq.s32.totalorder %s30, 1
    %p53 = por %p51, %p52
    %p55 = scmp.ne.s32.totalorder %s38, %s54
    %p56 = scmp.eq.s32.totalorder %s30, 0
    %p57 = por %p55, %p56
    %s59 = sadd.s32 %s58, 1
    %p62 = scmp.eq.s32.totalorder %s24, 1
    %p63 = scmp.ne.s32.totalorder %s58, %s60
    %p64 = scmp.eq.s32.totalorder %s24, 0
    %p65 = por %p63, %p64
    %p66 = scmp.ne.s32.totalorder %s58, %s60
    %p67 = scmp.eq.s32.totalorder %s29, 1
    %p68 = por %p66, %p67
    %p69 = scmp.ne.s32.totalorder %s60, %s61
    %p70 = scmp.eq.s32.totalorder %s29, 0
    %p71 = por %p69, %p70
    %p72 = scmp.ne.s32.totalorder %s60, %s61
    %p73 = scmp.eq.s32.totalorder %s30, 1
    %p74 = por %p72, %p73
    %p76 = scmp.ne.s32.totalorder %s61, %s75
    %p77 = scmp.eq.s32.totalorder %s30, 0
    %p78 = por %p76, %p77
    %s80 = sadd.s32 %s79, 1
    %p83 = scmp.eq.s32.totalorder %s24, 1
    %p84 = scmp.ne.s32.totalorder %s79, %s81
    %p85 = scmp.eq.s32.totalorder %s24, 0
    %p86 = por %p84, %p85
    %p87 = scmp.ne.s32.totalorder %s79, %s81
    %p88 = scmp.eq.s32.totalorder %s29, 1
    %p89 = por %p87, %p88
    %p90 = scmp.ne.s32.totalorder %s81, %s82
    %p91 = scmp.eq.s32.totalorder %s29, 0
    %p92 = por %p90, %p91
    %p93 = scmp.ne.s32.totalorder %s81, %s82
    %p94 = scmp.eq.s32.totalorder %s30, 1
    %p95 = por %p93, %p94
    %p97 = scmp.ne.s32.totalorder %s82, %s96
    %p98 = scmp.eq.s32.totalorder %s30, 0
    %p99 = por %p97, %p98
    %s101 = sadd.s32 %s100, 1
    %p104 = scmp.eq.s32.totalorder %s24, 1
    %p105 = scmp.ne.s32.totalorder %s100, %s102
    %p106 = scmp.eq.s32.totalorder %s24, 0
    %p107 = por %p105, %p106
    %p108 = scmp.ne.s32.totalorder %s100, %s102
    %p109 = scmp.eq.s32.totalorder %s29, 1
    %p110 = por %p108, %p109
    %p111 = scmp.ne.s32.totalorder %s102, %s103
    %p112 = scmp.eq.s32.totalorder %s29, 0
    %p113 = por %p111, %p112
    %p114 = scmp.ne.s32.totalorder %s102, %s103
    %p115 = scmp.eq.s32.totalorder %s30, 1
    %p116 = por %p114, %p115
    %p118 = scmp.ne.s32.totalorder %s103, %s117
    %p119 = scmp.eq.s32.totalorder %s30, 0
    %p120 = por %p118, %p119
    %s122 = sadd.s32 %s121, 1
    %p125 = scmp.eq.s32.totalorder %s24, 1
    %p126 = scmp.ne.s32.totalorder %s121, %s123
    %p127 = scmp.eq.s32.totalorder %s24, 0
    %p128 = por %p126, %p127
    %p129 = scmp.ne.s32.totalorder %s121, %s123
    %p130 = scmp.eq.s32.totalorder %s29, 1
    %p131 = por %p129, %p130
    %p132 = scmp.ne.s32.totalorder %s123, %s124
    %p133 = scmp.eq.s32.totalorder %s29, 0
    %p134 = por %p132, %p133
    %p135 = scmp.ne.s32.totalorder %s123, %s124
    %p136 = scmp.eq.s32.totalorder %s30, 1
    %p137 = por %p135, %p136
    %p139 = scmp.ne.s32.totalorder %s124, %s138
    %p140 = scmp.eq.s32.totalorder %s30, 0
    %p141 = por %p139, %p140
    %s143 = sadd.s32 %s142, 1
    %p146 = scmp.eq.s32.totalorder %s24, 1
    %p147 = scmp.ne.s32.totalorder %s142, %s144
    %p148 = scmp.eq.s32.totalorder %s24, 0
    %p149 = por %p147, %p148
    %p150 = scmp.ne.s32.totalorder %s142, %s144
    %p151 = scmp.eq.s32.totalorder %s29, 1
    %p152 = por %p150, %p151
    %p153 = scmp.ne.s32.totalorder %s144, %s145
    %p154 = scmp.eq.s32.totalorder %s29, 0
    %p155 = por %p153, %p154
    %p156 = scmp.ne.s32.totalorder %s144, %s145
    %p157 = scmp.eq.s32.totalorder %s30, 1
    %p158 = por %p156, %p157
    %p160 = scmp.ne.s32.totalorder %s145, %s159
    %p161 = scmp.eq.s32.totalorder %s30, 0
    %p162 = por %p160, %p161
    %s164 = sadd.s32 %s163, 1
    %p167 = scmp.eq.s32.totalorder %s24, 1
    %p168 = scmp.ne.s32.totalorder %s163, %s165
    %p169 = scmp.eq.s32.totalorder %s24, 0
    %p170 = por %p168, %p169
    %p171 = scmp.ne.s32.totalorder %s163, %s165
    %p172 = scmp.eq.s32.totalorder %s29, 1
    %p173 = por %p171, %p172
    %p174 = scmp.ne.s32.totalorder %s165, %s166
    %p175 = scmp.eq.s32.totalorder %s29, 0
    %p176 = por %p174, %p175
    %p177 = scmp.ne.s32.totalorder %s165, %s166
    %p178 = scmp.eq.s32.totalorder %s30, 1
    %p179 = por %p177, %p178
    %p181 = scmp.ne.s32.totalorder %s166, %s180
    %p182 = scmp.eq.s32.totalorder %s30, 0
    %p183 = por %p181, %p182
    %s185 = sadd.s32 %s184, 1
    %p188 = scmp.eq.s32.totalorder %s24, 1
    %p189 = scmp.ne.s32.totalorder %s184, %s186
    %p190 = scmp.eq.s32.totalorder %s24, 0
    %p191 = por %p189, %p190
    %p192 = scmp.ne.s32.totalorder %s184, %s186
    %p193 = scmp.eq.s32.totalorder %s29, 1
    %p194 = por %p192, %p193
    %p195 = scmp.ne.s32.totalorder %s186, %s187
    %p196 = scmp.eq.s32.totalorder %s29, 0
    %p197 = por %p195, %p196
    %p198 = scmp.ne.s32.totalorder %s186, %s187
    %p199 = scmp.eq.s32.totalorder %s30, 1
    %p200 = por %p198, %p199
    %p202 = scmp.ne.s32.totalorder %s187, %s201
    %p203 = scmp.eq.s32.totalorder %s30, 0
    %p204 = por %p202, %p203
    %s206 = sadd.s32 %s205, 1
    %p209 = scmp.eq.s32.totalorder %s24, 1
    %p210 = scmp.ne.s32.totalorder %s205, %s207
    %p211 = scmp.eq.s32.totalorder %s24, 0
    %p212 = por %p210, %p211
    %p213 = scmp.ne.s32.totalorder %s205, %s207
    %p214 = scmp.eq.s32.totalorder %s29, 1
    %p215 = por %p213, %p214
    %p216 = scmp.ne.s32.totalorder %s207, %s208
    %p217 = scmp.eq.s32.totalorder %s29, 0
    %p218 = por %p216, %p217
    %p219 = scmp.ne.s32.totalorder %s207, %s208
    %p220 = scmp.eq.s32.totalorder %s30, 1
    %p221 = por %p219, %p220
    %p223 = scmp.ne.s32.totalorder %s208, %s222
    %p224 = scmp.eq.s32.totalorder %s30, 0
    %p225 = por %p223, %p224
    %s227 = sadd.s32 %s226, 1
    %p230 = scmp.eq.s32.totalorder %s24, 1
    %p231 = scmp.ne.s32.totalorder %s226, %s228
    %p232 = scmp.eq.s32.totalorder %s24, 0
    %p233 = por %p231, %p232
    %p234 = scmp.ne.s32.totalorder %s226, %s228
    %p235 = scmp.eq.s32.totalorder %s29, 1
    %p236 = por %p234, %p235
    %p237 = scmp.ne.s32.totalorder %s228, %s229
    %p238 = scmp.eq.s32.totalorder %s29, 0
    %p239 = por %p237, %p238
    %p240 = scmp.ne.s32.totalorder %s228, %s229
    %p241 = scmp.eq.s32.totalorder %s30, 1
    %p242 = por %p240, %p241
    %p244 = scmp.ne.s32.totalorder %s229, %s243
    %p245 = scmp.eq.s32.totalorder %s30, 0
    %p246 = por %p244, %p245
    %s248 = sadd.s32 %s247, 1
    %p251 = scmp.eq.s32.totalorder %s24, 1
    %p252 = scmp.ne.s32.totalorder %s247, %s249
    %p253 = scmp.eq.s32.totalorder %s24, 0
    %p254 = por %p252, %p253
    %p255 = scmp.ne.s32.totalorder %s247, %s249
    %p256 = scmp.eq.s32.totalorder %s29, 1
    %p257 = por %p255, %p256
    %p258 = scmp.ne.s32.totalorder %s249, %s250
    %p259 = scmp.eq.s32.totalorder %s29, 0
    %p260 = por %p258, %p259
    %p261 = scmp.ne.s32.totalorder %s249, %s250
    %p262 = scmp.eq.s32.totalorder %s30, 1
    %p263 = por %p261, %p262
    %p265 = scmp.ne.s32.totalorder %s250, %s264
    %p266 = scmp.eq.s32.totalorder %s30, 0
    %p267 = por %p265, %p266
    %s269 = sadd.s32 %s268, 1
    %p272 = scmp.eq.s32.totalorder %s24, 1
    %p273 = scmp.ne.s32.totalorder %s268, %s270
    %p274 = scmp.eq.s32.totalorder %s24, 0
    %p275 = por %p273, %p274
    %p276 = scmp.ne.s32.totalorder %s268, %s270
    %p277 = scmp.eq.s32.totalorder %s29, 1
    %p278 = por %p276, %p277
    %p279 = scmp.ne.s32.totalorder %s270, %s271
    %p280 = scmp.eq.s32.totalorder %s29, 0
    %p281 = por %p279, %p280
    %p282 = scmp.ne.s32.totalorder %s270, %s271
    %p283 = scmp.eq.s32.totalorder %s30, 1
    %p284 = por %p282, %p283
    %p286 = scmp.ne.s32.totalorder %s271, %s285
    %p287 = scmp.eq.s32.totalorder %s30, 0
    %p288 = por %p286, %p287
    %s290 = sadd.s32 %s289, 1
    %p293 = scmp.eq.s32.totalorder %s24, 1
    %p294 = scmp.ne.s32.totalorder %s289, %s291
    %p295 = scmp.eq.s32.totalorder %s24, 0
    %p296 = por %p294, %p295
    %p297 = scmp.ne.s32.totalorder %s289, %s291
    %p298 = scmp.eq.s32.totalorder %s29, 1
    %p299 = por %p297, %p298
    %p300 = scmp.ne.s32.totalorder %s291, %s292
    %p301 = scmp.eq.s32.totalorder %s29, 0
    %p302 = por %p300, %p301
    %p303 = scmp.ne.s32.totalorder %s291, %s292
    %p304 = scmp.eq.s32.totalorder %s30, 1
    %p305 = por %p303, %p304
    %p307 = scmp.ne.s32.totalorder %s292, %s306
    %p308 = scmp.eq.s32.totalorder %s30, 0
    %p309 = por %p307, %p308
    %s311 = sadd.s32 %s310, 1
    %p314 = scmp.eq.s32.totalorder %s24, 1
    %p315 = scmp.ne.s32.totalorder %s310, %s312
    %p316 = scmp.eq.s32.totalorder %s24, 0
    %p317 = por %p315, %p316
    %p318 = scmp.ne.s32.totalorder %s310, %s312
    %p319 = scmp.eq.s32.totalorder %s29, 1
    %p320 = por %p318, %p319
    %p321 = scmp.ne.s32.totalorder %s312, %s313
    %p322 = scmp.eq.s32.totalorder %s29, 0
    %p323 = por %p321, %p322
    %p324 = scmp.ne.s32.totalorder %s312, %s313
    %p325 = scmp.eq.s32.totalorder %s30, 1
    %p326 = por %p324, %p325
    %p328 = scmp.ne.s32.totalorder %s313, %s327
    %p329 = scmp.eq.s32.totalorder %s30, 0
    %p330 = por %p328, %p329
    %s332 = sadd.s32 %s331, 1
    %p335 = scmp.eq.s32.totalorder %s24, 1
    %p336 = scmp.ne.s32.totalorder %s331, %s333
    %p337 = scmp.eq.s32.totalorder %s24, 0
    %p338 = por %p336, %p337
    %p339 = scmp.ne.s32.totalorder %s331, %s333
    %p340 = scmp.eq.s32.totalorder %s29, 1
    %p341 = por %p339, %p340
    %p342 = scmp.ne.s32.totalorder %s333, %s334
    %p343 = scmp.eq.s32.totalorder %s29, 0
    %p344 = por %p342, %p343
    %p345 = scmp.ne.s32.totalorder %s333, %s334
    %p346 = scmp.eq.s32.totalorder %s30, 1
    %p347 = por %p345, %p346
    %p349 = scmp.ne.s32.totalorder %s334, %s348
    %p350 = scmp.eq.s32.totalorder %s30, 0
    %p351 = por %p349, %p350
    %s353 = sadd.s32 %s352, 1
    %p356 = scmp.eq.s32.totalorder %s24, 1
    %p357 = scmp.ne.s32.totalorder %s352, %s354
    %p358 = scmp.eq.s32.totalorder %s24, 0
    %p359 = por %p357, %p358
    %p360 = scmp.ne.s32.totalorder %s352, %s354
    %p361 = scmp.eq.s32.totalorder %s29, 1
    %p362 = por %p360, %p361
    %p363 = scmp.ne.s32.totalorder %s354, %s355
    %p364 = scmp.eq.s32.totalorder %s29, 0
    %p365 = por %p363, %p364
    %p366 = scmp.ne.s32.totalorder %s354, %s355
    %p367 = scmp.eq.s32.totalorder %s30, 1
    %p368 = por %p366, %p367
    %p370 = scmp.ne.s32.totalorder %s355, %s369
    %p371 = scmp.eq.s32.totalorder %s30, 0
    %p372 = por %p370, %p371
    %s374 = sadd.s32 %s373, 1
    %p377 = scmp.eq.s32.totalorder %s24, 1
    %p378 = scmp.ne.s32.totalorder %s373, %s375
    %p379 = scmp.eq.s32.totalorder %s24, 0
    %p380 = por %p378, %p379
    %p381 = scmp.ne.s32.totalorder %s373, %s375
    %p382 = scmp.eq.s32.totalorder %s29, 1
    %p383 = por %p381, %p382
    %p384 = scmp.ne.s32.totalorder %s375, %s376
    %p385 = scmp.eq.s32.totalorder %s29, 0
    %p386 = por %p384, %p385
    %p387 = scmp.ne.s32.totalorder %s375, %s376
    %p388 = scmp.eq.s32.totalorder %s30, 1
    %p389 = por %p387, %p388
    %p391 = scmp.ne.s32.totalorder %s376, %s390
    %p392 = scmp.eq.s32.totalorder %s30, 0
    %p393 = por %p391, %p392
    %s395 = sadd.s32 %s394, 1
    %p398 = scmp.eq.s32.totalorder %s24, 1
    %p399 = scmp.ne.s32.totalorder %s394, %s396
    %p400 = scmp.eq.s32.totalorder %s24, 0
    %p401 = por %p399, %p400
    %p402 = scmp.ne.s32.totalorder %s394, %s396
    %p403 = scmp.eq.s32.totalorder %s29, 1
    %p404 = por %p402, %p403
    %p405 = scmp.ne.s32.totalorder %s396, %s397
    %p406 = scmp.eq.s32.totalorder %s29, 0
    %p407 = por %p405, %p406
    %p408 = scmp.ne.s32.totalorder %s396, %s397
    %p409 = scmp.eq.s32.totalorder %s30, 1
    %p410 = por %p408, %p409
    %p412 = scmp.ne.s32.totalorder %s397, %s411
    %p413 = scmp.eq.s32.totalorder %s30, 0
    %p414 = por %p412, %p413
    %s415 = ssub.s32 %s24, %s31
    %p416 = scmp.eq.s32.totalorder %s415, 0
    %s418 = sadd.s32 %s417, 1
    %s419 = scalar_select %p416, %s417, %s418
    %p422 = pneg %p416
    %p423 = scmp.eq.s32.totalorder %s24, 1
    %p424 = por %p422, %p423
    %p425 = scmp.ne.s32.totalorder %s417, %s420
    %p426 = scmp.eq.s32.totalorder %s24, 0
    %p427 = por %p425, %p426
    %p428 = scmp.ne.s32.totalorder %s417, %s420
    %p429 = scmp.eq.s32.totalorder %s29, 1
    %p430 = por %p428, %p429
    %p431 = scmp.ne.s32.totalorder %s420, %s421
    %p432 = scmp.eq.s32.totalorder %s29, 0
    %p433 = por %p431, %p432
    %p434 = scmp.ne.s32.totalorder %s420, %s421
    %p435 = scmp.eq.s32.totalorder %s30, 1
    %p436 = por %p434, %p435
    %p438 = scmp.ne.s32.totalorder %s421, %s437
    %p439 = scmp.eq.s32.totalorder %s30, 0
    %p440 = por %p438, %p439
    %p441 = scmp.le.s32.totalorder 1, %s24
    %p442 = scmp.lt.s32.totalorder %s24, 3
    %p443 = pnand %p441, %p442
    %p444 = pneg %p443
    // Predicated region
    $region9: #{transformer_forward.1} parent=5 // pred_check
      _
    $region10: #{transformer_forward.1} parent=5 // pred_check_branch
      %446 = sbr.rel (%p443) target = $region12
    $region11: #{transformer_forward.1} parent=5 // pred_region
      %s447 = ssub.s32 %s24, 1
      // Predicated region
      $region13: #{transformer_forward.1} parent=11 // pred_check
        %p448 = pneg %p71
      $region14: #{transformer_forward.1} parent=11 // pred_check_branch
        %450 = sbr.rel (%p448) target = $region16
      $region15: #{transformer_forward.1} parent=11 // pred_region
        _
      $region16: #{transformer_forward.1} parent=11 // pred_fallthru
        _
      // Predicated region
      $region17: #{transformer_forward.1} parent=11 // pred_check
        %p451 = pneg %p92
      $region18: #{transformer_forward.1} parent=11 // pred_check_branch
        %453 = sbr.rel (%p451) target = $region20
      $region19: #{transformer_forward.1} parent=11 // pred_region
        _
      $region20: #{transformer_forward.1} parent=11 // pred_fallthru
        _
      // Predicated region
      $region21: #{transformer_forward.1} parent=11 // pred_check
        %p454 = pneg %p113
      $region22: #{transformer_forward.1} parent=11 // pred_check_branch
        %456 = sbr.rel (%p454) target = $region24
      $region23: #{transformer_forward.1} parent=11 // pred_region
        _
      $region24: #{transformer_forward.1} parent=11 // pred_fallthru
        _
      // Predicated region
      $region25: #{transformer_forward.1} parent=11 // pred_check
        %p457 = pneg %p134
      $region26: #{transformer_forward.1} parent=11 // pred_check_branch
        %459 = sbr.rel (%p457) target = $region28
      $region27: #{transformer_forward.1} parent=11 // pred_region
        _
      $region28: #{transformer_forward.1} parent=11 // pred_fallthru
        _
      // Predicated region
      $region29: #{transformer_forward.1} parent=11 // pred_check
        %p460 = pneg %p155
      $region30: #{transformer_forward.1} parent=11 // pred_check_branch
        %462 = sbr.rel (%p460) target = $region32
      $region31: #{transformer_forward.1} parent=11 // pred_region
        _
      $region32: #{transformer_forward.1} parent=11 // pred_fallthru
        _
      // Predicated region
      $region33: #{transformer_forward.1} parent=11 // pred_check
        %p463 = pneg %p176
      $region34: #{transformer_forward.1} parent=11 // pred_check_branch
        %465 = sbr.rel (%p463) target = $region36
      $region35: #{transformer_forward.1} parent=11 // pred_region
        _
      $region36: #{transformer_forward.1} parent=11 // pred_fallthru
        _
      // Predicated region
      $region37: #{transformer_forward.1} parent=11 // pred_check
        %p466 = pneg %p197
      $region38: #{transformer_forward.1} parent=11 // pred_check_branch
        %468 = sbr.rel (%p466) target = $region40
      $region39: #{transformer_forward.1} parent=11 // pred_region
        _
      $region40: #{transformer_forward.1} parent=11 // pred_fallthru
        _
      // Predicated region
      $region41: #{transformer_forward.1} parent=11 // pred_check
        %p469 = pneg %p218
      $region42: #{transformer_forward.1} parent=11 // pred_check_branch
        %471 = sbr.rel (%p469) target = $region44
      $region43: #{transformer_forward.1} parent=11 // pred_region
        _
      $region44: #{transformer_forward.1} parent=11 // pred_fallthru
        _
      // Predicated region
      $region45: #{transformer_forward.1} parent=11 // pred_check
        %p472 = pneg %p239
      $region46: #{transformer_forward.1} parent=11 // pred_check_branch
        %474 = sbr.rel (%p472) target = $region48
      $region47: #{transformer_forward.1} parent=11 // pred_region
        _
      $region48: #{transformer_forward.1} parent=11 // pred_fallthru
        _
      // Predicated region
      $region49: #{transformer_forward.1} parent=11 // pred_check
        %p475 = pneg %p260
      $region50: #{transformer_forward.1} parent=11 // pred_check_branch
        %477 = sbr.rel (%p475) target = $region52
      $region51: #{transformer_forward.1} parent=11 // pred_region
        _
      $region52: #{transformer_forward.1} parent=11 // pred_fallthru
        _
      // Predicated region
      $region53: #{transformer_forward.1} parent=11 // pred_check
        %p478 = pneg %p281
      $region54: #{transformer_forward.1} parent=11 // pred_check_branch
        %480 = sbr.rel (%p478) target = $region56
      $region55: #{transformer_forward.1} parent=11 // pred_region
        _
      $region56: #{transformer_forward.1} parent=11 // pred_fallthru
        _
      // Predicated region
      $region57: #{transformer_forward.1} parent=11 // pred_check
        %p481 = pneg %p302
      $region58: #{transformer_forward.1} parent=11 // pred_check_branch
        %483 = sbr.rel (%p481) target = $region60
      $region59: #{transformer_forward.1} parent=11 // pred_region
        _
      $region60: #{transformer_forward.1} parent=11 // pred_fallthru
        _
      // Predicated region
      $region61: #{transformer_forward.1} parent=11 // pred_check
        %p484 = pneg %p323
      $region62: #{transformer_forward.1} parent=11 // pred_check_branch
        %486 = sbr.rel (%p484) target = $region64
      $region63: #{transformer_forward.1} parent=11 // pred_region
        _
      $region64: #{transformer_forward.1} parent=11 // pred_fallthru
        _
      // Predicated region
      $region65: #{transformer_forward.1} parent=11 // pred_check
        %p487 = pneg %p344
      $region66: #{transformer_forward.1} parent=11 // pred_check_branch
        %489 = sbr.rel (%p487) target = $region68
      $region67: #{transformer_forward.1} parent=11 // pred_region
        _
      $region68: #{transformer_forward.1} parent=11 // pred_fallthru
        _
      // Predicated region
      $region69: #{transformer_forward.1} parent=11 // pred_check
        %p490 = pneg %p365
      $region70: #{transformer_forward.1} parent=11 // pred_check_branch
        %492 = sbr.rel (%p490) target = $region72
      $region71: #{transformer_forward.1} parent=11 // pred_region
        _
      $region72: #{transformer_forward.1} parent=11 // pred_fallthru
        _
      // Predicated region
      $region73: #{transformer_forward.1} parent=11 // pred_check
        %p493 = pneg %p386
      $region74: #{transformer_forward.1} parent=11 // pred_check_branch
        %495 = sbr.rel (%p493) target = $region76
      $region75: #{transformer_forward.1} parent=11 // pred_region
        _
      $region76: #{transformer_forward.1} parent=11 // pred_fallthru
        _
      // Predicated region
      $region77: #{transformer_forward.1} parent=11 // pred_check
        %p496 = pneg %p407
      $region78: #{transformer_forward.1} parent=11 // pred_check_branch
        %498 = sbr.rel (%p496) target = $region80
      $region79: #{transformer_forward.1} parent=11 // pred_region
        _
      $region80: #{transformer_forward.1} parent=11 // pred_fallthru
        _
    $region12: #{transformer_forward.1} parent=5 // pred_fallthru
      _
    %p499 = scmp.lt.s32.totalorder %s24, 2
    // Predicated region
    $region81: #{transformer_forward.1} parent=5 // pred_check
      %p500 = pneg %p499
    $region82: #{transformer_forward.1} parent=5 // pred_check_branch
      %502 = sbr.rel (%p500) target = $region84
    $region83: #{transformer_forward.1} parent=5 // pred_region
      // Predicated region
      $region85: #{transformer_forward.1} parent=83 // pred_check
        %p503 = pneg %p44
      $region86: #{transformer_forward.1} parent=83 // pred_check_branch
        %505 = sbr.rel (%p503) target = $region88
      $region87: #{transformer_forward.1} parent=83 // pred_region
        %p506 = scmp.lt.s32.totalorder %s24, 1
        %s507 = scalar_select %p506, %s24, 1
        %s508 = smul.addr %s507, 2
        %s509 = smul.addr %s508, 4
        %s510 = scalar_lea.vmem %s0, %s509
      $region88: #{transformer_forward.1} parent=83 // pred_fallthru
        _
    $region84: #{transformer_forward.1} parent=5 // pred_fallthru
      _
    %p511 = scmp.le.s32.totalorder 1, %s24
    %p512 = scmp.lt.s32.totalorder %s24, 3
    %p513 = pnand %p511, %p512
    %p514 = pneg %p513
    // Predicated region
    $region89: #{transformer_forward.1} parent=5 // pred_check
      _
    $region90: #{transformer_forward.1} parent=5 // pred_check_branch
      %516 = sbr.rel (%p513) target = $region92
    $region91: #{transformer_forward.1} parent=5 // pred_region
      %s517 = ssub.s32 %s24, 1
      %p518 = scmp.lt.s32.totalorder %s29, 1
      %s519 = scalar_select %p518, %s29, 1
      %s520 = smul.addr %s519, 2
      %s521 = smul.addr %s520, 4
      %s522 = scalar_lea.vmem %s0, %s521
      %p523 = pneg %p50
      %p524 = pneg %p47
      %p525 = pneg %p71
      %p526 = pneg %p68
      %p527 = pneg %p92
      %p528 = pneg %p89
      %p529 = pneg %p113
      %p530 = pneg %p110
      %p531 = pneg %p134
      %p532 = pneg %p131
      %p533 = pneg %p155
      %p534 = pneg %p152
      %p535 = pneg %p176
      %p536 = pneg %p173
      %p537 = pneg %p197
      %p538 = pneg %p194
      %p539 = pneg %p218
      %p540 = pneg %p215
      %p541 = pneg %p239
      %p542 = pneg %p236
      %p543 = pneg %p260
      %p544 = pneg %p257
      %p545 = pneg %p281
      %p546 = pneg %p278
      %p547 = pneg %p302
      %p548 = pneg %p299
      %p549 = pneg %p323
      %p550 = pneg %p320
      %p551 = pneg %p344
      %p552 = pneg %p341
      %p553 = pneg %p365
      %p554 = pneg %p362
      %p555 = pneg %p386
      %p556 = pneg %p383
      %p557 = pneg %p407
      %p558 = pneg %p404
      %p559 = pneg %p433
      %p560 = pneg %p430
      %p561 = scmp.lt.s32.totalorder %s29, 1
      %s562 = scalar_select %p561, %s29, 1
      %s563 = smul.addr %s562, 8
      %s564 = scalar_lea.vmem %s18, %s563
      %p565 = scmp.lt.s32.totalorder %s29, 1
      %s566 = scalar_select %p565, %s29, 1
      %s567 = smul.addr %s566, 2
      %s568 = smul.addr %s567, 4
      %s569 = scalar_lea.vmem %s0, %s568
      %p570 = scmp.lt.s32.totalorder %s29, 1
      %s571 = scalar_select %p570, %s29, 1
      %s572 = smul.addr %s571, 8
      %s573 = scalar_lea.vmem %s18, %s572
      %v574 = vld [vmem:[%s569] sm:$0xff]
      %v575 = vld [vmem:[%s1] sm:$0xff]
      %v576 = vld [vmem:[%s1 + $0x8] sm:$0xff]
      %v577 = vld [vmem:[%s1 + $0x10] sm:$0xff]
      %v578 = vld [vmem:[%s1 + $0x18] sm:$0xff]
      %v579 = vld [vmem:[%s1 + $0x20] sm:$0xff]
      %v580 = vld [vmem:[%s1 + $0x28] sm:$0xff]
      %v581 = vld [vmem:[%s1 + $0x30] sm:$0xff]
      %v582 = vld [vmem:[%s1 + $0x38] sm:$0xff]
      %v583 = vld [vmem:[%s1 + $0x40] sm:$0xff]
      %v584 = vld [vmem:[%s1 + $0x48] sm:$0xff]
      %v585 = vld [vmem:[%s1 + $0x50] sm:$0xff]
      %v586 = vld [vmem:[%s1 + $0x58] sm:$0xff]
      %v587 = vld [vmem:[%s1 + $0x60] sm:$0xff]
      %v588 = vld [vmem:[%s1 + $0x68] sm:$0xff]
      %v589 = vld [vmem:[%s1 + $0x70] sm:$0xff]
      %v590 = vld [vmem:[%s1 + $0x78] sm:$0xff]
      %v591 = vld [vmem:[%s1 + $0x80] sm:$0xff]
      %v592 = vld [vmem:[%s1 + $0x88] sm:$0xff]
      %v593 = vld [vmem:[%s1 + $0x90] sm:$0xff]
      %v594 = vld [vmem:[%s1 + $0x98] sm:$0xff]
      %v595 = vld [vmem:[%s1 + $0xa0] sm:$0xff]
      %v596 = vld [vmem:[%s1 + $0xa8] sm:$0xff]
      %v597 = vld [vmem:[%s1 + $0xb0] sm:$0xff]
      %v598 = vld [vmem:[%s1 + $0xb8] sm:$0xff]
      %v599 = vld [vmem:[%s2] sm:$0xf]
      %v601 = vcombine.high %v574, %v574
      %vm602 = vcmask 523264
      %v603 = vsel %vm602, %v601, 0
      %605 = vmatprep.subr.mxu0 0.0
      %606 = vmatpush1.msra.mxu0 %v590
      %607 = vmatprep.subr.mxu0 0.0
      %608 = vmatpush1.msra.mxu0 %v589
      %609 = vmatprep.subr.mxu0 0.0
      %610 = vmatpush1.msra.mxu0 %v588
      %611 = vmatprep.subr.mxu0 0.0
      %612 = vmatpush1.msra.mxu0 %v587
      %613 = vmatprep.subr.mxu0 0.0
      %614 = vmatpush1.msra.mxu0 %v586
      %615 = vmatprep.subr.mxu0 0.0
      %616 = vmatpush1.msra.mxu0 %v585
      %617 = vmatprep.subr.mxu0 0.0
      %618 = vmatpush1.msra.mxu0 %v584
      %619 = vmatprep.subr.mxu0 0.0
      %620 = vmatpush1.msra.mxu0 %v583
      %621 = vmatprep.subr.mxu0 0.0
      %622 = vmatpush1.msra.mxu0 %v582
      %623 = vmatprep.subr.mxu0 0.0
      %624 = vmatpush1.msra.mxu0 %v581
      %625 = vmatprep.subr.mxu0 0.0
      %626 = vmatpush1.msra.mxu0 %v580
      %627 = vmatprep.subr.mxu0 0.0
      %628 = vmatpush1.msra.mxu0 %v579
      %629 = vmatprep.subr.mxu0 0.0
      %630 = vmatpush1.msra.mxu0 %v578
      %631 = vmatprep.subr.mxu0 0.0
      %632 = vmatpush1.msra.mxu0 %v577
      %633 = vmatprep.subr.mxu0 0.0
      %634 = vmatpush1.msra.mxu0 %v576
      %635 = vmatprep.subr.mxu0 0.0
      %636 = vmatpush1.msra.mxu0 %v575
      %637 = vmatprep.subr.mxu0 0.0
      %638 = vmatpush2.msra.mxu0 0.0
      %639 = vmatprep.subr.mxu0 0.0
      %640 = vmatpush2.msra.mxu0 0.0
      %641 = vmatprep.subr.mxu0 0.0
      %642 = vmatpush2.msra.mxu0 0.0
      %643 = vmatprep.subr.mxu0 0.0
      %644 = vmatpush2.msra.mxu0 0.0
      %645 = vmatprep.subr.mxu0 0.0
      %646 = vmatpush2.msra.mxu0 0.0
      %647 = vmatprep.subr.mxu0 0.0
      %648 = vmatpush2.msra.mxu0 0.0
      %649 = vmatprep.subr.mxu0 0.0
      %650 = vmatpush2.msra.mxu0 0.0
      %651 = vmatprep.subr.mxu0 0.0
      %652 = vmatpush2.msra.mxu0 0.0
      %653 = vmatprep.subr.mxu0 0.0
      %654 = vmatpush2.msra.mxu0 %v598
      %655 = vmatprep.subr.mxu0 0.0
      %656 = vmatpush2.msra.mxu0 %v597
      %657 = vmatprep.subr.mxu0 0.0
      %658 = vmatpush2.msra.mxu0 %v596
      %659 = vmatprep.subr.mxu0 0.0
      %660 = vmatpush2.msra.mxu0 %v595
      %661 = vmatprep.subr.mxu0 0.0
      %662 = vmatpush2.msra.mxu0 %v594
      %663 = vmatprep.subr.mxu0 0.0
      %664 = vmatpush2.msra.mxu0 %v593
      %665 = vmatprep.subr.mxu0 0.0
      %666 = vmatpush2.msra.mxu0 %v592
      %667 = vmatprep.subr.mxu0 0.0
      %668 = vmatpush2.msra.mxu0 %v591
      %669 = vmatprep.mubr.f32.mxu0 %v603
      %670 = vmatmul.mubr.f32.gmra.mxu0 %v574
      %v671 = vpop.f32.mrf.mxu0
      %v672 = vadd.f32 %v599, %v671
      %v673 = vpop.f32.mrf.mxu0
      %674 = vdwg.mxu0
      %v675 = vld [vmem:[%s3] sm:$0x1]
      %vm676 = vcmask 253952
      %677 = vst.msk [vmem:[#allocation2] sm:$0x1] %vm676, %v675
      %vm678 = vcmask 257024
      %679 = vst.msk [vmem:[#allocation2 + $0x1] sm:$0xf] %vm678, %v672
      %v680 = vld [vmem:[#allocation2] sm:$0x1f]
      %v681 = vld [vmem:[%s4] sm:$0x1]
      %v682 = vld [vmem:[%s5] sm:$0x1]
      %vm683 = vcmask 258048
      %v684 = vsel %vm683, %v680, 0.0
      %685 = vadd.xlane.f32.xlu0 %v684
      %v686 = vpop.xlane.xlu0 %685
      %v687 = vrcp.pop 32.0
      %v688 = vmul.f32 %v686, %v687
      %v689 = vsub.f32 %v680, %v688
      %v690 = vmul.f32 %v689, %v689
      %v691 = vsel %vm683, %v690, 0.0
      %692 = vadd.xlane.f32.xlu0 %v691
      %v693 = vpop.xlane.xlu0 %692
      %v694 = vmul.f32 %v693, %v687
      %v695 = vadd.f32 %v694, 1e-06
      %v696 = vrsqrt.pop %v695
      %v697 = vmul.f32 %v689, %v696
      %v699 = vlaneseq
      %v700 = vshrl.u32 %v699, 7
      %v701 = vsub.s32 0, %v700
      %v702 = vrot.slane %v681, %v701
      %v704 = vmul.f32 %v697, %v702
      %v706 = vlaneseq
      %v707 = vshrl.u32 %v706, 7
      %v708 = vsub.s32 0, %v707
      %v709 = vrot.slane %v682, %v708
      %v711 = vadd.f32 %v704, %v709
      %v712 = vld [vmem:[%s6] sm:$0xff]
      %v713 = vld [vmem:[%s6 + $0x8] sm:$0xff]
      %v714 = vld [vmem:[%s6 + $0x10] sm:$0xff]
      %v715 = vld [vmem:[%s6 + $0x18] sm:$0xff]
      %v716 = vld [vmem:[%s7] sm:$0x1f]
      %vm717 = vcmask 261120
      %v719 = vsel %vm717, %v711, 0
      %721 = vmatprep.subr.mxu0 0.0
      %722 = vmatpush1.msra.mxu0 0.0
      %723 = vmatprep.subr.mxu0 0.0
      %724 = vmatpush1.msra.mxu0 0.0
      %725 = vmatprep.subr.mxu0 0.0
      %726 = vmatpush1.msra.mxu0 0.0
      %727 = vmatprep.subr.mxu0 0.0
      %728 = vmatpush1.msra.mxu0 0.0
      %729 = vmatprep.subr.mxu0 0.0
      %730 = vmatpush1.msra.mxu0 0.0
      %731 = vmatprep.subr.mxu0 0.0
      %732 = vmatpush1.msra.mxu0 0.0
      %733 = vmatprep.subr.mxu0 0.0
      %734 = vmatpush1.msra.mxu0 0.0
      %735 = vmatprep.subr.mxu0 0.0
      %736 = vmatpush1.msra.mxu0 0.0
      %737 = vmatprep.subr.mxu0 0.0
      %738 = vmatpush1.msra.mxu0 0.0
      %739 = vmatprep.subr.mxu0 0.0
      %740 = vmatpush1.msra.mxu0 0.0
      %741 = vmatprep.subr.mxu0 0.0
      %742 = vmatpush1.msra.mxu0 0.0
      %743 = vmatprep.subr.mxu0 0.0
      %744 = vmatpush1.msra.mxu0 0.0
      %745 = vmatprep.subr.mxu0 0.0
      %746 = vmatpush1.msra.mxu0 %v715
      %747 = vmatprep.subr.mxu0 0.0
      %748 = vmatpush1.msra.mxu0 %v714
      %749 = vmatprep.subr.mxu0 0.0
      %750 = vmatpush1.msra.mxu0 %v713
      %751 = vmatprep.subr.mxu0 0.0
      %752 = vmatpush1.msra.mxu0 %v712
      %753 = vmatprep.subr.mxu0 0.0
      %754 = vmatpush2.msra.mxu0 0.0
      %755 = vmatprep.subr.mxu0 0.0
      %756 = vmatpush2.msra.mxu0 0.0
      %757 = vmatprep.subr.mxu0 0.0
      %758 = vmatpush2.msra.mxu0 0.0
      %759 = vmatprep.subr.mxu0 0.0
      %760 = vmatpush2.msra.mxu0 0.0
      %761 = vmatprep.subr.mxu0 0.0
      %762 = vmatpush2.msra.mxu0 0.0
      %763 = vmatprep.subr.mxu0 0.0
      %764 = vmatpush2.msra.mxu0 0.0
      %765 = vmatprep.subr.mxu0 0.0
      %766 = vmatpush2.msra.mxu0 0.0
      %767 = vmatprep.subr.mxu0 0.0
      %768 = vmatpush2.msra.mxu0 0.0
      %769 = vmatprep.subr.mxu0 0.0
      %770 = vmatpush2.msra.mxu0 0.0
      %771 = vmatprep.subr.mxu0 0.0
      %772 = vmatpush2.msra.mxu0 0.0
      %773 = vmatprep.subr.mxu0 0.0
      %774 = vmatpush2.msra.mxu0 0.0
      %775 = vmatprep.subr.mxu0 0.0
      %776 = vmatpush2.msra.mxu0 0.0
      %777 = vmatprep.subr.mxu0 0.0
      %778 = vmatpush2.msra.mxu0 0.0
      %779 = vmatprep.subr.mxu0 0.0
      %780 = vmatpush2.msra.mxu0 0.0
      %781 = vmatprep.subr.mxu0 0.0
      %782 = vmatpush2.msra.mxu0 0.0
      %783 = vmatprep.subr.mxu0 0.0
      %784 = vmatpush2.msra.mxu0 0.0
      %785 = vmatprep.mubr.f32.mxu0 0.0
      %786 = vmatmul.mubr.f32.gmra.mxu0 %v719
      %v787 = vpop.f32.mrf.mxu0
      %v788 = vadd.f32 %v716, %v787
      %v789 = vpop.f32.mrf.mxu0
      %790 = vdwg.mxu0
      %v791 = vld [vmem:[%s8] sm:$0xff]
      %v792 = vld [vmem:[%s8 + $0x8] sm:$0xff]
      %v793 = vld [vmem:[%s8 + $0x10] sm:$0xff]
      %v794 = vld [vmem:[%s8 + $0x18] sm:$0xff]
      %796 = vrot.lane.b32.xlu0 %v788, 96
      %v797 = vpop.permute.xlu0 %796
      %vm798 = vcmask 64512
      %v799 = vsel %vm798, %v788, 0
      %v801 = vsel %vm798, %v797, 0
      %803 = vmatprep.subr.mxu0 0.0
      %804 = vmatpush1.xpose.msra.mxu0 0.0
      %805 = vmatprep.subr.mxu0 0.0
      %806 = vmatpush1.xpose.msra.mxu0 0.0
      %807 = vmatprep.subr.mxu0 0.0
      %808 = vmatpush1.xpose.msra.mxu0 0.0
      %809 = vmatprep.subr.mxu0 0.0
      %810 = vmatpush1.xpose.msra.mxu0 0.0
      %811 = vmatprep.subr.mxu0 0.0
      %812 = vmatpush1.xpose.msra.mxu0 0.0
      %813 = vmatprep.subr.mxu0 0.0
      %814 = vmatpush1.xpose.msra.mxu0 0.0
      %815 = vmatprep.subr.mxu0 0.0
      %816 = vmatpush1.xpose.msra.mxu0 0.0
      %817 = vmatprep.subr.mxu0 0.0
      %818 = vmatpush1.xpose.msra.mxu0 0.0
      %819 = vmatprep.subr.mxu0 0.0
      %820 = vmatpush1.xpose.msra.mxu0 0.0
      %821 = vmatprep.subr.mxu0 0.0
      %822 = vmatpush1.xpose.msra.mxu0 0.0
      %823 = vmatprep.subr.mxu0 0.0
      %824 = vmatpush1.xpose.msra.mxu0 0.0
      %825 = vmatprep.subr.mxu0 0.0
      %826 = vmatpush1.xpose.msra.mxu0 0.0
      %827 = vmatprep.subr.mxu0 0.0
      %828 = vmatpush1.xpose.msra.mxu0 0.0
      %829 = vmatprep.subr.mxu0 0.0
      %830 = vmatpush1.xpose.msra.mxu0 0.0
      %831 = vmatprep.subr.mxu0 0.0
      %832 = vmatpush1.xpose.msra.mxu0 0.0
      %833 = vmatprep.subr.mxu0 0.0
      %834 = vmatpush1.xpose.msra.mxu0 %v801
      %835 = vmatprep.subr.mxu0 0.0
      %836 = vmatpush2.xpose.msra.mxu0 0.0
      %837 = vmatprep.subr.mxu0 0.0
      %838 = vmatpush2.xpose.msra.mxu0 0.0
      %839 = vmatprep.subr.mxu0 0.0
      %840 = vmatpush2.xpose.msra.mxu0 0.0
      %841 = vmatprep.subr.mxu0 0.0
      %842 = vmatpush2.xpose.msra.mxu0 0.0
      %843 = vmatprep.subr.mxu0 0.0
      %844 = vmatpush2.xpose.msra.mxu0 0.0
      %845 = vmatprep.subr.mxu0 0.0
      %846 = vmatpush2.xpose.msra.mxu0 0.0
      %847 = vmatprep.subr.mxu0 0.0
      %848 = vmatpush2.xpose.msra.mxu0 0.0
      %849 = vmatprep.subr.mxu0 0.0
      %850 = vmatpush2.xpose.msra.mxu0 0.0
      %851 = vmatprep.subr.mxu0 0.0
      %852 = vmatpush2.xpose.msra.mxu0 0.0
      %853 = vmatprep.subr.mxu0 0.0
      %854 = vmatpush2.xpose.msra.mxu0 0.0
      %855 = vmatprep.subr.mxu0 0.0
      %856 = vmatpush2.xpose.msra.mxu0 0.0
      %857 = vmatprep.subr.mxu0 0.0
      %858 = vmatpush2.xpose.msra.mxu0 0.0
      %859 = vmatprep.subr.mxu0 0.0
      %860 = vmatpush2.xpose.msra.mxu0 0.0
      %861 = vmatprep.subr.mxu0 0.0
      %862 = vmatpush2.xpose.msra.mxu0 0.0
      %863 = vmatprep.subr.mxu0 0.0
      %864 = vmatpush2.xpose.msra.mxu0 0.0
      %865 = vmatprep.subr.mxu0 0.0
      %866 = vmatpush2.xpose.msra.mxu0 0.0
      %867 = vmatprep.mubr.f32.mxu0 0.0
      %868 = vmatmul.mubr.f32.gmra.mxu0 %v799
      %v869 = vpop.f32.mrf.mxu0
      %v870 = vadd.f32 0.0, %v869
      %v871 = vpop.f32.mrf.mxu0
      %872 = vdwg.mxu0
      %vm873 = vcmask 36864
      %v874 = vsel %vm873, %v870, -inf
      %875 = vmax.xlane.f32.xlu0 %v874
      %v876 = vpop.xlane.xlu0 %875
      %v877 = vsub.f32 %v870, %v876
      %v878 = vmul.f32 %v877, 1.442695
      %v879 = vpow.pop %v878
      %v880 = vsel %vm873, %v879, 0.0
      %881 = vadd.xlane.f32.xlu0 %v880
      %v882 = vpop.xlane.xlu0 %881
      %v883 = vrcp.pop %v882
      %v884 = vmul.f32 %v879, %v883
      %885 = vrot.lane.b32.xlu0 %v788, 64
      %v886 = vpop.permute.xlu0 %885
      %vm887 = vcmask 39936
      %v889 = vsel %vm887, %v884, 0
      %vm891 = vcmask 1044480
      %v892 = vsel %vm891, %v886, 0
      %894 = vmatprep.subr.mxu0 0.0
      %895 = vmatpush1.msra.mxu0 0.0
      %896 = vmatprep.subr.mxu0 0.0
      %897 = vmatpush1.msra.mxu0 0.0
      %898 = vmatprep.subr.mxu0 0.0
      %899 = vmatpush1.msra.mxu0 0.0
      %900 = vmatprep.subr.mxu0 0.0
      %901 = vmatpush1.msra.mxu0 0.0
      %902 = vmatprep.subr.mxu0 0.0
      %903 = vmatpush1.msra.mxu0 0.0
      %904 = vmatprep.subr.mxu0 0.0
      %905 = vmatpush1.msra.mxu0 0.0
      %906 = vmatprep.subr.mxu0 0.0
      %907 = vmatpush1.msra.mxu0 0.0
      %908 = vmatprep.subr.mxu0 0.0
      %909 = vmatpush1.msra.mxu0 0.0
      %910 = vmatprep.subr.mxu0 0.0
      %911 = vmatpush1.msra.mxu0 0.0
      %912 = vmatprep.subr.mxu0 0.0
      %913 = vmatpush1.msra.mxu0 0.0
      %914 = vmatprep.subr.mxu0 0.0
      %915 = vmatpush1.msra.mxu0 0.0
      %916 = vmatprep.subr.mxu0 0.0
      %917 = vmatpush1.msra.mxu0 0.0
      %918 = vmatprep.subr.mxu0 0.0
      %919 = vmatpush1.msra.mxu0 0.0
      %920 = vmatprep.subr.mxu0 0.0
      %921 = vmatpush1.msra.mxu0 0.0
      %922 = vmatprep.subr.mxu0 0.0
      %923 = vmatpush1.msra.mxu0 0.0
      %924 = vmatprep.subr.mxu0 0.0
      %925 = vmatpush1.msra.mxu0 %v892
      %926 = vmatprep.subr.mxu0 0.0
      %927 = vmatpush2.msra.mxu0 0.0
      %928 = vmatprep.subr.mxu0 0.0
      %929 = vmatpush2.msra.mxu0 0.0
      %930 = vmatprep.subr.mxu0 0.0
      %931 = vmatpush2.msra.mxu0 0.0
      %932 = vmatprep.subr.mxu0 0.0
      %933 = vmatpush2.msra.mxu0 0.0
      %934 = vmatprep.subr.mxu0 0.0
      %935 = vmatpush2.msra.mxu0 0.0
      %936 = vmatprep.subr.mxu0 0.0
      %937 = vmatpush2.msra.mxu0 0.0
      %938 = vmatprep.subr.mxu0 0.0
      %939 = vmatpush2.msra.mxu0 0.0
      %940 = vmatprep.subr.mxu0 0.0
      %941 = vmatpush2.msra.mxu0 0.0
      %942 = vmatprep.subr.mxu0 0.0
      %943 = vmatpush2.msra.mxu0 0.0
      %944 = vmatprep.subr.mxu0 0.0
      %945 = vmatpush2.msra.mxu0 0.0
      %946 = vmatprep.subr.mxu0 0.0
      %947 = vmatpush2.msra.mxu0 0.0
      %948 = vmatprep.subr.mxu0 0.0
      %949 = vmatpush2.msra.mxu0 0.0
      %950 = vmatprep.subr.mxu0 0.0
      %951 = vmatpush2.msra.mxu0 0.0
      %952 = vmatprep.subr.mxu0 0.0
      %953 = vmatpush2.msra.mxu0 0.0
      %954 = vmatprep.subr.mxu0 0.0
      %955 = vmatpush2.msra.mxu0 0.0
      %956 = vmatprep.subr.mxu0 0.0
      %957 = vmatpush2.msra.mxu0 0.0
      %958 = vmatprep.mubr.f32.mxu0 0.0
      %959 = vmatmul.mubr.f32.gmra.mxu0 %v889
      %v960 = vpop.f32.mrf.mxu0
      %v961 = vadd.f32 0.0, %v960
      %v962 = vpop.f32.mrf.mxu0
      %963 = vdwg.mxu0
      %964 = vrot.lane.b32.xlu0 %v788, 120
      %v965 = vpop.permute.xlu0 %964
      %966 = vrot.lane.b32.xlu0 %v788, 88
      %v967 = vpop.permute.xlu0 %966
      %v968 = vsel %vm798, %v965, 0
      %v970 = vsel %vm798, %v967, 0
      %972 = vmatprep.subr.mxu0 0.0
      %973 = vmatpush1.xpose.msra.mxu0 0.0
      %974 = vmatprep.subr.mxu0 0.0
      %975 = vmatpush1.xpose.msra.mxu0 0.0
      %976 = vmatprep.subr.mxu0 0.0
      %977 = vmatpush1.xpose.msra.mxu0 0.0
      %978 = vmatprep.subr.mxu0 0.0
      %979 = vmatpush1.xpose.msra.mxu0 0.0
      %980 = vmatprep.subr.mxu0 0.0
      %981 = vmatpush1.xpose.msra.mxu0 0.0
      %982 = vmatprep.subr.mxu0 0.0
      %983 = vmatpush1.xpose.msra.mxu0 0.0
      %984 = vmatprep.subr.mxu0 0.0
      %985 = vmatpush1.xpose.msra.mxu0 0.0
      %986 = vmatprep.subr.mxu0 0.0
      %987 = vmatpush1.xpose.msra.mxu0 0.0
      %988 = vmatprep.subr.mxu0 0.0
      %989 = vmatpush1.xpose.msra.mxu0 0.0
      %990 = vmatprep.subr.mxu0 0.0
      %991 = vmatpush1.xpose.msra.mxu0 0.0
      %992 = vmatprep.subr.mxu0 0.0
      %993 = vmatpush1.xpose.msra.mxu0 0.0
      %994 = vmatprep.subr.mxu0 0.0
      %995 = vmatpush1.xpose.msra.mxu0 0.0
      %996 = vmatprep.subr.mxu0 0.0
      %997 = vmatpush1.xpose.msra.mxu0 0.0
      %998 = vmatprep.subr.mxu0 0.0
      %999 = vmatpush1.xpose.msra.mxu0 0.0
      %1000 = vmatprep.subr.mxu0 0.0
      %1001 = vmatpush1.xpose.msra.mxu0 0.0
      %1002 = vmatprep.subr.mxu0 0.0
      %1003 = vmatpush1.xpose.msra.mxu0 %v970
      %1004 = vmatprep.subr.mxu0 0.0
      %1005 = vmatpush2.xpose.msra.mxu0 0.0
      %1006 = vmatprep.subr.mxu0 0.0
      %1007 = vmatpush2.xpose.msra.mxu0 0.0
      %1008 = vmatprep.subr.mxu0 0.0
      %1009 = vmatpush2.xpose.msra.mxu0 0.0
      %1010 = vmatprep.subr.mxu0 0.0
      %1011 = vmatpush2.xpose.msra.mxu0 0.0
      %1012 = vmatprep.subr.mxu0 0.0
      %1013 = vmatpush2.xpose.msra.mxu0 0.0
      %1014 = vmatprep.subr.mxu0 0.0
      %1015 = vmatpush2.xpose.msra.mxu0 0.0
      %1016 = vmatprep.subr.mxu0 0.0
      %1017 = vmatpush2.xpose.msra.mxu0 0.0
      %1018 = vmatprep.subr.mxu0 0.0
      %1019 = vmatpush2.xpose.msra.mxu0 0.0
      %1020 = vmatprep.subr.mxu0 0.0
      %1021 = vmatpush2.xpose.msra.mxu0 0.0
      %1022 = vmatprep.subr.mxu0 0.0
      %1023 = vmatpush2.xpose.msra.mxu0 0.0
      %1024 = vmatprep.subr.mxu0 0.0
      %1025 = vmatpush2.xpose.msra.mxu0 0.0
      %1026 = vmatprep.subr.mxu0 0.0
      %1027 = vmatpush2.xpose.msra.mxu0 0.0
      %1028 = vmatprep.subr.mxu0 0.0
      %1029 = vmatpush2.xpose.msra.mxu0 0.0
      %1030 = vmatprep.subr.mxu0 0.0
      %1031 = vmatpush2.xpose.msra.mxu0 0.0
      %1032 = vmatprep.subr.mxu0 0.0
      %1033 = vmatpush2.xpose.msra.mxu0 0.0
      %1034 = vmatprep.subr.mxu0 0.0
      %1035 = vmatpush2.xpose.msra.mxu0 0.0
      %1036 = vmatprep.mubr.f32.mxu0 0.0
      %1037 = vmatmul.mubr.f32.gmra.mxu0 %v968
      %v1038 = vpop.f32.mrf.mxu0
      %v1039 = vadd.f32 0.0, %v1038
      %v1040 = vpop.f32.mrf.mxu0
      %1041 = vdwg.mxu0
      %v1042 = vsel %vm873, %v1039, -inf
      %1043 = vmax.xlane.f32.xlu0 %v1042
      %v1044 = vpop.xlane.xlu0 %1043
      %v1045 = vsub.f32 %v1039, %v1044
      %v1046 = vmul.f32 %v1045, 1.442695
      %v1047 = vpow.pop %v1046
      %v1048 = vsel %vm873, %v1047, 0.0
      %1049 = vadd.xlane.f32.xlu0 %v1048
      %v1050 = vpop.xlane.xlu0 %1049
      %v1051 = vrcp.pop %v1050
      %v1052 = vmul.f32 %v1047, %v1051
      %1053 = vrot.lane.b32.xlu0 %v788, 56
      %v1054 = vpop.permute.xlu0 %1053
      %v1056 = vsel %vm887, %v1052, 0
      %v1058 = vsel %vm891, %v1054, 0
      %1060 = vmatprep.subr.mxu0 0.0
      %1061 = vmatpush1.msra.mxu0 0.0
      %1062 = vmatprep.subr.mxu0 0.0
      %1063 = vmatpush1.msra.mxu0 0.0
      %1064 = vmatprep.subr.mxu0 0.0
      %1065 = vmatpush1.msra.mxu0 0.0
      %1066 = vmatprep.subr.mxu0 0.0
      %1067 = vmatpush1.msra.mxu0 0.0
      %1068 = vmatprep.subr.mxu0 0.0
      %1069 = vmatpush1.msra.mxu0 0.0
      %1070 = vmatprep.subr.mxu0 0.0
      %1071 = vmatpush1.msra.mxu0 0.0
      %1072 = vmatprep.subr.mxu0 0.0
      %1073 = vmatpush1.msra.mxu0 0.0
      %1074 = vmatprep.subr.mxu0 0.0
      %1075 = vmatpush1.msra.mxu0 0.0
      %1076 = vmatprep.subr.mxu0 0.0
      %1077 = vmatpush1.msra.mxu0 0.0
      %1078 = vmatprep.subr.mxu0 0.0
      %1079 = vmatpush1.msra.mxu0 0.0
      %1080 = vmatprep.subr.mxu0 0.0
      %1081 = vmatpush1.msra.mxu0 0.0
      %1082 = vmatprep.subr.mxu0 0.0
      %1083 = vmatpush1.msra.mxu0 0.0
      %1084 = vmatprep.subr.mxu0 0.0
      %1085 = vmatpush1.msra.mxu0 0.0
      %1086 = vmatprep.subr.mxu0 0.0
      %1087 = vmatpush1.msra.mxu0 0.0
      %1088 = vmatprep.subr.mxu0 0.0
      %1089 = vmatpush1.msra.mxu0 0.0
      %1090 = vmatprep.subr.mxu0 0.0
      %1091 = vmatpush1.msra.mxu0 %v1058
      %1092 = vmatprep.subr.mxu0 0.0
      %1093 = vmatpush2.msra.mxu0 0.0
      %1094 = vmatprep.subr.mxu0 0.0
      %1095 = vmatpush2.msra.mxu0 0.0
      %1096 = vmatprep.subr.mxu0 0.0
      %1097 = vmatpush2.msra.mxu0 0.0
      %1098 = vmatprep.subr.mxu0 0.0
      %1099 = vmatpush2.msra.mxu0 0.0
      %1100 = vmatprep.subr.mxu0 0.0
      %1101 = vmatpush2.msra.mxu0 0.0
      %1102 = vmatprep.subr.mxu0 0.0
      %1103 = vmatpush2.msra.mxu0 0.0
      %1104 = vmatprep.subr.mxu0 0.0
      %1105 = vmatpush2.msra.mxu0 0.0
      %1106 = vmatprep.subr.mxu0 0.0
      %1107 = vmatpush2.msra.mxu0 0.0
      %1108 = vmatprep.subr.mxu0 0.0
      %1109 = vmatpush2.msra.mxu0 0.0
      %1110 = vmatprep.subr.mxu0 0.0
      %1111 = vmatpush2.msra.mxu0 0.0
      %1112 = vmatprep.subr.mxu0 0.0
      %1113 = vmatpush2.msra.mxu0 0.0
      %1114 = vmatprep.subr.mxu0 0.0
      %1115 = vmatpush2.msra.mxu0 0.0
      %1116 = vmatprep.subr.mxu0 0.0
      %1117 = vmatpush2.msra.mxu0 0.0
      %1118 = vmatprep.subr.mxu0 0.0
      %1119 = vmatpush2.msra.mxu0 0.0
      %1120 = vmatprep.subr.mxu0 0.0
      %1121 = vmatpush2.msra.mxu0 0.0
      %1122 = vmatprep.subr.mxu0 0.0
      %1123 = vmatpush2.msra.mxu0 0.0
      %1124 = vmatprep.mubr.f32.mxu0 0.0
      %1125 = vmatmul.mubr.f32.gmra.mxu0 %v1056
      %v1126 = vpop.f32.mrf.mxu0
      %v1127 = vadd.f32 0.0, %v1126
      %v1128 = vpop.f32.mrf.mxu0
      %1129 = vdwg.mxu0
      %v1131 = vsel %vm798, %v1127, 0
      %1133 = vmatprep.subr.mxu0 0.0
      %1134 = vmatpush1.msra.mxu0 0.0
      %1135 = vmatprep.subr.mxu0 0.0
      %1136 = vmatpush1.msra.mxu0 0.0
      %1137 = vmatprep.subr.mxu0 0.0
      %1138 = vmatpush1.msra.mxu0 0.0
      %1139 = vmatprep.subr.mxu0 0.0
      %1140 = vmatpush1.msra.mxu0 0.0
      %1141 = vmatprep.subr.mxu0 0.0
      %1142 = vmatpush1.msra.mxu0 0.0
      %1143 = vmatprep.subr.mxu0 0.0
      %1144 = vmatpush1.msra.mxu0 0.0
      %1145 = vmatprep.subr.mxu0 0.0
      %1146 = vmatpush1.msra.mxu0 0.0
      %1147 = vmatprep.subr.mxu0 0.0
      %1148 = vmatpush1.msra.mxu0 0.0
      %1149 = vmatprep.subr.mxu0 0.0
      %1150 = vmatpush1.msra.mxu0 0.0
      %1151 = vmatprep.subr.mxu0 0.0
      %1152 = vmatpush1.msra.mxu0 0.0
      %1153 = vmatprep.subr.mxu0 0.0
      %1154 = vmatpush1.msra.mxu0 0.0
      %1155 = vmatprep.subr.mxu0 0.0
      %1156 = vmatpush1.msra.mxu0 0.0
      %1157 = vmatprep.subr.mxu0 0.0
      %1158 = vmatpush1.msra.mxu0 0.0
      %1159 = vmatprep.subr.mxu0 0.0
      %1160 = vmatpush1.msra.mxu0 0.0
      %1161 = vmatprep.subr.mxu0 0.0
      %1162 = vmatpush1.msra.mxu0 0.0
      %1163 = vmatprep.subr.mxu0 0.0
      %1164 = vmatpush1.msra.mxu0 %v792
      %1165 = vmatprep.subr.mxu0 0.0
      %1166 = vmatpush2.msra.mxu0 0.0
      %1167 = vmatprep.subr.mxu0 0.0
      %1168 = vmatpush2.msra.mxu0 0.0
      %1169 = vmatprep.subr.mxu0 0.0
      %1170 = vmatpush2.msra.mxu0 0.0
      %1171 = vmatprep.subr.mxu0 0.0
      %1172 = vmatpush2.msra.mxu0 0.0
      %1173 = vmatprep.subr.mxu0 0.0
      %1174 = vmatpush2.msra.mxu0 0.0
      %1175 = vmatprep.subr.mxu0 0.0
      %1176 = vmatpush2.msra.mxu0 0.0
      %1177 = vmatprep.subr.mxu0 0.0
      %1178 = vmatpush2.msra.mxu0 0.0
      %1179 = vmatprep.subr.mxu0 0.0
      %1180 = vmatpush2.msra.mxu0 0.0
      %1181 = vmatprep.subr.mxu0 0.0
      %1182 = vmatpush2.msra.mxu0 0.0
      %1183 = vmatprep.subr.mxu0 0.0
      %1184 = vmatpush2.msra.mxu0 0.0
      %1185 = vmatprep.subr.mxu0 0.0
      %1186 = vmatpush2.msra.mxu0 0.0
      %1187 = vmatprep.subr.mxu0 0.0
      %1188 = vmatpush2.msra.mxu0 0.0
      %1189 = vmatprep.subr.mxu0 0.0
      %1190 = vmatpush2.msra.mxu0 0.0
      %1191 = vmatprep.subr.mxu0 0.0
      %1192 = vmatpush2.msra.mxu0 0.0
      %1193 = vmatprep.subr.mxu0 0.0
      %1194 = vmatpush2.msra.mxu0 0.0
      %1195 = vmatprep.subr.mxu0 0.0
      %1196 = vmatpush2.msra.mxu0 0.0
      %1197 = vmatprep.mubr.f32.mxu0 0.0
      %1198 = vmatmul.mubr.f32.gmra.mxu0 %v1131
      %v1199 = vpop.f32.mrf.mxu0
      %v1200 = vadd.f32 0.0, %v1199
      %v1201 = vpop.f32.mrf.mxu0
      %1202 = vdwg.mxu0
      %v1204 = vsel %vm798, %v961, 0
      %1206 = vmatprep.subr.mxu0 0.0
      %1207 = vmatpush1.msra.mxu0 0.0
      %1208 = vmatprep.subr.mxu0 0.0
      %1209 = vmatpush1.msra.mxu0 0.0
      %1210 = vmatprep.subr.mxu0 0.0
      %1211 = vmatpush1.msra.mxu0 0.0
      %1212 = vmatprep.subr.mxu0 0.0
      %1213 = vmatpush1.msra.mxu0 0.0
      %1214 = vmatprep.subr.mxu0 0.0
      %1215 = vmatpush1.msra.mxu0 0.0
      %1216 = vmatprep.subr.mxu0 0.0
      %1217 = vmatpush1.msra.mxu0 0.0
      %1218 = vmatprep.subr.mxu0 0.0
      %1219 = vmatpush1.msra.mxu0 0.0
      %1220 = vmatprep.subr.mxu0 0.0
      %1221 = vmatpush1.msra.mxu0 0.0
      %1222 = vmatprep.subr.mxu0 0.0
      %1223 = vmatpush1.msra.mxu0 0.0
      %1224 = vmatprep.subr.mxu0 0.0
      %1225 = vmatpush1.msra.mxu0 0.0
      %1226 = vmatprep.subr.mxu0 0.0
      %1227 = vmatpush1.msra.mxu0 0.0
      %1228 = vmatprep.subr.mxu0 0.0
      %1229 = vmatpush1.msra.mxu0 0.0
      %1230 = vmatprep.subr.mxu0 0.0
      %1231 = vmatpush1.msra.mxu0 0.0
      %1232 = vmatprep.subr.mxu0 0.0
      %1233 = vmatpush1.msra.mxu0 0.0
      %1234 = vmatprep.subr.mxu0 0.0
      %1235 = vmatpush1.msra.mxu0 0.0
      %1236 = vmatprep.subr.mxu0 0.0
      %1237 = vmatpush1.msra.mxu0 %v791
      %1238 = vmatprep.subr.mxu0 0.0
      %1239 = vmatpush2.msra.mxu0 0.0
      %1240 = vmatprep.subr.mxu0 0.0
      %1241 = vmatpush2.msra.mxu0 0.0
      %1242 = vmatprep.subr.mxu0 0.0
      %1243 = vmatpush2.msra.mxu0 0.0
      %1244 = vmatprep.subr.mxu0 0.0
      %1245 = vmatpush2.msra.mxu0 0.0
      %1246 = vmatprep.subr.mxu0 0.0
      %1247 = vmatpush2.msra.mxu0 0.0
      %1248 = vmatprep.subr.mxu0 0.0
      %1249 = vmatpush2.msra.mxu0 0.0
      %1250 = vmatprep.subr.mxu0 0.0
      %1251 = vmatpush2.msra.mxu0 0.0
      %1252 = vmatprep.subr.mxu0 0.0
      %1253 = vmatpush2.msra.mxu0 0.0
      %1254 = vmatprep.subr.mxu0 0.0
      %1255 = vmatpush2.msra.mxu0 0.0
      %1256 = vmatprep.subr.mxu0 0.0
      %1257 = vmatpush2.msra.mxu0 0.0
      %1258 = vmatprep.subr.mxu0 0.0
      %1259 = vmatpush2.msra.mxu0 0.0
      %1260 = vmatprep.subr.mxu0 0.0
      %1261 = vmatpush2.msra.mxu0 0.0
      %1262 = vmatprep.subr.mxu0 0.0
      %1263 = vmatpush2.msra.mxu0 0.0
      %1264 = vmatprep.subr.mxu0 0.0
      %1265 = vmatpush2.msra.mxu0 0.0
      %1266 = vmatprep.subr.mxu0 0.0
      %1267 = vmatpush2.msra.mxu0 0.0
      %1268 = vmatprep.subr.mxu0 0.0
      %1269 = vmatpush2.msra.mxu0 0.0
      %1270 = vmatprep.mubr.f32.mxu0 0.0
      %1271 = vmatmul.mubr.f32.gmra.mxu0 %v1204
      %v1272 = vpop.f32.mrf.mxu0
      %v1273 = vadd.f32 %v1200, %v1272
      %v1274 = vpop.f32.mrf.mxu0
      %1275 = vdwg.mxu0
      %1276 = vrot.lane.b32.xlu0 %v788, 112
      %v1277 = vpop.permute.xlu0 %1276
      %1278 = vrot.lane.b32.xlu0 %v788, 80
      %v1279 = vpop.permute.xlu0 %1278
      %v1280 = vsel %vm798, %v1277, 0
      %v1282 = vsel %vm798, %v1279, 0
      %1284 = vmatprep.subr.mxu0 0.0
      %1285 = vmatpush1.xpose.msra.mxu0 0.0
      %1286 = vmatprep.subr.mxu0 0.0
      %1287 = vmatpush1.xpose.msra.mxu0 0.0
      %1288 = vmatprep.subr.mxu0 0.0
      %1289 = vmatpush1.xpose.msra.mxu0 0.0
      %1290 = vmatprep.subr.mxu0 0.0
      %1291 = vmatpush1.xpose.msra.mxu0 0.0
      %1292 = vmatprep.subr.mxu0 0.0
      %1293 = vmatpush1.xpose.msra.mxu0 0.0
      %1294 = vmatprep.subr.mxu0 0.0
      %1295 = vmatpush1.xpose.msra.mxu0 0.0
      %1296 = vmatprep.subr.mxu0 0.0
      %1297 = vmatpush1.xpose.msra.mxu0 0.0
      %1298 = vmatprep.subr.mxu0 0.0
      %1299 = vmatpush1.xpose.msra.mxu0 0.0
      %1300 = vmatprep.subr.mxu0 0.0
      %1301 = vmatpush1.xpose.msra.mxu0 0.0
      %1302 = vmatprep.subr.mxu0 0.0
      %1303 = vmatpush1.xpose.msra.mxu0 0.0
      %1304 = vmatprep.subr.mxu0 0.0
      %1305 = vmatpush1.xpose.msra.mxu0 0.0
      %1306 = vmatprep.subr.mxu0 0.0
      %1307 = vmatpush1.xpose.msra.mxu0 0.0
      %1308 = vmatprep.subr.mxu0 0.0
      %1309 = vmatpush1.xpose.msra.mxu0 0.0
      %1310 = vmatprep.subr.mxu0 0.0
      %1311 = vmatpush1.xpose.msra.mxu0 0.0
      %1312 = vmatprep.subr.mxu0 0.0
      %1313 = vmatpush1.xpose.msra.mxu0 0.0
      %1314 = vmatprep.subr.mxu0 0.0
      %1315 = vmatpush1.xpose.msra.mxu0 %v1282
      %1316 = vmatprep.subr.mxu0 0.0
      %1317 = vmatpush2.xpose.msra.mxu0 0.0
      %1318 = vmatprep.subr.mxu0 0.0
      %1319 = vmatpush2.xpose.msra.mxu0 0.0
      %1320 = vmatprep.subr.mxu0 0.0
      %1321 = vmatpush2.xpose.msra.mxu0 0.0
      %1322 = vmatprep.subr.mxu0 0.0
      %1323 = vmatpush2.xpose.msra.mxu0 0.0
      %1324 = vmatprep.subr.mxu0 0.0
      %1325 = vmatpush2.xpose.msra.mxu0 0.0
      %1326 = vmatprep.subr.mxu0 0.0
      %1327 = vmatpush2.xpose.msra.mxu0 0.0
      %1328 = vmatprep.subr.mxu0 0.0
      %1329 = vmatpush2.xpose.msra.mxu0 0.0
      %1330 = vmatprep.subr.mxu0 0.0
      %1331 = vmatpush2.xpose.msra.mxu0 0.0
      %1332 = vmatprep.subr.mxu0 0.0
      %1333 = vmatpush2.xpose.msra.mxu0 0.0
      %1334 = vmatprep.subr.mxu0 0.0
      %1335 = vmatpush2.xpose.msra.mxu0 0.0
      %1336 = vmatprep.subr.mxu0 0.0
      %1337 = vmatpush2.xpose.msra.mxu0 0.0
      %1338 = vmatprep.subr.mxu0 0.0
      %1339 = vmatpush2.xpose.msra.mxu0 0.0
      %1340 = vmatprep.subr.mxu0 0.0
      %1341 = vmatpush2.xpose.msra.mxu0 0.0
      %1342 = vmatprep.subr.mxu0 0.0
      %1343 = vmatpush2.xpose.msra.mxu0 0.0
      %1344 = vmatprep.subr.mxu0 0.0
      %1345 = vmatpush2.xpose.msra.mxu0 0.0
      %1346 = vmatprep.subr.mxu0 0.0
      %1347 = vmatpush2.xpose.msra.mxu0 0.0
      %1348 = vmatprep.mubr.f32.mxu0 0.0
      %1349 = vmatmul.mubr.f32.gmra.mxu0 %v1280
      %v1350 = vpop.f32.mrf.mxu0
      %v1351 = vadd.f32 0.0, %v1350
      %v1352 = vpop.f32.mrf.mxu0
      %1353 = vdwg.mxu0
      %v1354 = vsel %vm873, %v1351, -inf
      %1355 = vmax.xlane.f32.xlu0 %v1354
      %v1356 = vpop.xlane.xlu0 %1355
      %v1357 = vsub.f32 %v1351, %v1356
      %v1358 = vmul.f32 %v1357, 1.442695
      %v1359 = vpow.pop %v1358
      %v1360 = vsel %vm873, %v1359, 0.0
      %1361 = vadd.xlane.f32.xlu0 %v1360
      %v1362 = vpop.xlane.xlu0 %1361
      %v1363 = vrcp.pop %v1362
      %v1364 = vmul.f32 %v1359, %v1363
      %1365 = vrot.lane.b32.xlu0 %v788, 48
      %v1366 = vpop.permute.xlu0 %1365
      %v1368 = vsel %vm887, %v1364, 0
      %v1370 = vsel %vm891, %v1366, 0
      %1372 = vmatprep.subr.mxu0 0.0
      %1373 = vmatpush1.msra.mxu0 0.0
      %1374 = vmatprep.subr.mxu0 0.0
      %1375 = vmatpush1.msra.mxu0 0.0
      %1376 = vmatprep.subr.mxu0 0.0
      %1377 = vmatpush1.msra.mxu0 0.0
      %1378 = vmatprep.subr.mxu0 0.0
      %1379 = vmatpush1.msra.mxu0 0.0
      %1380 = vmatprep.subr.mxu0 0.0
      %1381 = vmatpush1.msra.mxu0 0.0
      %1382 = vmatprep.subr.mxu0 0.0
      %1383 = vmatpush1.msra.mxu0 0.0
      %1384 = vmatprep.subr.mxu0 0.0
      %1385 = vmatpush1.msra.mxu0 0.0
      %1386 = vmatprep.subr.mxu0 0.0
      %1387 = vmatpush1.msra.mxu0 0.0
      %1388 = vmatprep.subr.mxu0 0.0
      %1389 = vmatpush1.msra.mxu0 0.0
      %1390 = vmatprep.subr.mxu0 0.0
      %1391 = vmatpush1.msra.mxu0 0.0
      %1392 = vmatprep.subr.mxu0 0.0
      %1393 = vmatpush1.msra.mxu0 0.0
      %1394 = vmatprep.subr.mxu0 0.0
      %1395 = vmatpush1.msra.mxu0 0.0
      %1396 = vmatprep.subr.mxu0 0.0
      %1397 = vmatpush1.msra.mxu0 0.0
      %1398 = vmatprep.subr.mxu0 0.0
      %1399 = vmatpush1.msra.mxu0 0.0
      %1400 = vmatprep.subr.mxu0 0.0
      %1401 = vmatpush1.msra.mxu0 0.0
      %1402 = vmatprep.subr.mxu0 0.0
      %1403 = vmatpush1.msra.mxu0 %v1370
      %1404 = vmatprep.subr.mxu0 0.0
      %1405 = vmatpush2.msra.mxu0 0.0
      %1406 = vmatprep.subr.mxu0 0.0
      %1407 = vmatpush2.msra.mxu0 0.0
      %1408 = vmatprep.subr.mxu0 0.0
      %1409 = vmatpush2.msra.mxu0 0.0
      %1410 = vmatprep.subr.mxu0 0.0
      %1411 = vmatpush2.msra.mxu0 0.0
      %1412 = vmatprep.subr.mxu0 0.0
      %1413 = vmatpush2.msra.mxu0 0.0
      %1414 = vmatprep.subr.mxu0 0.0
      %1415 = vmatpush2.msra.mxu0 0.0
      %1416 = vmatprep.subr.mxu0 0.0
      %1417 = vmatpush2.msra.mxu0 0.0
      %1418 = vmatprep.subr.mxu0 0.0
      %1419 = vmatpush2.msra.mxu0 0.0
      %1420 = vmatprep.subr.mxu0 0.0
      %1421 = vmatpush2.msra.mxu0 0.0
      %1422 = vmatprep.subr.mxu0 0.0
      %1423 = vmatpush2.msra.mxu0 0.0
      %1424 = vmatprep.subr.mxu0 0.0
      %1425 = vmatpush2.msra.mxu0 0.0
      %1426 = vmatprep.subr.mxu0 0.0
      %1427 = vmatpush2.msra.mxu0 0.0
      %1428 = vmatprep.subr.mxu0 0.0
      %1429 = vmatpush2.msra.mxu0 0.0
      %1430 = vmatprep.subr.mxu0 0.0
      %1431 = vmatpush2.msra.mxu0 0.0
      %1432 = vmatprep.subr.mxu0 0.0
      %1433 = vmatpush2.msra.mxu0 0.0
      %1434 = vmatprep.subr.mxu0 0.0
      %1435 = vmatpush2.msra.mxu0 0.0
      %1436 = vmatprep.mubr.f32.mxu0 0.0
      %1437 = vmatmul.mubr.f32.gmra.mxu0 %v1368
      %v1438 = vpop.f32.mrf.mxu0
      %v1439 = vadd.f32 0.0, %v1438
      %v1440 = vpop.f32.mrf.mxu0
      %1441 = vdwg.mxu0
      %v1443 = vsel %vm798, %v1439, 0
      %1445 = vmatprep.subr.mxu0 0.0
      %1446 = vmatpush1.msra.mxu0 0.0
      %1447 = vmatprep.subr.mxu0 0.0
      %1448 = vmatpush1.msra.mxu0 0.0
      %1449 = vmatprep.subr.mxu0 0.0
      %1450 = vmatpush1.msra.mxu0 0.0
      %1451 = vmatprep.subr.mxu0 0.0
      %1452 = vmatpush1.msra.mxu0 0.0
      %1453 = vmatprep.subr.mxu0 0.0
      %1454 = vmatpush1.msra.mxu0 0.0
      %1455 = vmatprep.subr.mxu0 0.0
      %1456 = vmatpush1.msra.mxu0 0.0
      %1457 = vmatprep.subr.mxu0 0.0
      %1458 = vmatpush1.msra.mxu0 0.0
      %1459 = vmatprep.subr.mxu0 0.0
      %1460 = vmatpush1.msra.mxu0 0.0
      %1461 = vmatprep.subr.mxu0 0.0
      %1462 = vmatpush1.msra.mxu0 0.0
      %1463 = vmatprep.subr.mxu0 0.0
      %1464 = vmatpush1.msra.mxu0 0.0
      %1465 = vmatprep.subr.mxu0 0.0
      %1466 = vmatpush1.msra.mxu0 0.0
      %1467 = vmatprep.subr.mxu0 0.0
      %1468 = vmatpush1.msra.mxu0 0.0
      %1469 = vmatprep.subr.mxu0 0.0
      %1470 = vmatpush1.msra.mxu0 0.0
      %1471 = vmatprep.subr.mxu0 0.0
      %1472 = vmatpush1.msra.mxu0 0.0
      %1473 = vmatprep.subr.mxu0 0.0
      %1474 = vmatpush1.msra.mxu0 0.0
      %1475 = vmatprep.subr.mxu0 0.0
      %1476 = vmatpush1.msra.mxu0 %v793
      %1477 = vmatprep.subr.mxu0 0.0
      %1478 = vmatpush2.msra.mxu0 0.0
      %1479 = vmatprep.subr.mxu0 0.0
      %1480 = vmatpush2.msra.mxu0 0.0
      %1481 = vmatprep.subr.mxu0 0.0
      %1482 = vmatpush2.msra.mxu0 0.0
      %1483 = vmatprep.subr.mxu0 0.0
      %1484 = vmatpush2.msra.mxu0 0.0
      %1485 = vmatprep.subr.mxu0 0.0
      %1486 = vmatpush2.msra.mxu0 0.0
      %1487 = vmatprep.subr.mxu0 0.0
      %1488 = vmatpush2.msra.mxu0 0.0
      %1489 = vmatprep.subr.mxu0 0.0
      %1490 = vmatpush2.msra.mxu0 0.0
      %1491 = vmatprep.subr.mxu0 0.0
      %1492 = vmatpush2.msra.mxu0 0.0
      %1493 = vmatprep.subr.mxu0 0.0
      %1494 = vmatpush2.msra.mxu0 0.0
      %1495 = vmatprep.subr.mxu0 0.0
      %1496 = vmatpush2.msra.mxu0 0.0
      %1497 = vmatprep.subr.mxu0 0.0
      %1498 = vmatpush2.msra.mxu0 0.0
      %1499 = vmatprep.subr.mxu0 0.0
      %1500 = vmatpush2.msra.mxu0 0.0
      %1501 = vmatprep.subr.mxu0 0.0
      %1502 = vmatpush2.msra.mxu0 0.0
      %1503 = vmatprep.subr.mxu0 0.0
      %1504 = vmatpush2.msra.mxu0 0.0
      %1505 = vmatprep.subr.mxu0 0.0
      %1506 = vmatpush2.msra.mxu0 0.0
      %1507 = vmatprep.subr.mxu0 0.0
      %1508 = vmatpush2.msra.mxu0 0.0
      %1509 = vmatprep.mubr.f32.mxu0 0.0
      %1510 = vmatmul.mubr.f32.gmra.mxu0 %v1443
      %v1511 = vpop.f32.mrf.mxu0
      %v1512 = vadd.f32 0.0, %v1511
      %v1513 = vpop.f32.mrf.mxu0
      %1514 = vdwg.mxu0
      %v1515 = vadd.f32 %v1273, %v1512
      %1516 = vrot.lane.b32.xlu0 %v788, 104
      %v1517 = vpop.permute.xlu0 %1516
      %1518 = vrot.lane.b32.xlu0 %v788, 72
      %v1519 = vpop.permute.xlu0 %1518
      %v1520 = vsel %vm798, %v1517, 0
      %v1522 = vsel %vm798, %v1519, 0
      %1524 = vmatprep.subr.mxu0 0.0
      %1525 = vmatpush1.xpose.msra.mxu0 0.0
      %1526 = vmatprep.subr.mxu0 0.0
      %1527 = vmatpush1.xpose.msra.mxu0 0.0
      %1528 = vmatprep.subr.mxu0 0.0
      %1529 = vmatpush1.xpose.msra.mxu0 0.0
      %1530 = vmatprep.subr.mxu0 0.0
      %1531 = vmatpush1.xpose.msra.mxu0 0.0
      %1532 = vmatprep.subr.mxu0 0.0
      %1533 = vmatpush1.xpose.msra.mxu0 0.0
      %1534 = vmatprep.subr.mxu0 0.0
      %1535 = vmatpush1.xpose.msra.mxu0 0.0
      %1536 = vmatprep.subr.mxu0 0.0
      %1537 = vmatpush1.xpose.msra.mxu0 0.0
      %1538 = vmatprep.subr.mxu0 0.0
      %1539 = vmatpush1.xpose.msra.mxu0 0.0
      %1540 = vmatprep.subr.mxu0 0.0
      %1541 = vmatpush1.xpose.msra.mxu0 0.0
      %1542 = vmatprep.subr.mxu0 0.0
      %1543 = vmatpush1.xpose.msra.mxu0 0.0
      %1544 = vmatprep.subr.mxu0 0.0
      %1545 = vmatpush1.xpose.msra.mxu0 0.0
      %1546 = vmatprep.subr.mxu0 0.0
      %1547 = vmatpush1.xpose.msra.mxu0 0.0
      %1548 = vmatprep.subr.mxu0 0.0
      %1549 = vmatpush1.xpose.msra.mxu0 0.0
      %1550 = vmatprep.subr.mxu0 0.0
      %1551 = vmatpush1.xpose.msra.mxu0 0.0
      %1552 = vmatprep.subr.mxu0 0.0
      %1553 = vmatpush1.xpose.msra.mxu0 0.0
      %1554 = vmatprep.subr.mxu0 0.0
      %1555 = vmatpush1.xpose.msra.mxu0 %v1522
      %1556 = vmatprep.subr.mxu0 0.0
      %1557 = vmatpush2.xpose.msra.mxu0 0.0
      %1558 = vmatprep.subr.mxu0 0.0
      %1559 = vmatpush2.xpose.msra.mxu0 0.0
      %1560 = vmatprep.subr.mxu0 0.0
      %1561 = vmatpush2.xpose.msra.mxu0 0.0
      %1562 = vmatprep.subr.mxu0 0.0
      %1563 = vmatpush2.xpose.msra.mxu0 0.0
      %1564 = vmatprep.subr.mxu0 0.0
      %1565 = vmatpush2.xpose.msra.mxu0 0.0
      %1566 = vmatprep.subr.mxu0 0.0
      %1567 = vmatpush2.xpose.msra.mxu0 0.0
      %1568 = vmatprep.subr.mxu0 0.0
      %1569 = vmatpush2.xpose.msra.mxu0 0.0
      %1570 = vmatprep.subr.mxu0 0.0
      %1571 = vmatpush2.xpose.msra.mxu0 0.0
      %1572 = vmatprep.subr.mxu0 0.0
      %1573 = vmatpush2.xpose.msra.mxu0 0.0
      %1574 = vmatprep.subr.mxu0 0.0
      %1575 = vmatpush2.xpose.msra.mxu0 0.0
      %1576 = vmatprep.subr.mxu0 0.0
      %1577 = vmatpush2.xpose.msra.mxu0 0.0
      %1578 = vmatprep.subr.mxu0 0.0
      %1579 = vmatpush2.xpose.msra.mxu0 0.0
      %1580 = vmatprep.subr.mxu0 0.0
      %1581 = vmatpush2.xpose.msra.mxu0 0.0
      %1582 = vmatprep.subr.mxu0 0.0
      %1583 = vmatpush2.xpose.msra.mxu0 0.0
      %1584 = vmatprep.subr.mxu0 0.0
      %1585 = vmatpush2.xpose.msra.mxu0 0.0
      %1586 = vmatprep.subr.mxu0 0.0
      %1587 = vmatpush2.xpose.msra.mxu0 0.0
      %1588 = vmatprep.mubr.f32.mxu0 0.0
      %1589 = vmatmul.mubr.f32.gmra.mxu0 %v1520
      %v1590 = vpop.f32.mrf.mxu0
      %v1591 = vadd.f32 0.0, %v1590
      %v1592 = vpop.f32.mrf.mxu0
      %1593 = vdwg.mxu0
      %v1594 = vsel %vm873, %v1591, -inf
      %1595 = vmax.xlane.f32.xlu0 %v1594
      %v1596 = vpop.xlane.xlu0 %1595
      %v1597 = vsub.f32 %v1591, %v1596
      %v1598 = vmul.f32 %v1597, 1.442695
      %v1599 = vpow.pop %v1598
      %v1600 = vsel %vm873, %v1599, 0.0
      %1601 = vadd.xlane.f32.xlu0 %v1600
      %v1602 = vpop.xlane.xlu0 %1601
      %v1603 = vrcp.pop %v1602
      %v1604 = vmul.f32 %v1599, %v1603
      %1605 = vrot.lane.b32.xlu0 %v788, 40
      %v1606 = vpop.permute.xlu0 %1605
      %v1608 = vsel %vm887, %v1604, 0
      %v1610 = vsel %vm891, %v1606, 0
      %1612 = vmatprep.subr.mxu0 0.0
      %1613 = vmatpush1.msra.mxu0 0.0
      %1614 = vmatprep.subr.mxu0 0.0
      %1615 = vmatpush1.msra.mxu0 0.0
      %1616 = vmatprep.subr.mxu0 0.0
      %1617 = vmatpush1.msra.mxu0 0.0
      %1618 = vmatprep.subr.mxu0 0.0
      %1619 = vmatpush1.msra.mxu0 0.0
      %1620 = vmatprep.subr.mxu0 0.0
      %1621 = vmatpush1.msra.mxu0 0.0
      %1622 = vmatprep.subr.mxu0 0.0
      %1623 = vmatpush1.msra.mxu0 0.0
      %1624 = vmatprep.subr.mxu0 0.0
      %1625 = vmatpush1.msra.mxu0 0.0
      %1626 = vmatprep.subr.mxu0 0.0
      %1627 = vmatpush1.msra.mxu0 0.0
      %1628 = vmatprep.subr.mxu0 0.0
      %1629 = vmatpush1.msra.mxu0 0.0
      %1630 = vmatprep.subr.mxu0 0.0
      %1631 = vmatpush1.msra.mxu0 0.0
      %1632 = vmatprep.subr.mxu0 0.0
      %1633 = vmatpush1.msra.mxu0 0.0
      %1634 = vmatprep.subr.mxu0 0.0
      %1635 = vmatpush1.msra.mxu0 0.0
      %1636 = vmatprep.subr.mxu0 0.0
      %1637 = vmatpush1.msra.mxu0 0.0
      %1638 = vmatprep.subr.mxu0 0.0
      %1639 = vmatpush1.msra.mxu0 0.0
      %1640 = vmatprep.subr.mxu0 0.0
      %1641 = vmatpush1.msra.mxu0 0.0
      %1642 = vmatprep.subr.mxu0 0.0
      %1643 = vmatpush1.msra.mxu0 %v1610
      %1644 = vmatprep.subr.mxu0 0.0
      %1645 = vmatpush2.msra.mxu0 0.0
      %1646 = vmatprep.subr.mxu0 0.0
      %1647 = vmatpush2.msra.mxu0 0.0
      %1648 = vmatprep.subr.mxu0 0.0
      %1649 = vmatpush2.msra.mxu0 0.0
      %1650 = vmatprep.subr.mxu0 0.0
      %1651 = vmatpush2.msra.mxu0 0.0
      %1652 = vmatprep.subr.mxu0 0.0
      %1653 = vmatpush2.msra.mxu0 0.0
      %1654 = vmatprep.subr.mxu0 0.0
      %1655 = vmatpush2.msra.mxu0 0.0
      %1656 = vmatprep.subr.mxu0 0.0
      %1657 = vmatpush2.msra.mxu0 0.0
      %1658 = vmatprep.subr.mxu0 0.0
      %1659 = vmatpush2.msra.mxu0 0.0
      %1660 = vmatprep.subr.mxu0 0.0
      %1661 = vmatpush2.msra.mxu0 0.0
      %1662 = vmatprep.subr.mxu0 0.0
      %1663 = vmatpush2.msra.mxu0 0.0
      %1664 = vmatprep.subr.mxu0 0.0
      %1665 = vmatpush2.msra.mxu0 0.0
      %1666 = vmatprep.subr.mxu0 0.0
      %1667 = vmatpush2.msra.mxu0 0.0
      %1668 = vmatprep.subr.mxu0 0.0
      %1669 = vmatpush2.msra.mxu0 0.0
      %1670 = vmatprep.subr.mxu0 0.0
      %1671 = vmatpush2.msra.mxu0 0.0
      %1672 = vmatprep.subr.mxu0 0.0
      %1673 = vmatpush2.msra.mxu0 0.0
      %1674 = vmatprep.subr.mxu0 0.0
      %1675 = vmatpush2.msra.mxu0 0.0
      %1676 = vmatprep.mubr.f32.mxu0 0.0
      %1677 = vmatmul.mubr.f32.gmra.mxu0 %v1608
      %v1678 = vpop.f32.mrf.mxu0
      %v1679 = vadd.f32 0.0, %v1678
      %v1680 = vpop.f32.mrf.mxu0
      %1681 = vdwg.mxu0
      %v1683 = vsel %vm798, %v1679, 0
      %1685 = vmatprep.subr.mxu0 0.0
      %1686 = vmatpush1.msra.mxu0 0.0
      %1687 = vmatprep.subr.mxu0 0.0
      %1688 = vmatpush1.msra.mxu0 0.0
      %1689 = vmatprep.subr.mxu0 0.0
      %1690 = vmatpush1.msra.mxu0 0.0
      %1691 = vmatprep.subr.mxu0 0.0
      %1692 = vmatpush1.msra.mxu0 0.0
      %1693 = vmatprep.subr.mxu0 0.0
      %1694 = vmatpush1.msra.mxu0 0.0
      %1695 = vmatprep.subr.mxu0 0.0
      %1696 = vmatpush1.msra.mxu0 0.0
      %1697 = vmatprep.subr.mxu0 0.0
      %1698 = vmatpush1.msra.mxu0 0.0
      %1699 = vmatprep.subr.mxu0 0.0
      %1700 = vmatpush1.msra.mxu0 0.0
      %1701 = vmatprep.subr.mxu0 0.0
      %1702 = vmatpush1.msra.mxu0 0.0
      %1703 = vmatprep.subr.mxu0 0.0
      %1704 = vmatpush1.msra.mxu0 0.0
      %1705 = vmatprep.subr.mxu0 0.0
      %1706 = vmatpush1.msra.mxu0 0.0
      %1707 = vmatprep.subr.mxu0 0.0
      %1708 = vmatpush1.msra.mxu0 0.0
      %1709 = vmatprep.subr.mxu0 0.0
      %1710 = vmatpush1.msra.mxu0 0.0
      %1711 = vmatprep.subr.mxu0 0.0
      %1712 = vmatpush1.msra.mxu0 0.0
      %1713 = vmatprep.subr.mxu0 0.0
      %1714 = vmatpush1.msra.mxu0 0.0
      %1715 = vmatprep.subr.mxu0 0.0
      %1716 = vmatpush1.msra.mxu0 %v794
      %1717 = vmatprep.subr.mxu0 0.0
      %1718 = vmatpush2.msra.mxu0 0.0
      %1719 = vmatprep.subr.mxu0 0.0
      %1720 = vmatpush2.msra.mxu0 0.0
      %1721 = vmatprep.subr.mxu0 0.0
      %1722 = vmatpush2.msra.mxu0 0.0
      %1723 = vmatprep.subr.mxu0 0.0
      %1724 = vmatpush2.msra.mxu0 0.0
      %1725 = vmatprep.subr.mxu0 0.0
      %1726 = vmatpush2.msra.mxu0 0.0
      %1727 = vmatprep.subr.mxu0 0.0
      %1728 = vmatpush2.msra.mxu0 0.0
      %1729 = vmatprep.subr.mxu0 0.0
      %1730 = vmatpush2.msra.mxu0 0.0
      %1731 = vmatprep.subr.mxu0 0.0
      %1732 = vmatpush2.msra.mxu0 0.0
      %1733 = vmatprep.subr.mxu0 0.0
      %1734 = vmatpush2.msra.mxu0 0.0
      %1735 = vmatprep.subr.mxu0 0.0
      %1736 = vmatpush2.msra.mxu0 0.0
      %1737 = vmatprep.subr.mxu0 0.0
      %1738 = vmatpush2.msra.mxu0 0.0
      %1739 = vmatprep.subr.mxu0 0.0
      %1740 = vmatpush2.msra.mxu0 0.0
      %1741 = vmatprep.subr.mxu0 0.0
      %1742 = vmatpush2.msra.mxu0 0.0
      %1743 = vmatprep.subr.mxu0 0.0
      %1744 = vmatpush2.msra.mxu0 0.0
      %1745 = vmatprep.subr.mxu0 0.0
      %1746 = vmatpush2.msra.mxu0 0.0
      %1747 = vmatprep.subr.mxu0 0.0
      %1748 = vmatpush2.msra.mxu0 0.0
      %1749 = vmatprep.mubr.f32.mxu0 0.0
      %1750 = vmatmul.mubr.f32.gmra.mxu0 %v1683
      %v1751 = vpop.f32.mrf.mxu0
      %v1752 = vadd.f32 0.0, %v1751
      %v1753 = vpop.f32.mrf.mxu0
      %1754 = vdwg.mxu0
      %v1755 = vadd.f32 %v1515, %v1752
      %v1756 = vadd.f32 %v680, %v1755
      %v1757 = vld [vmem:[%s9] sm:$0x1]
      %v1759 = vlaneseq
      %v1760 = vshrl.u32 %v1759, 7
      %v1761 = vsub.s32 0, %v1760
      %v1762 = vrot.slane %v1757, %v1761
      %v1764 = vadd.f32 %v1756, %v1762
      %v1765 = vld [vmem:[%s10] sm:$0x1]
      %v1766 = vld [vmem:[%s11] sm:$0x1]
      %v1767 = vsel %vm683, %v1764, 0.0
      %1768 = vadd.xlane.f32.xlu0 %v1767
      %v1769 = vpop.xlane.xlu0 %1768
      %v1770 = vmul.f32 %v1769, %v687
      %v1771 = vsub.f32 %v1764, %v1770
      %v1772 = vmul.f32 %v1771, %v1771
      %v1773 = vsel %vm683, %v1772, 0.0
      %1774 = vadd.xlane.f32.xlu0 %v1773
      %v1775 = vpop.xlane.xlu0 %1774
      %v1776 = vmul.f32 %v1775, %v687
      %v1777 = vadd.f32 %v1776, 1e-06
      %v1778 = vrsqrt.pop %v1777
      %v1779 = vmul.f32 %v1771, %v1778
      %v1781 = vlaneseq
      %v1782 = vshrl.u32 %v1781, 7
      %v1783 = vsub.s32 0, %v1782
      %v1784 = vrot.slane %v1765, %v1783
      %v1786 = vmul.f32 %v1779, %v1784
      %v1788 = vlaneseq
      %v1789 = vshrl.u32 %v1788, 7
      %v1790 = vsub.s32 0, %v1789
      %v1791 = vrot.slane %v1766, %v1790
      %v1793 = vadd.f32 %v1786, %v1791
      %v1794 = vld [vmem:[%s12] sm:$0xff]
      %v1795 = vld [vmem:[%s12 + $0x8] sm:$0xff]
      %v1796 = vld [vmem:[%s12 + $0x10] sm:$0xff]
      %v1797 = vld [vmem:[%s12 + $0x18] sm:$0xff]
      %v1798 = vld [vmem:[%s13] sm:$0x1]
      %v1800 = vlaneseq
      %v1801 = vshrl.u32 %v1800, 7
      %v1802 = vsub.s32 0, %v1801
      %v1803 = vrot.slane %v1798, %v1802
      %v1806 = vsel %vm717, %v1793, 0
      %1808 = vmatprep.subr.mxu0 0.0
      %1809 = vmatpush1.msra.mxu0 0.0
      %1810 = vmatprep.subr.mxu0 0.0
      %1811 = vmatpush1.msra.mxu0 0.0
      %1812 = vmatprep.subr.mxu0 0.0
      %1813 = vmatpush1.msra.mxu0 0.0
      %1814 = vmatprep.subr.mxu0 0.0
      %1815 = vmatpush1.msra.mxu0 0.0
      %1816 = vmatprep.subr.mxu0 0.0
      %1817 = vmatpush1.msra.mxu0 0.0
      %1818 = vmatprep.subr.mxu0 0.0
      %1819 = vmatpush1.msra.mxu0 0.0
      %1820 = vmatprep.subr.mxu0 0.0
      %1821 = vmatpush1.msra.mxu0 0.0
      %1822 = vmatprep.subr.mxu0 0.0
      %1823 = vmatpush1.msra.mxu0 0.0
      %1824 = vmatprep.subr.mxu0 0.0
      %1825 = vmatpush1.msra.mxu0 0.0
      %1826 = vmatprep.subr.mxu0 0.0
      %1827 = vmatpush1.msra.mxu0 0.0
      %1828 = vmatprep.subr.mxu0 0.0
      %1829 = vmatpush1.msra.mxu0 0.0
      %1830 = vmatprep.subr.mxu0 0.0
      %1831 = vmatpush1.msra.mxu0 0.0
      %1832 = vmatprep.subr.mxu0 0.0
      %1833 = vmatpush1.msra.mxu0 %v1797
      %1834 = vmatprep.subr.mxu0 0.0
      %1835 = vmatpush1.msra.mxu0 %v1796
      %1836 = vmatprep.subr.mxu0 0.0
      %1837 = vmatpush1.msra.mxu0 %v1795
      %1838 = vmatprep.subr.mxu0 0.0
      %1839 = vmatpush1.msra.mxu0 %v1794
      %1840 = vmatprep.subr.mxu0 0.0
      %1841 = vmatpush2.msra.mxu0 0.0
      %1842 = vmatprep.subr.mxu0 0.0
      %1843 = vmatpush2.msra.mxu0 0.0
      %1844 = vmatprep.subr.mxu0 0.0
      %1845 = vmatpush2.msra.mxu0 0.0
      %1846 = vmatprep.subr.mxu0 0.0
      %1847 = vmatpush2.msra.mxu0 0.0
      %1848 = vmatprep.subr.mxu0 0.0
      %1849 = vmatpush2.msra.mxu0 0.0
      %1850 = vmatprep.subr.mxu0 0.0
      %1851 = vmatpush2.msra.mxu0 0.0
      %1852 = vmatprep.subr.mxu0 0.0
      %1853 = vmatpush2.msra.mxu0 0.0
      %1854 = vmatprep.subr.mxu0 0.0
      %1855 = vmatpush2.msra.mxu0 0.0
      %1856 = vmatprep.subr.mxu0 0.0
      %1857 = vmatpush2.msra.mxu0 0.0
      %1858 = vmatprep.subr.mxu0 0.0
      %1859 = vmatpush2.msra.mxu0 0.0
      %1860 = vmatprep.subr.mxu0 0.0
      %1861 = vmatpush2.msra.mxu0 0.0
      %1862 = vmatprep.subr.mxu0 0.0
      %1863 = vmatpush2.msra.mxu0 0.0
      %1864 = vmatprep.subr.mxu0 0.0
      %1865 = vmatpush2.msra.mxu0 0.0
      %1866 = vmatprep.subr.mxu0 0.0
      %1867 = vmatpush2.msra.mxu0 0.0
      %1868 = vmatprep.subr.mxu0 0.0
      %1869 = vmatpush2.msra.mxu0 0.0
      %1870 = vmatprep.subr.mxu0 0.0
      %1871 = vmatpush2.msra.mxu0 0.0
      %1872 = vmatprep.mubr.f32.mxu0 0.0
      %1873 = vmatmul.mubr.f32.gmra.mxu0 %v1806
      %v1874 = vpop.f32.mrf.mxu0
      %v1875 = vadd.f32 %v1803, %v1874
      %v1876 = vpop.f32.mrf.mxu0
      %1877 = vdwg.mxu0
      %v1878 = vmul.f32 %v1875, 0.5
      %v1879 = vmul.f32 %v1875, 0.70710677
      %v1880 = verf.f32.pop %v1879
      %v1881 = vadd.f32 %v1880, 1.0
      %v1882 = vmul.f32 %v1878, %v1881
      %v1883 = vld [vmem:[%s14] sm:$0xff]
      %v1884 = vld [vmem:[%s14 + $0x8] sm:$0xff]
      %v1885 = vld [vmem:[%s14 + $0x10] sm:$0xff]
      %v1886 = vld [vmem:[%s14 + $0x18] sm:$0xff]
      %v1887 = vld [vmem:[%s14 + $0x20] sm:$0xff]
      %v1888 = vld [vmem:[%s14 + $0x28] sm:$0xff]
      %v1889 = vld [vmem:[%s14 + $0x30] sm:$0xff]
      %v1890 = vld [vmem:[%s14 + $0x38] sm:$0xff]
      %v1891 = vld [vmem:[%s15] sm:$0x1]
      %v1893 = vlaneseq
      %v1894 = vshrl.u32 %v1893, 7
      %v1895 = vsub.s32 0, %v1894
      %v1896 = vrot.slane %v1891, %v1895
      %v1899 = vsel %vm602, %v1882, 0
      %1901 = vmatprep.subr.mxu0 0.0
      %1902 = vmatpush1.msra.mxu0 0.0
      %1903 = vmatprep.subr.mxu0 0.0
      %1904 = vmatpush1.msra.mxu0 0.0
      %1905 = vmatprep.subr.mxu0 0.0
      %1906 = vmatpush1.msra.mxu0 0.0
      %1907 = vmatprep.subr.mxu0 0.0
      %1908 = vmatpush1.msra.mxu0 0.0
      %1909 = vmatprep.subr.mxu0 0.0
      %1910 = vmatpush1.msra.mxu0 0.0
      %1911 = vmatprep.subr.mxu0 0.0
      %1912 = vmatpush1.msra.mxu0 0.0
      %1913 = vmatprep.subr.mxu0 0.0
      %1914 = vmatpush1.msra.mxu0 0.0
      %1915 = vmatprep.subr.mxu0 0.0
      %1916 = vmatpush1.msra.mxu0 0.0
      %1917 = vmatprep.subr.mxu0 0.0
      %1918 = vmatpush1.msra.mxu0 %v1890
      %1919 = vmatprep.subr.mxu0 0.0
      %1920 = vmatpush1.msra.mxu0 %v1889
      %1921 = vmatprep.subr.mxu0 0.0
      %1922 = vmatpush1.msra.mxu0 %v1888
      %1923 = vmatprep.subr.mxu0 0.0
      %1924 = vmatpush1.msra.mxu0 %v1887
      %1925 = vmatprep.subr.mxu0 0.0
      %1926 = vmatpush1.msra.mxu0 %v1886
      %1927 = vmatprep.subr.mxu0 0.0
      %1928 = vmatpush1.msra.mxu0 %v1885
      %1929 = vmatprep.subr.mxu0 0.0
      %1930 = vmatpush1.msra.mxu0 %v1884
      %1931 = vmatprep.subr.mxu0 0.0
      %1932 = vmatpush1.msra.mxu0 %v1883
      %1933 = vmatprep.subr.mxu0 0.0
      %1934 = vmatpush2.msra.mxu0 0.0
      %1935 = vmatprep.subr.mxu0 0.0
      %1936 = vmatpush2.msra.mxu0 0.0
      %1937 = vmatprep.subr.mxu0 0.0
      %1938 = vmatpush2.msra.mxu0 0.0
      %1939 = vmatprep.subr.mxu0 0.0
      %1940 = vmatpush2.msra.mxu0 0.0
      %1941 = vmatprep.subr.mxu0 0.0
      %1942 = vmatpush2.msra.mxu0 0.0
      %1943 = vmatprep.subr.mxu0 0.0
      %1944 = vmatpush2.msra.mxu0 0.0
      %1945 = vmatprep.subr.mxu0 0.0
      %1946 = vmatpush2.msra.mxu0 0.0
      %1947 = vmatprep.subr.mxu0 0.0
      %1948 = vmatpush2.msra.mxu0 0.0
      %1949 = vmatprep.subr.mxu0 0.0
      %1950 = vmatpush2.msra.mxu0 0.0
      %1951 = vmatprep.subr.mxu0 0.0
      %1952 = vmatpush2.msra.mxu0 0.0
      %1953 = vmatprep.subr.mxu0 0.0
      %1954 = vmatpush2.msra.mxu0 0.0
      %1955 = vmatprep.subr.mxu0 0.0
      %1956 = vmatpush2.msra.mxu0 0.0
      %1957 = vmatprep.subr.mxu0 0.0
      %1958 = vmatpush2.msra.mxu0 0.0
      %1959 = vmatprep.subr.mxu0 0.0
      %1960 = vmatpush2.msra.mxu0 0.0
      %1961 = vmatprep.subr.mxu0 0.0
      %1962 = vmatpush2.msra.mxu0 0.0
      %1963 = vmatprep.subr.mxu0 0.0
      %1964 = vmatpush2.msra.mxu0 0.0
      %1965 = vmatprep.mubr.f32.mxu0 0.0
      %1966 = vmatmul.mubr.f32.gmra.mxu0 %v1899
      %v1967 = vpop.f32.mrf.mxu0
      %v1968 = vadd.f32 %v1896, %v1967
      %v1969 = vpop.f32.mrf.mxu0
      %1970 = vdwg.mxu0
      %v1971 = vadd.f32 %v1968, %v1764
      %s1972 = scalar_lea.vmem %s4, 1
      %v1973 = vld [vmem:[%s1972] sm:$0x1]
      %s1974 = scalar_lea.vmem %s5, 1
      %v1975 = vld [vmem:[%s1974] sm:$0x1]
      %v1976 = vsel %vm683, %v1971, 0.0
      %1977 = vadd.xlane.f32.xlu0 %v1976
      %v1978 = vpop.xlane.xlu0 %1977
      %v1979 = vmul.f32 %v1978, %v687
      %v1980 = vsub.f32 %v1971, %v1979
      %v1981 = vmul.f32 %v1980, %v1980
      %v1982 = vsel %vm683, %v1981, 0.0
      %1983 = vadd.xlane.f32.xlu0 %v1982
      %v1984 = vpop.xlane.xlu0 %1983
      %v1985 = vmul.f32 %v1984, %v687
      %v1986 = vadd.f32 %v1985, 1e-06
      %v1987 = vrsqrt.pop %v1986
      %v1988 = vmul.f32 %v1980, %v1987
      %v1990 = vlaneseq
      %v1991 = vshrl.u32 %v1990, 7
      %v1992 = vsub.s32 0, %v1991
      %v1993 = vrot.slane %v1973, %v1992
      %v1995 = vmul.f32 %v1988, %v1993
      %v1997 = vlaneseq
      %v1998 = vshrl.u32 %v1997, 7
      %v1999 = vsub.s32 0, %v1998
      %v2000 = vrot.slane %v1975, %v1999
      %v2002 = vadd.f32 %v1995, %v2000
      %s2003 = scalar_lea.vmem %s6, 32
      %v2004 = vld [vmem:[%s2003] sm:$0xff]
      %v2005 = vld [vmem:[%s2003 + $0x8] sm:$0xff]
      %v2006 = vld [vmem:[%s2003 + $0x10] sm:$0xff]
      %v2007 = vld [vmem:[%s2003 + $0x18] sm:$0xff]
      %s2008 = scalar_lea.vmem %s7, 8
      %v2009 = vld [vmem:[%s2008] sm:$0x1f]
      %v2011 = vsel %vm717, %v2002, 0
      %2013 = vmatprep.subr.mxu0 0.0
      %2014 = vmatpush1.msra.mxu0 0.0
      %2015 = vmatprep.subr.mxu0 0.0
      %2016 = vmatpush1.msra.mxu0 0.0
      %2017 = vmatprep.subr.mxu0 0.0
      %2018 = vmatpush1.msra.mxu0 0.0
      %2019 = vmatprep.subr.mxu0 0.0
      %2020 = vmatpush1.msra.mxu0 0.0
      %2021 = vmatprep.subr.mxu0 0.0
      %2022 = vmatpush1.msra.mxu0 0.0
      %2023 = vmatprep.subr.mxu0 0.0
      %2024 = vmatpush1.msra.mxu0 0.0
      %2025 = vmatprep.subr.mxu0 0.0
      %2026 = vmatpush1.msra.mxu0 0.0
      %2027 = vmatprep.subr.mxu0 0.0
      %2028 = vmatpush1.msra.mxu0 0.0
      %2029 = vmatprep.subr.mxu0 0.0
      %2030 = vmatpush1.msra.mxu0 0.0
      %2031 = vmatprep.subr.mxu0 0.0
      %2032 = vmatpush1.msra.mxu0 0.0
      %2033 = vmatprep.subr.mxu0 0.0
      %2034 = vmatpush1.msra.mxu0 0.0
      %2035 = vmatprep.subr.mxu0 0.0
      %2036 = vmatpush1.msra.mxu0 0.0
      %2037 = vmatprep.subr.mxu0 0.0
      %2038 = vmatpush1.msra.mxu0 %v2007
      %2039 = vmatprep.subr.mxu0 0.0
      %2040 = vmatpush1.msra.mxu0 %v2006
      %2041 = vmatprep.subr.mxu0 0.0
      %2042 = vmatpush1.msra.mxu0 %v2005
      %2043 = vmatprep.subr.mxu0 0.0
      %2044 = vmatpush1.msra.mxu0 %v2004
      %2045 = vmatprep.subr.mxu0 0.0
      %2046 = vmatpush2.msra.mxu0 0.0
      %2047 = vmatprep.subr.mxu0 0.0
      %2048 = vmatpush2.msra.mxu0 0.0
      %2049 = vmatprep.subr.mxu0 0.0
      %2050 = vmatpush2.msra.mxu0 0.0
      %2051 = vmatprep.subr.mxu0 0.0
      %2052 = vmatpush2.msra.mxu0 0.0
      %2053 = vmatprep.subr.mxu0 0.0
      %2054 = vmatpush2.msra.mxu0 0.0
      %2055 = vmatprep.subr.mxu0 0.0
      %2056 = vmatpush2.msra.mxu0 0.0
      %2057 = vmatprep.subr.mxu0 0.0
      %2058 = vmatpush2.msra.mxu0 0.0
      %2059 = vmatprep.subr.mxu0 0.0
      %2060 = vmatpush2.msra.mxu0 0.0
      %2061 = vmatprep.subr.mxu0 0.0
      %2062 = vmatpush2.msra.mxu0 0.0
      %2063 = vmatprep.subr.mxu0 0.0
      %2064 = vmatpush2.msra.mxu0 0.0
      %2065 = vmatprep.subr.mxu0 0.0
      %2066 = vmatpush2.msra.mxu0 0.0
      %2067 = vmatprep.subr.mxu0 0.0
      %2068 = vmatpush2.msra.mxu0 0.0
      %2069 = vmatprep.subr.mxu0 0.0
      %2070 = vmatpush2.msra.mxu0 0.0
      %2071 = vmatprep.subr.mxu0 0.0
      %2072 = vmatpush2.msra.mxu0 0.0
      %2073 = vmatprep.subr.mxu0 0.0
      %2074 = vmatpush2.msra.mxu0 0.0
      %2075 = vmatprep.subr.mxu0 0.0
      %2076 = vmatpush2.msra.mxu0 0.0
      %2077 = vmatprep.mubr.f32.mxu0 0.0
      %2078 = vmatmul.mubr.f32.gmra.mxu0 %v2011
      %v2079 = vpop.f32.mrf.mxu0
      %v2080 = vadd.f32 %v2009, %v2079
      %v2081 = vpop.f32.mrf.mxu0
      %2082 = vdwg.mxu0
      %s2083 = scalar_lea.vmem %s8, 32
      %v2084 = vld [vmem:[%s2083] sm:$0xff]
      %v2085 = vld [vmem:[%s2083 + $0x8] sm:$0xff]
      %v2086 = vld [vmem:[%s2083 + $0x10] sm:$0xff]
      %v2087 = vld [vmem:[%s2083 + $0x18] sm:$0xff]
      %2089 = vrot.lane.b32.xlu0 %v2080, 96
      %v2090 = vpop.permute.xlu0 %2089
      %v2091 = vsel %vm798, %v2080, 0
      %v2093 = vsel %vm798, %v2090, 0
      %2095 = vmatprep.subr.mxu0 0.0
      %2096 = vmatpush1.xpose.msra.mxu0 0.0
      %2097 = vmatprep.subr.mxu0 0.0
      %2098 = vmatpush1.xpose.msra.mxu0 0.0
      %2099 = vmatprep.subr.mxu0 0.0
      %2100 = vmatpush1.xpose.msra.mxu0 0.0
      %2101 = vmatprep.subr.mxu0 0.0
      %2102 = vmatpush1.xpose.msra.mxu0 0.0
      %2103 = vmatprep.subr.mxu0 0.0
      %2104 = vmatpush1.xpose.msra.mxu0 0.0
      %2105 = vmatprep.subr.mxu0 0.0
      %2106 = vmatpush1.xpose.msra.mxu0 0.0
      %2107 = vmatprep.subr.mxu0 0.0
      %2108 = vmatpush1.xpose.msra.mxu0 0.0
      %2109 = vmatprep.subr.mxu0 0.0
      %2110 = vmatpush1.xpose.msra.mxu0 0.0
      %2111 = vmatprep.subr.mxu0 0.0
      %2112 = vmatpush1.xpose.msra.mxu0 0.0
      %2113 = vmatprep.subr.mxu0 0.0
      %2114 = vmatpush1.xpose.msra.mxu0 0.0
      %2115 = vmatprep.subr.mxu0 0.0
      %2116 = vmatpush1.xpose.msra.mxu0 0.0
      %2117 = vmatprep.subr.mxu0 0.0
      %2118 = vmatpush1.xpose.msra.mxu0 0.0
      %2119 = vmatprep.subr.mxu0 0.0
      %2120 = vmatpush1.xpose.msra.mxu0 0.0
      %2121 = vmatprep.subr.mxu0 0.0
      %2122 = vmatpush1.xpose.msra.mxu0 0.0
      %2123 = vmatprep.subr.mxu0 0.0
      %2124 = vmatpush1.xpose.msra.mxu0 0.0
      %2125 = vmatprep.subr.mxu0 0.0
      %2126 = vmatpush1.xpose.msra.mxu0 %v2093
      %2127 = vmatprep.subr.mxu0 0.0
      %2128 = vmatpush2.xpose.msra.mxu0 0.0
      %2129 = vmatprep.subr.mxu0 0.0
      %2130 = vmatpush2.xpose.msra.mxu0 0.0
      %2131 = vmatprep.subr.mxu0 0.0
      %2132 = vmatpush2.xpose.msra.mxu0 0.0
      %2133 = vmatprep.subr.mxu0 0.0
      %2134 = vmatpush2.xpose.msra.mxu0 0.0
      %2135 = vmatprep.subr.mxu0 0.0
      %2136 = vmatpush2.xpose.msra.mxu0 0.0
      %2137 = vmatprep.subr.mxu0 0.0
      %2138 = vmatpush2.xpose.msra.mxu0 0.0
      %2139 = vmatprep.subr.mxu0 0.0
      %2140 = vmatpush2.xpose.msra.mxu0 0.0
      %2141 = vmatprep.subr.mxu0 0.0
      %2142 = vmatpush2.xpose.msra.mxu0 0.0
      %2143 = vmatprep.subr.mxu0 0.0
      %2144 = vmatpush2.xpose.msra.mxu0 0.0
      %2145 = vmatprep.subr.mxu0 0.0
      %2146 = vmatpush2.xpose.msra.mxu0 0.0
      %2147 = vmatprep.subr.mxu0 0.0
      %2148 = vmatpush2.xpose.msra.mxu0 0.0
      %2149 = vmatprep.subr.mxu0 0.0
      %2150 = vmatpush2.xpose.msra.mxu0 0.0
      %2151 = vmatprep.subr.mxu0 0.0
      %2152 = vmatpush2.xpose.msra.mxu0 0.0
      %2153 = vmatprep.subr.mxu0 0.0
      %2154 = vmatpush2.xpose.msra.mxu0 0.0
      %2155 = vmatprep.subr.mxu0 0.0
      %2156 = vmatpush2.xpose.msra.mxu0 0.0
      %2157 = vmatprep.subr.mxu0 0.0
      %2158 = vmatpush2.xpose.msra.mxu0 0.0
      %2159 = vmatprep.mubr.f32.mxu0 0.0
      %2160 = vmatmul.mubr.f32.gmra.mxu0 %v2091
      %v2161 = vpop.f32.mrf.mxu0
      %v2162 = vadd.f32 0.0, %v2161
      %v2163 = vpop.f32.mrf.mxu0
      %2164 = vdwg.mxu0
      %v2165 = vsel %vm873, %v2162, -inf
      %2166 = vmax.xlane.f32.xlu0 %v2165
      %v2167 = vpop.xlane.xlu0 %2166
      %v2168 = vsub.f32 %v2162, %v2167
      %v2169 = vmul.f32 %v2168, 1.442695
      %v2170 = vpow.pop %v2169
      %v2171 = vsel %vm873, %v2170, 0.0
      %2172 = vadd.xlane.f32.xlu0 %v2171
      %v2173 = vpop.xlane.xlu0 %2172
      %v2174 = vrcp.pop %v2173
      %v2175 = vmul.f32 %v2170, %v2174
      %2176 = vrot.lane.b32.xlu0 %v2080, 64
      %v2177 = vpop.permute.xlu0 %2176
      %v2179 = vsel %vm887, %v2175, 0
      %v2181 = vsel %vm891, %v2177, 0
      %2183 = vmatprep.subr.mxu0 0.0
      %2184 = vmatpush1.msra.mxu0 0.0
      %2185 = vmatprep.subr.mxu0 0.0
      %2186 = vmatpush1.msra.mxu0 0.0
      %2187 = vmatprep.subr.mxu0 0.0
      %2188 = vmatpush1.msra.mxu0 0.0
      %2189 = vmatprep.subr.mxu0 0.0
      %2190 = vmatpush1.msra.mxu0 0.0
      %2191 = vmatprep.subr.mxu0 0.0
      %2192 = vmatpush1.msra.mxu0 0.0
      %2193 = vmatprep.subr.mxu0 0.0
      %2194 = vmatpush1.msra.mxu0 0.0
      %2195 = vmatprep.subr.mxu0 0.0
      %2196 = vmatpush1.msra.mxu0 0.0
      %2197 = vmatprep.subr.mxu0 0.0
      %2198 = vmatpush1.msra.mxu0 0.0
      %2199 = vmatprep.subr.mxu0 0.0
      %2200 = vmatpush1.msra.mxu0 0.0
      %2201 = vmatprep.subr.mxu0 0.0
      %2202 = vmatpush1.msra.mxu0 0.0
      %2203 = vmatprep.subr.mxu0 0.0
      %2204 = vmatpush1.msra.mxu0 0.0
      %2205 = vmatprep.subr.mxu0 0.0
      %2206 = vmatpush1.msra.mxu0 0.0
      %2207 = vmatprep.subr.mxu0 0.0
      %2208 = vmatpush1.msra.mxu0 0.0
      %2209 = vmatprep.subr.mxu0 0.0
      %2210 = vmatpush1.msra.mxu0 0.0
      %2211 = vmatprep.subr.mxu0 0.0
      %2212 = vmatpush1.msra.mxu0 0.0
      %2213 = vmatprep.subr.mxu0 0.0
      %2214 = vmatpush1.msra.mxu0 %v2181
      %2215 = vmatprep.subr.mxu0 0.0
      %2216 = vmatpush2.msra.mxu0 0.0
      %2217 = vmatprep.subr.mxu0 0.0
      %2218 = vmatpush2.msra.mxu0 0.0
      %2219 = vmatprep.subr.mxu0 0.0
      %2220 = vmatpush2.msra.mxu0 0.0
      %2221 = vmatprep.subr.mxu0 0.0
      %2222 = vmatpush2.msra.mxu0 0.0
      %2223 = vmatprep.subr.mxu0 0.0
      %2224 = vmatpush2.msra.mxu0 0.0
      %2225 = vmatprep.subr.mxu0 0.0
      %2226 = vmatpush2.msra.mxu0 0.0
      %2227 = vmatprep.subr.mxu0 0.0
      %2228 = vmatpush2.msra.mxu0 0.0
      %2229 = vmatprep.subr.mxu0 0.0
      %2230 = vmatpush2.msra.mxu0 0.0
      %2231 = vmatprep.subr.mxu0 0.0
      %2232 = vmatpush2.msra.mxu0 0.0
      %2233 = vmatprep.subr.mxu0 0.0
      %2234 = vmatpush2.msra.mxu0 0.0
      %2235 = vmatprep.subr.mxu0 0.0
      %2236 = vmatpush2.msra.mxu0 0.0
      %2237 = vmatprep.subr.mxu0 0.0
      %2238 = vmatpush2.msra.mxu0 0.0
      %2239 = vmatprep.subr.mxu0 0.0
      %2240 = vmatpush2.msra.mxu0 0.0
      %2241 = vmatprep.subr.mxu0 0.0
      %2242 = vmatpush2.msra.mxu0 0.0
      %2243 = vmatprep.subr.mxu0 0.0
      %2244 = vmatpush2.msra.mxu0 0.0
      %2245 = vmatprep.subr.mxu0 0.0
      %2246 = vmatpush2.msra.mxu0 0.0
      %2247 = vmatprep.mubr.f32.mxu0 0.0
      %2248 = vmatmul.mubr.f32.gmra.mxu0 %v2179
      %v2249 = vpop.f32.mrf.mxu0
      %v2250 = vadd.f32 0.0, %v2249
      %v2251 = vpop.f32.mrf.mxu0
      %2252 = vdwg.mxu0
      %2253 = vrot.lane.b32.xlu0 %v2080, 120
      %v2254 = vpop.permute.xlu0 %2253
      %2255 = vrot.lane.b32.xlu0 %v2080, 88
      %v2256 = vpop.permute.xlu0 %2255
      %v2257 = vsel %vm798, %v2254, 0
      %v2259 = vsel %vm798, %v2256, 0
      %2261 = vmatprep.subr.mxu0 0.0
      %2262 = vmatpush1.xpose.msra.mxu0 0.0
      %2263 = vmatprep.subr.mxu0 0.0
      %2264 = vmatpush1.xpose.msra.mxu0 0.0
      %2265 = vmatprep.subr.mxu0 0.0
      %2266 = vmatpush1.xpose.msra.mxu0 0.0
      %2267 = vmatprep.subr.mxu0 0.0
      %2268 = vmatpush1.xpose.msra.mxu0 0.0
      %2269 = vmatprep.subr.mxu0 0.0
      %2270 = vmatpush1.xpose.msra.mxu0 0.0
      %2271 = vmatprep.subr.mxu0 0.0
      %2272 = vmatpush1.xpose.msra.mxu0 0.0
      %2273 = vmatprep.subr.mxu0 0.0
      %2274 = vmatpush1.xpose.msra.mxu0 0.0
      %2275 = vmatprep.subr.mxu0 0.0
      %2276 = vmatpush1.xpose.msra.mxu0 0.0
      %2277 = vmatprep.subr.mxu0 0.0
      %2278 = vmatpush1.xpose.msra.mxu0 0.0
      %2279 = vmatprep.subr.mxu0 0.0
      %2280 = vmatpush1.xpose.msra.mxu0 0.0
      %2281 = vmatprep.subr.mxu0 0.0
      %2282 = vmatpush1.xpose.msra.mxu0 0.0
      %2283 = vmatprep.subr.mxu0 0.0
      %2284 = vmatpush1.xpose.msra.mxu0 0.0
      %2285 = vmatprep.subr.mxu0 0.0
      %2286 = vmatpush1.xpose.msra.mxu0 0.0
      %2287 = vmatprep.subr.mxu0 0.0
      %2288 = vmatpush1.xpose.msra.mxu0 0.0
      %2289 = vmatprep.subr.mxu0 0.0
      %2290 = vmatpush1.xpose.msra.mxu0 0.0
      %2291 = vmatprep.subr.mxu0 0.0
      %2292 = vmatpush1.xpose.msra.mxu0 %v2259
      %2293 = vmatprep.subr.mxu0 0.0
      %2294 = vmatpush2.xpose.msra.mxu0 0.0
      %2295 = vmatprep.subr.mxu0 0.0
      %2296 = vmatpush2.xpose.msra.mxu0 0.0
      %2297 = vmatprep.subr.mxu0 0.0
      %2298 = vmatpush2.xpose.msra.mxu0 0.0
      %2299 = vmatprep.subr.mxu0 0.0
      %2300 = vmatpush2.xpose.msra.mxu0 0.0
      %2301 = vmatprep.subr.mxu0 0.0
      %2302 = vmatpush2.xpose.msra.mxu0 0.0
      %2303 = vmatprep.subr.mxu0 0.0
      %2304 = vmatpush2.xpose.msra.mxu0 0.0
      %2305 = vmatprep.subr.mxu0 0.0
      %2306 = vmatpush2.xpose.msra.mxu0 0.0
      %2307 = vmatprep.subr.mxu0 0.0
      %2308 = vmatpush2.xpose.msra.mxu0 0.0
      %2309 = vmatprep.subr.mxu0 0.0
      %2310 = vmatpush2.xpose.msra.mxu0 0.0
      %2311 = vmatprep.subr.mxu0 0.0
      %2312 = vmatpush2.xpose.msra.mxu0 0.0
      %2313 = vmatprep.subr.mxu0 0.0
      %2314 = vmatpush2.xpose.msra.mxu0 0.0
      %2315 = vmatprep.subr.mxu0 0.0
      %2316 = vmatpush2.xpose.msra.mxu0 0.0
      %2317 = vmatprep.subr.mxu0 0.0
      %2318 = vmatpush2.xpose.msra.mxu0 0.0
      %2319 = vmatprep.subr.mxu0 0.0
      %2320 = vmatpush2.xpose.msra.mxu0 0.0
      %2321 = vmatprep.subr.mxu0 0.0
      %2322 = vmatpush2.xpose.msra.mxu0 0.0
      %2323 = vmatprep.subr.mxu0 0.0
      %2324 = vmatpush2.xpose.msra.mxu0 0.0
      %2325 = vmatprep.mubr.f32.mxu0 0.0
      %2326 = vmatmul.mubr.f32.gmra.mxu0 %v2257
      %v2327 = vpop.f32.mrf.mxu0
      %v2328 = vadd.f32 0.0, %v2327
      %v2329 = vpop.f32.mrf.mxu0
      %2330 = vdwg.mxu0
      %v2331 = vsel %vm873, %v2328, -inf
      %2332 = vmax.xlane.f32.xlu0 %v2331
      %v2333 = vpop.xlane.xlu0 %2332
      %v2334 = vsub.f32 %v2328, %v2333
      %v2335 = vmul.f32 %v2334, 1.442695
      %v2336 = vpow.pop %v2335
      %v2337 = vsel %vm873, %v2336, 0.0
      %2338 = vadd.xlane.f32.xlu0 %v2337
      %v2339 = vpop.xlane.xlu0 %2338
      %v2340 = vrcp.pop %v2339
      %v2341 = vmul.f32 %v2336, %v2340
      %2342 = vrot.lane.b32.xlu0 %v2080, 56
      %v2343 = vpop.permute.xlu0 %2342
      %v2345 = vsel %vm887, %v2341, 0
      %v2347 = vsel %vm891, %v2343, 0
      %2349 = vmatprep.subr.mxu0 0.0
      %2350 = vmatpush1.msra.mxu0 0.0
      %2351 = vmatprep.subr.mxu0 0.0
      %2352 = vmatpush1.msra.mxu0 0.0
      %2353 = vmatprep.subr.mxu0 0.0
      %2354 = vmatpush1.msra.mxu0 0.0
      %2355 = vmatprep.subr.mxu0 0.0
      %2356 = vmatpush1.msra.mxu0 0.0
      %2357 = vmatprep.subr.mxu0 0.0
      %2358 = vmatpush1.msra.mxu0 0.0
      %2359 = vmatprep.subr.mxu0 0.0
      %2360 = vmatpush1.msra.mxu0 0.0
      %2361 = vmatprep.subr.mxu0 0.0
      %2362 = vmatpush1.msra.mxu0 0.0
      %2363 = vmatprep.subr.mxu0 0.0
      %2364 = vmatpush1.msra.mxu0 0.0
      %2365 = vmatprep.subr.mxu0 0.0
      %2366 = vmatpush1.msra.mxu0 0.0
      %2367 = vmatprep.subr.mxu0 0.0
      %2368 = vmatpush1.msra.mxu0 0.0
      %2369 = vmatprep.subr.mxu0 0.0
      %2370 = vmatpush1.msra.mxu0 0.0
      %2371 = vmatprep.subr.mxu0 0.0
      %2372 = vmatpush1.msra.mxu0 0.0
      %2373 = vmatprep.subr.mxu0 0.0
      %2374 = vmatpush1.msra.mxu0 0.0
      %2375 = vmatprep.subr.mxu0 0.0
      %2376 = vmatpush1.msra.mxu0 0.0
      %2377 = vmatprep.subr.mxu0 0.0
      %2378 = vmatpush1.msra.mxu0 0.0
      %2379 = vmatprep.subr.mxu0 0.0
      %2380 = vmatpush1.msra.mxu0 %v2347
      %2381 = vmatprep.subr.mxu0 0.0
      %2382 = vmatpush2.msra.mxu0 0.0
      %2383 = vmatprep.subr.mxu0 0.0
      %2384 = vmatpush2.msra.mxu0 0.0
      %2385 = vmatprep.subr.mxu0 0.0
      %2386 = vmatpush2.msra.mxu0 0.0
      %2387 = vmatprep.subr.mxu0 0.0
      %2388 = vmatpush2.msra.mxu0 0.0
      %2389 = vmatprep.subr.mxu0 0.0
      %2390 = vmatpush2.msra.mxu0 0.0
      %2391 = vmatprep.subr.mxu0 0.0
      %2392 = vmatpush2.msra.mxu0 0.0
      %2393 = vmatprep.subr.mxu0 0.0
      %2394 = vmatpush2.msra.mxu0 0.0
      %2395 = vmatprep.subr.mxu0 0.0
      %2396 = vmatpush2.msra.mxu0 0.0
      %2397 = vmatprep.subr.mxu0 0.0
      %2398 = vmatpush2.msra.mxu0 0.0
      %2399 = vmatprep.subr.mxu0 0.0
      %2400 = vmatpush2.msra.mxu0 0.0
      %2401 = vmatprep.subr.mxu0 0.0
      %2402 = vmatpush2.msra.mxu0 0.0
      %2403 = vmatprep.subr.mxu0 0.0
      %2404 = vmatpush2.msra.mxu0 0.0
      %2405 = vmatprep.subr.mxu0 0.0
      %2406 = vmatpush2.msra.mxu0 0.0
      %2407 = vmatprep.subr.mxu0 0.0
      %2408 = vmatpush2.msra.mxu0 0.0
      %2409 = vmatprep.subr.mxu0 0.0
      %2410 = vmatpush2.msra.mxu0 0.0
      %2411 = vmatprep.subr.mxu0 0.0
      %2412 = vmatpush2.msra.mxu0 0.0
      %2413 = vmatprep.mubr.f32.mxu0 0.0
      %2414 = vmatmul.mubr.f32.gmra.mxu0 %v2345
      %v2415 = vpop.f32.mrf.mxu0
      %v2416 = vadd.f32 0.0, %v2415
      %v2417 = vpop.f32.mrf.mxu0
      %2418 = vdwg.mxu0
      %v2420 = vsel %vm798, %v2416, 0
      %2422 = vmatprep.subr.mxu0 0.0
      %2423 = vmatpush1.msra.mxu0 0.0
      %2424 = vmatprep.subr.mxu0 0.0
      %2425 = vmatpush1.msra.mxu0 0.0
      %2426 = vmatprep.subr.mxu0 0.0
      %2427 = vmatpush1.msra.mxu0 0.0
      %2428 = vmatprep.subr.mxu0 0.0
      %2429 = vmatpush1.msra.mxu0 0.0
      %2430 = vmatprep.subr.mxu0 0.0
      %2431 = vmatpush1.msra.mxu0 0.0
      %2432 = vmatprep.subr.mxu0 0.0
      %2433 = vmatpush1.msra.mxu0 0.0
      %2434 = vmatprep.subr.mxu0 0.0
      %2435 = vmatpush1.msra.mxu0 0.0
      %2436 = vmatprep.subr.mxu0 0.0
      %2437 = vmatpush1.msra.mxu0 0.0
      %2438 = vmatprep.subr.mxu0 0.0
      %2439 = vmatpush1.msra.mxu0 0.0
      %2440 = vmatprep.subr.mxu0 0.0
      %2441 = vmatpush1.msra.mxu0 0.0
      %2442 = vmatprep.subr.mxu0 0.0
      %2443 = vmatpush1.msra.mxu0 0.0
      %2444 = vmatprep.subr.mxu0 0.0
      %2445 = vmatpush1.msra.mxu0 0.0
      %2446 = vmatprep.subr.mxu0 0.0
      %2447 = vmatpush1.msra.mxu0 0.0
      %2448 = vmatprep.subr.mxu0 0.0
      %2449 = vmatpush1.msra.mxu0 0.0
      %2450 = vmatprep.subr.mxu0 0.0
      %2451 = vmatpush1.msra.mxu0 0.0
      %2452 = vmatprep.subr.mxu0 0.0
      %2453 = vmatpush1.msra.mxu0 %v2085
      %2454 = vmatprep.subr.mxu0 0.0
      %2455 = vmatpush2.msra.mxu0 0.0
      %2456 = vmatprep.subr.mxu0 0.0
      %2457 = vmatpush2.msra.mxu0 0.0
      %2458 = vmatprep.subr.mxu0 0.0
      %2459 = vmatpush2.msra.mxu0 0.0
      %2460 = vmatprep.subr.mxu0 0.0
      %2461 = vmatpush2.msra.mxu0 0.0
      %2462 = vmatprep.subr.mxu0 0.0
      %2463 = vmatpush2.msra.mxu0 0.0
      %2464 = vmatprep.subr.mxu0 0.0
      %2465 = vmatpush2.msra.mxu0 0.0
      %2466 = vmatprep.subr.mxu0 0.0
      %2467 = vmatpush2.msra.mxu0 0.0
      %2468 = vmatprep.subr.mxu0 0.0
      %2469 = vmatpush2.msra.mxu0 0.0
      %2470 = vmatprep.subr.mxu0 0.0
      %2471 = vmatpush2.msra.mxu0 0.0
      %2472 = vmatprep.subr.mxu0 0.0
      %2473 = vmatpush2.msra.mxu0 0.0
      %2474 = vmatprep.subr.mxu0 0.0
      %2475 = vmatpush2.msra.mxu0 0.0
      %2476 = vmatprep.subr.mxu0 0.0
      %2477 = vmatpush2.msra.mxu0 0.0
      %2478 = vmatprep.subr.mxu0 0.0
      %2479 = vmatpush2.msra.mxu0 0.0
      %2480 = vmatprep.subr.mxu0 0.0
      %2481 = vmatpush2.msra.mxu0 0.0
      %2482 = vmatprep.subr.mxu0 0.0
      %2483 = vmatpush2.msra.mxu0 0.0
      %2484 = vmatprep.subr.mxu0 0.0
      %2485 = vmatpush2.msra.mxu0 0.0
      %2486 = vmatprep.mubr.f32.mxu0 0.0
      %2487 = vmatmul.mubr.f32.gmra.mxu0 %v2420
      %v2488 = vpop.f32.mrf.mxu0
      %v2489 = vadd.f32 0.0, %v2488
      %v2490 = vpop.f32.mrf.mxu0
      %2491 = vdwg.mxu0
      %v2493 = vsel %vm798, %v2250, 0
      %2495 = vmatprep.subr.mxu0 0.0
      %2496 = vmatpush1.msra.mxu0 0.0
      %2497 = vmatprep.subr.mxu0 0.0
      %2498 = vmatpush1.msra.mxu0 0.0
      %2499 = vmatprep.subr.mxu0 0.0
      %2500 = vmatpush1.msra.mxu0 0.0
      %2501 = vmatprep.subr.mxu0 0.0
      %2502 = vmatpush1.msra.mxu0 0.0
      %2503 = vmatprep.subr.mxu0 0.0
      %2504 = vmatpush1.msra.mxu0 0.0
      %2505 = vmatprep.subr.mxu0 0.0
      %2506 = vmatpush1.msra.mxu0 0.0
      %2507 = vmatprep.subr.mxu0 0.0
      %2508 = vmatpush1.msra.mxu0 0.0
      %2509 = vmatprep.subr.mxu0 0.0
      %2510 = vmatpush1.msra.mxu0 0.0
      %2511 = vmatprep.subr.mxu0 0.0
      %2512 = vmatpush1.msra.mxu0 0.0
      %2513 = vmatprep.subr.mxu0 0.0
      %2514 = vmatpush1.msra.mxu0 0.0
      %2515 = vmatprep.subr.mxu0 0.0
      %2516 = vmatpush1.msra.mxu0 0.0
      %2517 = vmatprep.subr.mxu0 0.0
      %2518 = vmatpush1.msra.mxu0 0.0
      %2519 = vmatprep.subr.mxu0 0.0
      %2520 = vmatpush1.msra.mxu0 0.0
      %2521 = vmatprep.subr.mxu0 0.0
      %2522 = vmatpush1.msra.mxu0 0.0
      %2523 = vmatprep.subr.mxu0 0.0
      %2524 = vmatpush1.msra.mxu0 0.0
      %2525 = vmatprep.subr.mxu0 0.0
      %2526 = vmatpush1.msra.mxu0 %v2084
      %2527 = vmatprep.subr.mxu0 0.0
      %2528 = vmatpush2.msra.mxu0 0.0
      %2529 = vmatprep.subr.mxu0 0.0
      %2530 = vmatpush2.msra.mxu0 0.0
      %2531 = vmatprep.subr.mxu0 0.0
      %2532 = vmatpush2.msra.mxu0 0.0
      %2533 = vmatprep.subr.mxu0 0.0
      %2534 = vmatpush2.msra.mxu0 0.0
      %2535 = vmatprep.subr.mxu0 0.0
      %2536 = vmatpush2.msra.mxu0 0.0
      %2537 = vmatprep.subr.mxu0 0.0
      %2538 = vmatpush2.msra.mxu0 0.0
      %2539 = vmatprep.subr.mxu0 0.0
      %2540 = vmatpush2.msra.mxu0 0.0
      %2541 = vmatprep.subr.mxu0 0.0
      %2542 = vmatpush2.msra.mxu0 0.0
      %2543 = vmatprep.subr.mxu0 0.0
      %2544 = vmatpush2.msra.mxu0 0.0
      %2545 = vmatprep.subr.mxu0 0.0
      %2546 = vmatpush2.msra.mxu0 0.0
      %2547 = vmatprep.subr.mxu0 0.0
      %2548 = vmatpush2.msra.mxu0 0.0
      %2549 = vmatprep.subr.mxu0 0.0
      %2550 = vmatpush2.msra.mxu0 0.0
      %2551 = vmatprep.subr.mxu0 0.0
      %2552 = vmatpush2.msra.mxu0 0.0
      %2553 = vmatprep.subr.mxu0 0.0
      %2554 = vmatpush2.msra.mxu0 0.0
      %2555 = vmatprep.subr.mxu0 0.0
      %2556 = vmatpush2.msra.mxu0 0.0
      %2557 = vmatprep.subr.mxu0 0.0
      %2558 = vmatpush2.msra.mxu0 0.0
      %2559 = vmatprep.mubr.f32.mxu0 0.0
      %2560 = vmatmul.mubr.f32.gmra.mxu0 %v2493
      %v2561 = vpop.f32.mrf.mxu0
      %v2562 = vadd.f32 %v2489, %v2561
      %v2563 = vpop.f32.mrf.mxu0
      %2564 = vdwg.mxu0
      %2565 = vrot.lane.b32.xlu0 %v2080, 112
      %v2566 = vpop.permute.xlu0 %2565
      %2567 = vrot.lane.b32.xlu0 %v2080, 80
      %v2568 = vpop.permute.xlu0 %2567
      %v2569 = vsel %vm798, %v2566, 0
      %v2571 = vsel %vm798, %v2568, 0
      %2573 = vmatprep.subr.mxu0 0.0
      %2574 = vmatpush1.xpose.msra.mxu0 0.0
      %2575 = vmatprep.subr.mxu0 0.0
      %2576 = vmatpush1.xpose.msra.mxu0 0.0
      %2577 = vmatprep.subr.mxu0 0.0
      %2578 = vmatpush1.xpose.msra.mxu0 0.0
      %2579 = vmatprep.subr.mxu0 0.0
      %2580 = vmatpush1.xpose.msra.mxu0 0.0
      %2581 = vmatprep.subr.mxu0 0.0
      %2582 = vmatpush1.xpose.msra.mxu0 0.0
      %2583 = vmatprep.subr.mxu0 0.0
      %2584 = vmatpush1.xpose.msra.mxu0 0.0
      %2585 = vmatprep.subr.mxu0 0.0
      %2586 = vmatpush1.xpose.msra.mxu0 0.0
      %2587 = vmatprep.subr.mxu0 0.0
      %2588 = vmatpush1.xpose.msra.mxu0 0.0
      %2589 = vmatprep.subr.mxu0 0.0
      %2590 = vmatpush1.xpose.msra.mxu0 0.0
      %2591 = vmatprep.subr.mxu0 0.0
      %2592 = vmatpush1.xpose.msra.mxu0 0.0
      %2593 = vmatprep.subr.mxu0 0.0
      %2594 = vmatpush1.xpose.msra.mxu0 0.0
      %2595 = vmatprep.subr.mxu0 0.0
      %2596 = vmatpush1.xpose.msra.mxu0 0.0
      %2597 = vmatprep.subr.mxu0 0.0
      %2598 = vmatpush1.xpose.msra.mxu0 0.0
      %2599 = vmatprep.subr.mxu0 0.0
      %2600 = vmatpush1.xpose.msra.mxu0 0.0
      %2601 = vmatprep.subr.mxu0 0.0
      %2602 = vmatpush1.xpose.msra.mxu0 0.0
      %2603 = vmatprep.subr.mxu0 0.0
      %2604 = vmatpush1.xpose.msra.mxu0 %v2571
      %2605 = vmatprep.subr.mxu0 0.0
      %2606 = vmatpush2.xpose.msra.mxu0 0.0
      %2607 = vmatprep.subr.mxu0 0.0
      %2608 = vmatpush2.xpose.msra.mxu0 0.0
      %2609 = vmatprep.subr.mxu0 0.0
      %2610 = vmatpush2.xpose.msra.mxu0 0.0
      %2611 = vmatprep.subr.mxu0 0.0
      %2612 = vmatpush2.xpose.msra.mxu0 0.0
      %2613 = vmatprep.subr.mxu0 0.0
      %2614 = vmatpush2.xpose.msra.mxu0 0.0
      %2615 = vmatprep.subr.mxu0 0.0
      %2616 = vmatpush2.xpose.msra.mxu0 0.0
      %2617 = vmatprep.subr.mxu0 0.0
      %2618 = vmatpush2.xpose.msra.mxu0 0.0
      %2619 = vmatprep.subr.mxu0 0.0
      %2620 = vmatpush2.xpose.msra.mxu0 0.0
      %2621 = vmatprep.subr.mxu0 0.0
      %2622 = vmatpush2.xpose.msra.mxu0 0.0
      %2623 = vmatprep.subr.mxu0 0.0
      %2624 = vmatpush2.xpose.msra.mxu0 0.0
      %2625 = vmatprep.subr.mxu0 0.0
      %2626 = vmatpush2.xpose.msra.mxu0 0.0
      %2627 = vmatprep.subr.mxu0 0.0
      %2628 = vmatpush2.xpose.msra.mxu0 0.0
      %2629 = vmatprep.subr.mxu0 0.0
      %2630 = vmatpush2.xpose.msra.mxu0 0.0
      %2631 = vmatprep.subr.mxu0 0.0
      %2632 = vmatpush2.xpose.msra.mxu0 0.0
      %2633 = vmatprep.subr.mxu0 0.0
      %2634 = vmatpush2.xpose.msra.mxu0 0.0
      %2635 = vmatprep.subr.mxu0 0.0
      %2636 = vmatpush2.xpose.msra.mxu0 0.0
      %2637 = vmatprep.mubr.f32.mxu0 0.0
      %2638 = vmatmul.mubr.f32.gmra.mxu0 %v2569
      %v2639 = vpop.f32.mrf.mxu0
      %v2640 = vadd.f32 0.0, %v2639
      %v2641 = vpop.f32.mrf.mxu0
      %2642 = vdwg.mxu0
      %v2643 = vsel %vm873, %v2640, -inf
      %2644 = vmax.xlane.f32.xlu0 %v2643
      %v2645 = vpop.xlane.xlu0 %2644
      %v2646 = vsub.f32 %v2640, %v2645
      %v2647 = vmul.f32 %v2646, 1.442695
      %v2648 = vpow.pop %v2647
      %v2649 = vsel %vm873, %v2648, 0.0
      %2650 = vadd.xlane.f32.xlu0 %v2649
      %v2651 = vpop.xlane.xlu0 %2650
      %v2652 = vrcp.pop %v2651
      %v2653 = vmul.f32 %v2648, %v2652
      %2654 = vrot.lane.b32.xlu0 %v2080, 48
      %v2655 = vpop.permute.xlu0 %2654
      %v2657 = vsel %vm887, %v2653, 0
      %v2659 = vsel %vm891, %v2655, 0
      %2661 = vmatprep.subr.mxu0 0.0
      %2662 = vmatpush1.msra.mxu0 0.0
      %2663 = vmatprep.subr.mxu0 0.0
      %2664 = vmatpush1.msra.mxu0 0.0
      %2665 = vmatprep.subr.mxu0 0.0
      %2666 = vmatpush1.msra.mxu0 0.0
      %2667 = vmatprep.subr.mxu0 0.0
      %2668 = vmatpush1.msra.mxu0 0.0
      %2669 = vmatprep.subr.mxu0 0.0
      %2670 = vmatpush1.msra.mxu0 0.0
      %2671 = vmatprep.subr.mxu0 0.0
      %2672 = vmatpush1.msra.mxu0 0.0
      %2673 = vmatprep.subr.mxu0 0.0
      %2674 = vmatpush1.msra.mxu0 0.0
      %2675 = vmatprep.subr.mxu0 0.0
      %2676 = vmatpush1.msra.mxu0 0.0
      %2677 = vmatprep.subr.mxu0 0.0
      %2678 = vmatpush1.msra.mxu0 0.0
      %2679 = vmatprep.subr.mxu0 0.0
      %2680 = vmatpush1.msra.mxu0 0.0
      %2681 = vmatprep.subr.mxu0 0.0
      %2682 = vmatpush1.msra.mxu0 0.0
      %2683 = vmatprep.subr.mxu0 0.0
      %2684 = vmatpush1.msra.mxu0 0.0
      %2685 = vmatprep.subr.mxu0 0.0
      %2686 = vmatpush1.msra.mxu0 0.0
      %2687 = vmatprep.subr.mxu0 0.0
      %2688 = vmatpush1.msra.mxu0 0.0
      %2689 = vmatprep.subr.mxu0 0.0
      %2690 = vmatpush1.msra.mxu0 0.0
      %2691 = vmatprep.subr.mxu0 0.0
      %2692 = vmatpush1.msra.mxu0 %v2659
      %2693 = vmatprep.subr.mxu0 0.0
      %2694 = vmatpush2.msra.mxu0 0.0
      %2695 = vmatprep.subr.mxu0 0.0
      %2696 = vmatpush2.msra.mxu0 0.0
      %2697 = vmatprep.subr.mxu0 0.0
      %2698 = vmatpush2.msra.mxu0 0.0
      %2699 = vmatprep.subr.mxu0 0.0
      %2700 = vmatpush2.msra.mxu0 0.0
      %2701 = vmatprep.subr.mxu0 0.0
      %2702 = vmatpush2.msra.mxu0 0.0
      %2703 = vmatprep.subr.mxu0 0.0
      %2704 = vmatpush2.msra.mxu0 0.0
      %2705 = vmatprep.subr.mxu0 0.0
      %2706 = vmatpush2.msra.mxu0 0.0
      %2707 = vmatprep.subr.mxu0 0.0
      %2708 = vmatpush2.msra.mxu0 0.0
      %2709 = vmatprep.subr.mxu0 0.0
      %2710 = vmatpush2.msra.mxu0 0.0
      %2711 = vmatprep.subr.mxu0 0.0
      %2712 = vmatpush2.msra.mxu0 0.0
      %2713 = vmatprep.subr.mxu0 0.0
      %2714 = vmatpush2.msra.mxu0 0.0
      %2715 = vmatprep.subr.mxu0 0.0
      %2716 = vmatpush2.msra.mxu0 0.0
      %2717 = vmatprep.subr.mxu0 0.0
      %2718 = vmatpush2.msra.mxu0 0.0
      %2719 = vmatprep.subr.mxu0 0.0
      %2720 = vmatpush2.msra.mxu0 0.0
      %2721 = vmatprep.subr.mxu0 0.0
      %2722 = vmatpush2.msra.mxu0 0.0
      %2723 = vmatprep.subr.mxu0 0.0
      %2724 = vmatpush2.msra.mxu0 0.0
      %2725 = vmatprep.mubr.f32.mxu0 0.0
      %2726 = vmatmul.mubr.f32.gmra.mxu0 %v2657
      %v2727 = vpop.f32.mrf.mxu0
      %v2728 = vadd.f32 0.0, %v2727
      %v2729 = vpop.f32.mrf.mxu0
      %2730 = vdwg.mxu0
      %v2732 = vsel %vm798, %v2728, 0
      %2734 = vmatprep.subr.mxu0 0.0
      %2735 = vmatpush1.msra.mxu0 0.0
      %2736 = vmatprep.subr.mxu0 0.0
      %2737 = vmatpush1.msra.mxu0 0.0
      %2738 = vmatprep.subr.mxu0 0.0
      %2739 = vmatpush1.msra.mxu0 0.0
      %2740 = vmatprep.subr.mxu0 0.0
      %2741 = vmatpush1.msra.mxu0 0.0
      %2742 = vmatprep.subr.mxu0 0.0
      %2743 = vmatpush1.msra.mxu0 0.0
      %2744 = vmatprep.subr.mxu0 0.0
      %2745 = vmatpush1.msra.mxu0 0.0
      %2746 = vmatprep.subr.mxu0 0.0
      %2747 = vmatpush1.msra.mxu0 0.0
      %2748 = vmatprep.subr.mxu0 0.0
      %2749 = vmatpush1.msra.mxu0 0.0
      %2750 = vmatprep.subr.mxu0 0.0
      %2751 = vmatpush1.msra.mxu0 0.0
      %2752 = vmatprep.subr.mxu0 0.0
      %2753 = vmatpush1.msra.mxu0 0.0
      %2754 = vmatprep.subr.mxu0 0.0
      %2755 = vmatpush1.msra.mxu0 0.0
      %2756 = vmatprep.subr.mxu0 0.0
      %2757 = vmatpush1.msra.mxu0 0.0
      %2758 = vmatprep.subr.mxu0 0.0
      %2759 = vmatpush1.msra.mxu0 0.0
      %2760 = vmatprep.subr.mxu0 0.0
      %2761 = vmatpush1.msra.mxu0 0.0
      %2762 = vmatprep.subr.mxu0 0.0
      %2763 = vmatpush1.msra.mxu0 0.0
      %2764 = vmatprep.subr.mxu0 0.0
      %2765 = vmatpush1.msra.mxu0 %v2086
      %2766 = vmatprep.subr.mxu0 0.0
      %2767 = vmatpush2.msra.mxu0 0.0
      %2768 = vmatprep.subr.mxu0 0.0
      %2769 = vmatpush2.msra.mxu0 0.0
      %2770 = vmatprep.subr.mxu0 0.0
      %2771 = vmatpush2.msra.mxu0 0.0
      %2772 = vmatprep.subr.mxu0 0.0
      %2773 = vmatpush2.msra.mxu0 0.0
      %2774 = vmatprep.subr.mxu0 0.0
      %2775 = vmatpush2.msra.mxu0 0.0
      %2776 = vmatprep.subr.mxu0 0.0
      %2777 = vmatpush2.msra.mxu0 0.0
      %2778 = vmatprep.subr.mxu0 0.0
      %2779 = vmatpush2.msra.mxu0 0.0
      %2780 = vmatprep.subr.mxu0 0.0
      %2781 = vmatpush2.msra.mxu0 0.0
      %2782 = vmatprep.subr.mxu0 0.0
      %2783 = vmatpush2.msra.mxu0 0.0
      %2784 = vmatprep.subr.mxu0 0.0
      %2785 = vmatpush2.msra.mxu0 0.0
      %2786 = vmatprep.subr.mxu0 0.0
      %2787 = vmatpush2.msra.mxu0 0.0
      %2788 = vmatprep.subr.mxu0 0.0
      %2789 = vmatpush2.msra.mxu0 0.0
      %2790 = vmatprep.subr.mxu0 0.0
      %2791 = vmatpush2.msra.mxu0 0.0
      %2792 = vmatprep.subr.mxu0 0.0
      %2793 = vmatpush2.msra.mxu0 0.0
      %2794 = vmatprep.subr.mxu0 0.0
      %2795 = vmatpush2.msra.mxu0 0.0
      %2796 = vmatprep.subr.mxu0 0.0
      %2797 = vmatpush2.msra.mxu0 0.0
      %2798 = vmatprep.mubr.f32.mxu0 0.0
      %2799 = vmatmul.mubr.f32.gmra.mxu0 %v2732
      %v2800 = vpop.f32.mrf.mxu0
      %v2801 = vadd.f32 0.0, %v2800
      %v2802 = vpop.f32.mrf.mxu0
      %2803 = vdwg.mxu0
      %v2804 = vadd.f32 %v2562, %v2801
      %2805 = vrot.lane.b32.xlu0 %v2080, 104
      %v2806 = vpop.permute.xlu0 %2805
      %2807 = vrot.lane.b32.xlu0 %v2080, 72
      %v2808 = vpop.permute.xlu0 %2807
      %v2809 = vsel %vm798, %v2806, 0
      %v2811 = vsel %vm798, %v2808, 0
      %2813 = vmatprep.subr.mxu0 0.0
      %2814 = vmatpush1.xpose.msra.mxu0 0.0
      %2815 = vmatprep.subr.mxu0 0.0
      %2816 = vmatpush1.xpose.msra.mxu0 0.0
      %2817 = vmatprep.subr.mxu0 0.0
      %2818 = vmatpush1.xpose.msra.mxu0 0.0
      %2819 = vmatprep.subr.mxu0 0.0
      %2820 = vmatpush1.xpose.msra.mxu0 0.0
      %2821 = vmatprep.subr.mxu0 0.0
      %2822 = vmatpush1.xpose.msra.mxu0 0.0
      %2823 = vmatprep.subr.mxu0 0.0
      %2824 = vmatpush1.xpose.msra.mxu0 0.0
      %2825 = vmatprep.subr.mxu0 0.0
      %2826 = vmatpush1.xpose.msra.mxu0 0.0
      %2827 = vmatprep.subr.mxu0 0.0
      %2828 = vmatpush1.xpose.msra.mxu0 0.0
      %2829 = vmatprep.subr.mxu0 0.0
      %2830 = vmatpush1.xpose.msra.mxu0 0.0
      %2831 = vmatprep.subr.mxu0 0.0
      %2832 = vmatpush1.xpose.msra.mxu0 0.0
      %2833 = vmatprep.subr.mxu0 0.0
      %2834 = vmatpush1.xpose.msra.mxu0 0.0
      %2835 = vmatprep.subr.mxu0 0.0
      %2836 = vmatpush1.xpose.msra.mxu0 0.0
      %2837 = vmatprep.subr.mxu0 0.0
      %2838 = vmatpush1.xpose.msra.mxu0 0.0
      %2839 = vmatprep.subr.mxu0 0.0
      %2840 = vmatpush1.xpose.msra.mxu0 0.0
      %2841 = vmatprep.subr.mxu0 0.0
      %2842 = vmatpush1.xpose.msra.mxu0 0.0
      %2843 = vmatprep.subr.mxu0 0.0
      %2844 = vmatpush1.xpose.msra.mxu0 %v2811
      %2845 = vmatprep.subr.mxu0 0.0
      %2846 = vmatpush2.xpose.msra.mxu0 0.0
      %2847 = vmatprep.subr.mxu0 0.0
      %2848 = vmatpush2.xpose.msra.mxu0 0.0
      %2849 = vmatprep.subr.mxu0 0.0
      %2850 = vmatpush2.xpose.msra.mxu0 0.0
      %2851 = vmatprep.subr.mxu0 0.0
      %2852 = vmatpush2.xpose.msra.mxu0 0.0
      %2853 = vmatprep.subr.mxu0 0.0
      %2854 = vmatpush2.xpose.msra.mxu0 0.0
      %2855 = vmatprep.subr.mxu0 0.0
      %2856 = vmatpush2.xpose.msra.mxu0 0.0
      %2857 = vmatprep.subr.mxu0 0.0
      %2858 = vmatpush2.xpose.msra.mxu0 0.0
      %2859 = vmatprep.subr.mxu0 0.0
      %2860 = vmatpush2.xpose.msra.mxu0 0.0
      %2861 = vmatprep.subr.mxu0 0.0
      %2862 = vmatpush2.xpose.msra.mxu0 0.0
      %2863 = vmatprep.subr.mxu0 0.0
      %2864 = vmatpush2.xpose.msra.mxu0 0.0
      %2865 = vmatprep.subr.mxu0 0.0
      %2866 = vmatpush2.xpose.msra.mxu0 0.0
      %2867 = vmatprep.subr.mxu0 0.0
      %2868 = vmatpush2.xpose.msra.mxu0 0.0
      %2869 = vmatprep.subr.mxu0 0.0
      %2870 = vmatpush2.xpose.msra.mxu0 0.0
      %2871 = vmatprep.subr.mxu0 0.0
      %2872 = vmatpush2.xpose.msra.mxu0 0.0
      %2873 = vmatprep.subr.mxu0 0.0
      %2874 = vmatpush2.xpose.msra.mxu0 0.0
      %2875 = vmatprep.subr.mxu0 0.0
      %2876 = vmatpush2.xpose.msra.mxu0 0.0
      %2877 = vmatprep.mubr.f32.mxu0 0.0
      %2878 = vmatmul.mubr.f32.gmra.mxu0 %v2809
      %v2879 = vpop.f32.mrf.mxu0
      %v2880 = vadd.f32 0.0, %v2879
      %v2881 = vpop.f32.mrf.mxu0
      %2882 = vdwg.mxu0
      %v2883 = vsel %vm873, %v2880, -inf
      %2884 = vmax.xlane.f32.xlu0 %v2883
      %v2885 = vpop.xlane.xlu0 %2884
      %v2886 = vsub.f32 %v2880, %v2885
      %v2887 = vmul.f32 %v2886, 1.442695
      %v2888 = vpow.pop %v2887
      %v2889 = vsel %vm873, %v2888, 0.0
      %2890 = vadd.xlane.f32.xlu0 %v2889
      %v2891 = vpop.xlane.xlu0 %2890
      %v2892 = vrcp.pop %v2891
      %v2893 = vmul.f32 %v2888, %v2892
      %2894 = vrot.lane.b32.xlu0 %v2080, 40
      %v2895 = vpop.permute.xlu0 %2894
      %v2897 = vsel %vm887, %v2893, 0
      %v2899 = vsel %vm891, %v2895, 0
      %2901 = vmatprep.subr.mxu0 0.0
      %2902 = vmatpush1.msra.mxu0 0.0
      %2903 = vmatprep.subr.mxu0 0.0
      %2904 = vmatpush1.msra.mxu0 0.0
      %2905 = vmatprep.subr.mxu0 0.0
      %2906 = vmatpush1.msra.mxu0 0.0
      %2907 = vmatprep.subr.mxu0 0.0
      %2908 = vmatpush1.msra.mxu0 0.0
      %2909 = vmatprep.subr.mxu0 0.0
      %2910 = vmatpush1.msra.mxu0 0.0
      %2911 = vmatprep.subr.mxu0 0.0
      %2912 = vmatpush1.msra.mxu0 0.0
      %2913 = vmatprep.subr.mxu0 0.0
      %2914 = vmatpush1.msra.mxu0 0.0
      %2915 = vmatprep.subr.mxu0 0.0
      %2916 = vmatpush1.msra.mxu0 0.0
      %2917 = vmatprep.subr.mxu0 0.0
      %2918 = vmatpush1.msra.mxu0 0.0
      %2919 = vmatprep.subr.mxu0 0.0
      %2920 = vmatpush1.msra.mxu0 0.0
      %2921 = vmatprep.subr.mxu0 0.0
      %2922 = vmatpush1.msra.mxu0 0.0
      %2923 = vmatprep.subr.mxu0 0.0
      %2924 = vmatpush1.msra.mxu0 0.0
      %2925 = vmatprep.subr.mxu0 0.0
      %2926 = vmatpush1.msra.mxu0 0.0
      %2927 = vmatprep.subr.mxu0 0.0
      %2928 = vmatpush1.msra.mxu0 0.0
      %2929 = vmatprep.subr.mxu0 0.0
      %2930 = vmatpush1.msra.mxu0 0.0
      %2931 = vmatprep.subr.mxu0 0.0
      %2932 = vmatpush1.msra.mxu0 %v2899
      %2933 = vmatprep.subr.mxu0 0.0
      %2934 = vmatpush2.msra.mxu0 0.0
      %2935 = vmatprep.subr.mxu0 0.0
      %2936 = vmatpush2.msra.mxu0 0.0
      %2937 = vmatprep.subr.mxu0 0.0
      %2938 = vmatpush2.msra.mxu0 0.0
      %2939 = vmatprep.subr.mxu0 0.0
      %2940 = vmatpush2.msra.mxu0 0.0
      %2941 = vmatprep.subr.mxu0 0.0
      %2942 = vmatpush2.msra.mxu0 0.0
      %2943 = vmatprep.subr.mxu0 0.0
      %2944 = vmatpush2.msra.mxu0 0.0
      %2945 = vmatprep.subr.mxu0 0.0
      %2946 = vmatpush2.msra.mxu0 0.0
      %2947 = vmatprep.subr.mxu0 0.0
      %2948 = vmatpush2.msra.mxu0 0.0
      %2949 = vmatprep.subr.mxu0 0.0
      %2950 = vmatpush2.msra.mxu0 0.0
      %2951 = vmatprep.subr.mxu0 0.0
      %2952 = vmatpush2.msra.mxu0 0.0
      %2953 = vmatprep.subr.mxu0 0.0
      %2954 = vmatpush2.msra.mxu0 0.0
      %2955 = vmatprep.subr.mxu0 0.0
      %2956 = vmatpush2.msra.mxu0 0.0
      %2957 = vmatprep.subr.mxu0 0.0
      %2958 = vmatpush2.msra.mxu0 0.0
      %2959 = vmatprep.subr.mxu0 0.0
      %2960 = vmatpush2.msra.mxu0 0.0
      %2961 = vmatprep.subr.mxu0 0.0
      %2962 = vmatpush2.msra.mxu0 0.0
      %2963 = vmatprep.subr.mxu0 0.0
      %2964 = vmatpush2.msra.mxu0 0.0
      %2965 = vmatprep.mubr.f32.mxu0 0.0
      %2966 = vmatmul.mubr.f32.gmra.mxu0 %v2897
      %v2967 = vpop.f32.mrf.mxu0
      %v2968 = vadd.f32 0.0, %v2967
      %v2969 = vpop.f32.mrf.mxu0
      %2970 = vdwg.mxu0
      %v2972 = vsel %vm798, %v2968, 0
      %2974 = vmatprep.subr.mxu0 0.0
      %2975 = vmatpush1.msra.mxu0 0.0
      %2976 = vmatprep.subr.mxu0 0.0
      %2977 = vmatpush1.msra.mxu0 0.0
      %2978 = vmatprep.subr.mxu0 0.0
      %2979 = vmatpush1.msra.mxu0 0.0
      %2980 = vmatprep.subr.mxu0 0.0
      %2981 = vmatpush1.msra.mxu0 0.0
      %2982 = vmatprep.subr.mxu0 0.0
      %2983 = vmatpush1.msra.mxu0 0.0
      %2984 = vmatprep.subr.mxu0 0.0
      %2985 = vmatpush1.msra.mxu0 0.0
      %2986 = vmatprep.subr.mxu0 0.0
      %2987 = vmatpush1.msra.mxu0 0.0
      %2988 = vmatprep.subr.mxu0 0.0
      %2989 = vmatpush1.msra.mxu0 0.0
      %2990 = vmatprep.subr.mxu0 0.0
      %2991 = vmatpush1.msra.mxu0 0.0
      %2992 = vmatprep.subr.mxu0 0.0
      %2993 = vmatpush1.msra.mxu0 0.0
      %2994 = vmatprep.subr.mxu0 0.0
      %2995 = vmatpush1.msra.mxu0 0.0
      %2996 = vmatprep.subr.mxu0 0.0
      %2997 = vmatpush1.msra.mxu0 0.0
      %2998 = vmatprep.subr.mxu0 0.0
      %2999 = vmatpush1.msra.mxu0 0.0
      %3000 = vmatprep.subr.mxu0 0.0
      %3001 = vmatpush1.msra.mxu0 0.0
      %3002 = vmatprep.subr.mxu0 0.0
      %3003 = vmatpush1.msra.mxu0 0.0
      %3004 = vmatprep.subr.mxu0 0.0
      %3005 = vmatpush1.msra.mxu0 %v2087
      %3006 = vmatprep.subr.mxu0 0.0
      %3007 = vmatpush2.msra.mxu0 0.0
      %3008 = vmatprep.subr.mxu0 0.0
      %3009 = vmatpush2.msra.mxu0 0.0
      %3010 = vmatprep.subr.mxu0 0.0
      %3011 = vmatpush2.msra.mxu0 0.0
      %3012 = vmatprep.subr.mxu0 0.0
      %3013 = vmatpush2.msra.mxu0 0.0
      %3014 = vmatprep.subr.mxu0 0.0
      %3015 = vmatpush2.msra.mxu0 0.0
      %3016 = vmatprep.subr.mxu0 0.0
      %3017 = vmatpush2.msra.mxu0 0.0
      %3018 = vmatprep.subr.mxu0 0.0
      %3019 = vmatpush2.msra.mxu0 0.0
      %3020 = vmatprep.subr.mxu0 0.0
      %3021 = vmatpush2.msra.mxu0 0.0
      %3022 = vmatprep.subr.mxu0 0.0
      %3023 = vmatpush2.msra.mxu0 0.0
      %3024 = vmatprep.subr.mxu0 0.0
      %3025 = vmatpush2.msra.mxu0 0.0
      %3026 = vmatprep.subr.mxu0 0.0
      %3027 = vmatpush2.msra.mxu0 0.0
      %3028 = vmatprep.subr.mxu0 0.0
      %3029 = vmatpush2.msra.mxu0 0.0
      %3030 = vmatprep.subr.mxu0 0.0
      %3031 = vmatpush2.msra.mxu0 0.0
      %3032 = vmatprep.subr.mxu0 0.0
      %3033 = vmatpush2.msra.mxu0 0.0
      %3034 = vmatprep.subr.mxu0 0.0
      %3035 = vmatpush2.msra.mxu0 0.0
      %3036 = vmatprep.subr.mxu0 0.0
      %3037 = vmatpush2.msra.mxu0 0.0
      %3038 = vmatprep.mubr.f32.mxu0 0.0
      %3039 = vmatmul.mubr.f32.gmra.mxu0 %v2972
      %v3040 = vpop.f32.mrf.mxu0
      %v3041 = vadd.f32 0.0, %v3040
      %v3042 = vpop.f32.mrf.mxu0
      %3043 = vdwg.mxu0
      %v3044 = vadd.f32 %v2804, %v3041
      %v3045 = vadd.f32 %v1971, %v3044
      %s3046 = scalar_lea.vmem %s9, 1
      %v3047 = vld [vmem:[%s3046] sm:$0x1]
      %v3049 = vlaneseq
      %v3050 = vshrl.u32 %v3049, 7
      %v3051 = vsub.s32 0, %v3050
      %v3052 = vrot.slane %v3047, %v3051
      %v3054 = vadd.f32 %v3045, %v3052
      %s3055 = scalar_lea.vmem %s10, 1
      %v3056 = vld [vmem:[%s3055] sm:$0x1]
      %s3057 = scalar_lea.vmem %s11, 1
      %v3058 = vld [vmem:[%s3057] sm:$0x1]
      %v3059 = vsel %vm683, %v3054, 0.0
      %3060 = vadd.xlane.f32.xlu0 %v3059
      %v3061 = vpop.xlane.xlu0 %3060
      %v3062 = vmul.f32 %v3061, %v687
      %v3063 = vsub.f32 %v3054, %v3062
      %v3064 = vmul.f32 %v3063, %v3063
      %v3065 = vsel %vm683, %v3064, 0.0
      %3066 = vadd.xlane.f32.xlu0 %v3065
      %v3067 = vpop.xlane.xlu0 %3066
      %v3068 = vmul.f32 %v3067, %v687
      %v3069 = vadd.f32 %v3068, 1e-06
      %v3070 = vrsqrt.pop %v3069
      %v3071 = vmul.f32 %v3063, %v3070
      %v3073 = vlaneseq
      %v3074 = vshrl.u32 %v3073, 7
      %v3075 = vsub.s32 0, %v3074
      %v3076 = vrot.slane %v3056, %v3075
      %v3078 = vmul.f32 %v3071, %v3076
      %v3080 = vlaneseq
      %v3081 = vshrl.u32 %v3080, 7
      %v3082 = vsub.s32 0, %v3081
      %v3083 = vrot.slane %v3058, %v3082
      %v3085 = vadd.f32 %v3078, %v3083
      %s3086 = scalar_lea.vmem %s12, 32
      %v3087 = vld [vmem:[%s3086] sm:$0xff]
      %v3088 = vld [vmem:[%s3086 + $0x8] sm:$0xff]
      %v3089 = vld [vmem:[%s3086 + $0x10] sm:$0xff]
      %v3090 = vld [vmem:[%s3086 + $0x18] sm:$0xff]
      %s3091 = scalar_lea.vmem %s13, 1
      %v3092 = vld [vmem:[%s3091] sm:$0x1]
      %v3094 = vlaneseq
      %v3095 = vshrl.u32 %v3094, 7
      %v3096 = vsub.s32 0, %v3095
      %v3097 = vrot.slane %v3092, %v3096
      %v3100 = vsel %vm717, %v3085, 0
      %3102 = vmatprep.subr.mxu0 0.0
      %3103 = vmatpush1.msra.mxu0 0.0
      %3104 = vmatprep.subr.mxu0 0.0
      %3105 = vmatpush1.msra.mxu0 0.0
      %3106 = vmatprep.subr.mxu0 0.0
      %3107 = vmatpush1.msra.mxu0 0.0
      %3108 = vmatprep.subr.mxu0 0.0
      %3109 = vmatpush1.msra.mxu0 0.0
      %3110 = vmatprep.subr.mxu0 0.0
      %3111 = vmatpush1.msra.mxu0 0.0
      %3112 = vmatprep.subr.mxu0 0.0
      %3113 = vmatpush1.msra.mxu0 0.0
      %3114 = vmatprep.subr.mxu0 0.0
      %3115 = vmatpush1.msra.mxu0 0.0
      %3116 = vmatprep.subr.mxu0 0.0
      %3117 = vmatpush1.msra.mxu0 0.0
      %3118 = vmatprep.subr.mxu0 0.0
      %3119 = vmatpush1.msra.mxu0 0.0
      %3120 = vmatprep.subr.mxu0 0.0
      %3121 = vmatpush1.msra.mxu0 0.0
      %3122 = vmatprep.subr.mxu0 0.0
      %3123 = vmatpush1.msra.mxu0 0.0
      %3124 = vmatprep.subr.mxu0 0.0
      %3125 = vmatpush1.msra.mxu0 0.0
      %3126 = vmatprep.subr.mxu0 0.0
      %3127 = vmatpush1.msra.mxu0 %v3090
      %3128 = vmatprep.subr.mxu0 0.0
      %3129 = vmatpush1.msra.mxu0 %v3089
      %3130 = vmatprep.subr.mxu0 0.0
      %3131 = vmatpush1.msra.mxu0 %v3088
      %3132 = vmatprep.subr.mxu0 0.0
      %3133 = vmatpush1.msra.mxu0 %v3087
      %3134 = vmatprep.subr.mxu0 0.0
      %3135 = vmatpush2.msra.mxu0 0.0
      %3136 = vmatprep.subr.mxu0 0.0
      %3137 = vmatpush2.msra.mxu0 0.0
      %3138 = vmatprep.subr.mxu0 0.0
      %3139 = vmatpush2.msra.mxu0 0.0
      %3140 = vmatprep.subr.mxu0 0.0
      %3141 = vmatpush2.msra.mxu0 0.0
      %3142 = vmatprep.subr.mxu0 0.0
      %3143 = vmatpush2.msra.mxu0 0.0
      %3144 = vmatprep.subr.mxu0 0.0
      %3145 = vmatpush2.msra.mxu0 0.0
      %3146 = vmatprep.subr.mxu0 0.0
      %3147 = vmatpush2.msra.mxu0 0.0
      %3148 = vmatprep.subr.mxu0 0.0
      %3149 = vmatpush2.msra.mxu0 0.0
      %3150 = vmatprep.subr.mxu0 0.0
      %3151 = vmatpush2.msra.mxu0 0.0
      %3152 = vmatprep.subr.mxu0 0.0
      %3153 = vmatpush2.msra.mxu0 0.0
      %3154 = vmatprep.subr.mxu0 0.0
      %3155 = vmatpush2.msra.mxu0 0.0
      %3156 = vmatprep.subr.mxu0 0.0
      %3157 = vmatpush2.msra.mxu0 0.0
      %3158 = vmatprep.subr.mxu0 0.0
      %3159 = vmatpush2.msra.mxu0 0.0
      %3160 = vmatprep.subr.mxu0 0.0
      %3161 = vmatpush2.msra.mxu0 0.0
      %3162 = vmatprep.subr.mxu0 0.0
      %3163 = vmatpush2.msra.mxu0 0.0
      %3164 = vmatprep.subr.mxu0 0.0
      %3165 = vmatpush2.msra.mxu0 0.0
      %3166 = vmatprep.mubr.f32.mxu0 0.0
      %3167 = vmatmul.mubr.f32.gmra.mxu0 %v3100
      %v3168 = vpop.f32.mrf.mxu0
      %v3169 = vadd.f32 %v3097, %v3168
      %v3170 = vpop.f32.mrf.mxu0
      %3171 = vdwg.mxu0
      %v3172 = vmul.f32 %v3169, 0.5
      %v3173 = vmul.f32 %v3169, 0.70710677
      %v3174 = verf.f32.pop %v3173
      %v3175 = vadd.f32 %v3174, 1.0
      %v3176 = vmul.f32 %v3172, %v3175
      %s3177 = scalar_lea.vmem %s14, 64
      %v3178 = vld [vmem:[%s3177] sm:$0xff]
      %v3179 = vld [vmem:[%s3177 + $0x8] sm:$0xff]
      %v3180 = vld [vmem:[%s3177 + $0x10] sm:$0xff]
      %v3181 = vld [vmem:[%s3177 + $0x18] sm:$0xff]
      %v3182 = vld [vmem:[%s3177 + $0x20] sm:$0xff]
      %v3183 = vld [vmem:[%s3177 + $0x28] sm:$0xff]
      %v3184 = vld [vmem:[%s3177 + $0x30] sm:$0xff]
      %v3185 = vld [vmem:[%s3177 + $0x38] sm:$0xff]
      %s3186 = scalar_lea.vmem %s15, 1
      %v3187 = vld [vmem:[%s3186] sm:$0x1]
      %v3189 = vlaneseq
      %v3190 = vshrl.u32 %v3189, 7
      %v3191 = vsub.s32 0, %v3190
      %v3192 = vrot.slane %v3187, %v3191
      %v3195 = vsel %vm602, %v3176, 0
      %3197 = vmatprep.subr.mxu0 0.0
      %3198 = vmatpush1.msra.mxu0 0.0
      %3199 = vmatprep.subr.mxu0 0.0
      %3200 = vmatpush1.msra.mxu0 0.0
      %3201 = vmatprep.subr.mxu0 0.0
      %3202 = vmatpush1.msra.mxu0 0.0
      %3203 = vmatprep.subr.mxu0 0.0
      %3204 = vmatpush1.msra.mxu0 0.0
      %3205 = vmatprep.subr.mxu0 0.0
      %3206 = vmatpush1.msra.mxu0 0.0
      %3207 = vmatprep.subr.mxu0 0.0
      %3208 = vmatpush1.msra.mxu0 0.0
      %3209 = vmatprep.subr.mxu0 0.0
      %3210 = vmatpush1.msra.mxu0 0.0
      %3211 = vmatprep.subr.mxu0 0.0
      %3212 = vmatpush1.msra.mxu0 0.0
      %3213 = vmatprep.subr.mxu0 0.0
      %3214 = vmatpush1.msra.mxu0 %v3185
      %3215 = vmatprep.subr.mxu0 0.0
      %3216 = vmatpush1.msra.mxu0 %v3184
      %3217 = vmatprep.subr.mxu0 0.0
      %3218 = vmatpush1.msra.mxu0 %v3183
      %3219 = vmatprep.subr.mxu0 0.0
      %3220 = vmatpush1.msra.mxu0 %v3182
      %3221 = vmatprep.subr.mxu0 0.0
      %3222 = vmatpush1.msra.mxu0 %v3181
      %3223 = vmatprep.subr.mxu0 0.0
      %3224 = vmatpush1.msra.mxu0 %v3180
      %3225 = vmatprep.subr.mxu0 0.0
      %3226 = vmatpush1.msra.mxu0 %v3179
      %3227 = vmatprep.subr.mxu0 0.0
      %3228 = vmatpush1.msra.mxu0 %v3178
      %3229 = vmatprep.subr.mxu0 0.0
      %3230 = vmatpush2.msra.mxu0 0.0
      %3231 = vmatprep.subr.mxu0 0.0
      %3232 = vmatpush2.msra.mxu0 0.0
      %3233 = vmatprep.subr.mxu0 0.0
      %3234 = vmatpush2.msra.mxu0 0.0
      %3235 = vmatprep.subr.mxu0 0.0
      %3236 = vmatpush2.msra.mxu0 0.0
      %3237 = vmatprep.subr.mxu0 0.0
      %3238 = vmatpush2.msra.mxu0 0.0
      %3239 = vmatprep.subr.mxu0 0.0
      %3240 = vmatpush2.msra.mxu0 0.0
      %3241 = vmatprep.subr.mxu0 0.0
      %3242 = vmatpush2.msra.mxu0 0.0
      %3243 = vmatprep.subr.mxu0 0.0
      %3244 = vmatpush2.msra.mxu0 0.0
      %3245 = vmatprep.subr.mxu0 0.0
      %3246 = vmatpush2.msra.mxu0 0.0
      %3247 = vmatprep.subr.mxu0 0.0
      %3248 = vmatpush2.msra.mxu0 0.0
      %3249 = vmatprep.subr.mxu0 0.0
      %3250 = vmatpush2.msra.mxu0 0.0
      %3251 = vmatprep.subr.mxu0 0.0
      %3252 = vmatpush2.msra.mxu0 0.0
      %3253 = vmatprep.subr.mxu0 0.0
      %3254 = vmatpush2.msra.mxu0 0.0
      %3255 = vmatprep.subr.mxu0 0.0
      %3256 = vmatpush2.msra.mxu0 0.0
      %3257 = vmatprep.subr.mxu0 0.0
      %3258 = vmatpush2.msra.mxu0 0.0
      %3259 = vmatprep.subr.mxu0 0.0
      %3260 = vmatpush2.msra.mxu0 0.0
      %3261 = vmatprep.mubr.f32.mxu0 0.0
      %3262 = vmatmul.mubr.f32.gmra.mxu0 %v3195
      %v3263 = vpop.f32.mrf.mxu0
      %v3264 = vadd.f32 %v3192, %v3263
      %v3265 = vpop.f32.mrf.mxu0
      %3266 = vdwg.mxu0
      %v3267 = vadd.f32 %v3264, %v3054
      %v3268 = vld [vmem:[%s16] sm:$0x1]
      %v3269 = vld [vmem:[%s17] sm:$0x1]
      %v3270 = vsel %vm683, %v3267, 0.0
      %3271 = vadd.xlane.f32.xlu0 %v3270
      %v3272 = vpop.xlane.xlu0 %3271
      %v3273 = vmul.f32 %v3272, %v687
      %v3274 = vsub.f32 %v3267, %v3273
      %v3275 = vmul.f32 %v3274, %v3274
      %v3276 = vsel %vm683, %v3275, 0.0
      %3277 = vadd.xlane.f32.xlu0 %v3276
      %v3278 = vpop.xlane.xlu0 %3277
      %v3279 = vmul.f32 %v3278, %v687
      %v3280 = vadd.f32 %v3279, 1e-06
      %v3281 = vrsqrt.pop %v3280
      %v3282 = vmul.f32 %v3274, %v3281
      %v3284 = vlaneseq
      %v3285 = vshrl.u32 %v3284, 7
      %v3286 = vsub.s32 0, %v3285
      %v3287 = vrot.slane %v3268, %v3286
      %v3289 = vmul.f32 %v3282, %v3287
      %v3291 = vlaneseq
      %v3292 = vshrl.u32 %v3291, 7
      %v3293 = vsub.s32 0, %v3292
      %v3294 = vrot.slane %v3269, %v3293
      %v3296 = vadd.f32 %v3289, %v3294
      %3297 = vst.msk [vmem:[%s573] sm:$0x1f] %vm683, %v3296
      %p3298 = scmp.lt.s32.totalorder %s29, 1
      %s3299 = scalar_select %p3298, %s29, 1
      %s3300 = smul.addr %s3299, 8
      %s3301 = scalar_lea.vmem %s18, %s3300
      // Predicated region
      $region93: #{transformer_forward.1} parent=91 // pred_check
        %p3302 = pneg %p430
      $region94: #{transformer_forward.1} parent=91 // pred_check_branch
        %3304 = sbr.rel (%p3302) target = $region96
      $region95: #{transformer_forward.1} parent=91 // pred_region
        _
      $region96: #{transformer_forward.1} parent=91 // pred_fallthru
        _
    $region92: #{transformer_forward.1} parent=5 // pred_fallthru
      _
    %p3305 = scmp.le.s32.totalorder 2, %s24
    // Predicated region
    $region97: #{transformer_forward.1} parent=5 // pred_check
      %p3306 = pneg %p3305
    $region98: #{transformer_forward.1} parent=5 // pred_check_branch
      %3308 = sbr.rel (%p3306) target = $region100
    $region99: #{transformer_forward.1} parent=5 // pred_region
      %s3309 = ssub.s32 %s24, 2
      // Predicated region
      $region101: #{transformer_forward.1} parent=99 // pred_check
        %p3310 = pneg %p436
      $region102: #{transformer_forward.1} parent=99 // pred_check_branch
        %3312 = sbr.rel (%p3310) target = $region104
      $region103: #{transformer_forward.1} parent=99 // pred_region
        %p3313 = scmp.lt.s32.totalorder %s30, 1
        %s3314 = scalar_select %p3313, %s30, 1
        %s3315 = smul.addr %s3314, 8
        %s3316 = scalar_lea.vmem %s18, %s3315
      $region104: #{transformer_forward.1} parent=99 // pred_fallthru
        _
    $region100: #{transformer_forward.1} parent=5 // pred_fallthru
      _
  $region6: #{transformer_forward.1} parent=0 // loop_footer
    %s28 = sadd.s32 1, %s24
  $region7: #{transformer_forward.1} parent=0 // loop_footer_branch
    %23 = sbr.rel target = $region3
  $region8: #{transformer_forward.1} parent=0 // loop_exit
    _

</llo_original>
